<compile_context>
chip_gen: v7x
topology: tpu7x:2x2x1
jax: 0.10.0
libtpu: 0.0.40
codegen_flags: <defaults>
</compile_context>

<pallas_src>
import jax
import jax.numpy as jnp
from jax.experimental import pallas as pl
from jax.experimental.pallas import tpu as pltpu

C = 32            # channel width (module default is 256; scaled down for the demo)
MAX_TILE = 2048   # spatial (lane) tile cap at C=32.  Re-derive per generation / per C:
                  #   v6e (128 MiB VMEM): 4096-8192 at C=32 (raise vmem_limit accordingly)
                  #   v7x (64 MiB VMEM):  <=2048 at C=32, ~512-1024 at the production C=256
                  #   v5e: scoped default is 16 MiB -> vmem_limit_bytes below already raised


# ---------------------------------------------------------------------------
# Fused Pallas kernel: 4x GFF + 3x ConvWFusion on one [C, TILE] spatial tile
# ---------------------------------------------------------------------------
def _fused_kernel(l1_ref, l2_ref, l3_ref, l4_ref, e_ref,
                  wg_ref, bg_ref, we_ref, be_ref, wobd_ref, bo_ref,
                  ww_ref, bw_ref, cwo_ref, cbo_ref,
                  o_ref):
    f32, bf16 = jnp.float32, jnp.bfloat16
    layers_bf = [r[0] for r in (l1_ref, l2_ref, l3_ref, l4_ref)]      # [C, T] bf16 (MXU feed)
    layers = [l.astype(f32) for l in layers_bf]                       # f32 for elementwise math
    edge = e_ref[0].astype(f32)                                       # [1, T]
    T = layers_bf[0].shape[1]

    # --- all 16 (module x layer) gate convs as ONE MXU matmul: [4C,C] @ [C,4T] ----------
    # gates[i*C:(i+1)*C, j*T:(j+1)*T] == sigmoid(wg_i @ layer_j + bg_i)
    l_cat = jnp.concatenate(layers_bf, axis=1)                        # [C, 4T] bf16
    gate_logits = jnp.dot(wg_ref[...], l_cat,
                          preferred_element_type=f32) + bg_ref[...]   # single bias broadcast
    gates = jax.nn.sigmoid(gate_logits).astype(bf16)                  # bf16 storage (liveness)

    # --- 4x MSFCM_GFF bodies; the 4 output convs share one block-diagonal matmul --------
    fused_rows = []
    for i in range(4):
        gx = gates[i * C:(i + 1) * C, i * T:(i + 1) * T].astype(f32)
        one_m_gx = 1.0 - gx
        acc = (1.0 + gx) * layers[i]
        for j in range(4):
            if j == i:
                continue
            gr = gates[i * C:(i + 1) * C, j * T:(j + 1) * T].astype(f32)
            acc = acc + one_m_gx * gr * layers[j]
        # edge attention: single-channel edge map, per-channel affine (elementwise, f32)
        ea = jax.nn.sigmoid(edge * we_ref[i] + be_ref[i])             # [C, T]
        fused_rows.append(acc * ea + acc)
    fused_all = jnp.concatenate(fused_rows, axis=0).astype(bf16)      # [4C, T] bf16
    gff_all = jnp.dot(wobd_ref[...], fused_all,
                      preferred_element_type=f32) + bo_ref[...]       # block-diag [4C,4C]
    gff_all = jnp.maximum(gff_all, 0.0)                               # [4C, T] f32

    # --- reversed ConvWFusion chain (conwf4, conwf3, conwf2); x = y as in the module ----
    gff_rev = [gff_all[(3 - k) * C:(4 - k) * C, :] for k in range(4)]
    x = gff_rev[0]
    out = None
    for k in range(1, 4):
        y = gff_rev[k]
        xy = jnp.concatenate([x, y], axis=0).astype(bf16)             # [2C, T] bf16
        wmix = jax.nn.sigmoid(
            jnp.dot(ww_ref[k - 1], xy, preferred_element_type=f32)    # [C,2C] @ [2C,T]
            + bw_ref[k - 1])
        f = wmix * x + (1.0 - wmix) * y
        out = jnp.dot(cwo_ref[k - 1], f.astype(bf16),
                      preferred_element_type=f32) + cbo_ref[k - 1]
        out = jnp.maximum(out, 0.0)
        x = y                                                         # faithful to PyTorch
    o_ref[0] = out.astype(o_ref.dtype)


# ---------------------------------------------------------------------------
# Weight packing for the fused kernel (block-diag / concat, bf16 matmul operands)
# ---------------------------------------------------------------------------
def _pack_params(params):
    bf16 = jnp.bfloat16
    wo = params["gff_wo"]                                             # [4, C, C]
    wo_bd = jnp.zeros((4 * C, 4 * C), jnp.float32)
    for i in range(4):
        wo_bd = wo_bd.at[i * C:(i + 1) * C, i * C:(i + 1) * C].set(wo[i])
    return [
        params["gff_wg"].astype(bf16),                                # [4C, C]   bf16
        params["gff_bg"],                                             # [4C, 1]   f32
        params["gff_we"],                                             # [4, C, 1] f32
        params["gff_be"],                                             # [4, C, 1] f32
        wo_bd.astype(bf16),                                           # [4C, 4C]  bf16
        params["gff_bo"].reshape(4 * C, 1),                           # [4C, 1]   f32
        jnp.concatenate([params["cwf_wwx"], params["cwf_wwy"]],
                        axis=-1).astype(bf16),                        # [3, C, 2C] bf16
        params["cwf_bw"],                                             # [3, C, 1] f32
        params["cwf_wo"].astype(bf16),                                # [3, C, C] bf16
        params["cwf_bo"],                                             # [3, C, 1] f32
    ]


# ---------------------------------------------------------------------------
# Wrapper: one pallas_call over a (batch, spatial-tile) grid
# ---------------------------------------------------------------------------
def mld_sfcm_forward(layers_nchw, edge_nchw, params, max_tile=MAX_TILE):
    n, c, h, w = layers_nchw[0].shape
    assert c == C
    hw = h * w
    hwp = pl.cdiv(hw, 128) * 128                 # lane-aligned spatial extent
    # largest 128-multiple tile <= max_tile that divides hwp (avoids odd tail tiles)
    tile = min(max_tile, hwp)
    while hwp % tile != 0:
        tile -= 128

    def prep(x):  # NCHW -> [N, C', HWp] bf16 (HBM transit dtype); no transpose needed
        x = x.reshape(n, x.shape[1], hw)
        if hwp != hw:
            x = jnp.pad(x, ((0, 0), (0, 0), (0, hwp - hw)))
        return x.astype(jnp.bfloat16)

    ls = [prep(l) for l in layers_nchw]
    e = prep(edge_nchw)
    weights = _pack_params(params)

    act_spec = pl.BlockSpec((1, C, tile), lambda ni, ti: (ni, 0, ti))
    edge_spec = pl.BlockSpec((1, 1, tile), lambda ni, ti: (ni, 0, ti))

    def w_spec(arr):  # whole weight resident in VMEM, constant block index
        nd = arr.ndim
        return pl.BlockSpec(arr.shape, lambda ni, ti: (0,) * nd)

    out = pl.pallas_call(
        _fused_kernel,
        out_shape=jax.ShapeDtypeStruct((n, C, hwp), jnp.bfloat16),    # bf16 writeback
        grid=(n, hwp // tile),
        in_specs=[act_spec] * 4 + [edge_spec] + [w_spec(wt) for wt in weights],
        out_specs=act_spec,
        compiler_params=pltpu.CompilerParams(
            dimension_semantics=("parallel", "parallel"),  # batch axis gives >=2 parallel iters
            vmem_limit_bytes=48 * 1024 * 1024),            # above scoped defaults, < v7x physical
    )(*ls, e, *weights)

    if hwp != hw:
        out = out[:, :, :hw]
    return out.reshape(n, C, h, w)


# ---------------------------------------------------------------------------
# Parameters (deterministic, synthetic) — channels-first: y = W[Cout,Cin] @ x
# ---------------------------------------------------------------------------
def init_params(key):
    def dense(k, shape, fan_in):
        return jax.random.normal(k, shape, jnp.float32) / jnp.sqrt(float(fan_in))

    kg = jax.random.fold_in(key, 1)
    kc = jax.random.fold_in(key, 2)
    return {
        # 4 GFF gate weights stacked along output channels for the batched gate matmul
        "gff_wg": dense(jax.random.fold_in(kg, 0), (4 * C, C), C),
        "gff_bg": dense(jax.random.fold_in(kg, 1), (4 * C, 1), C),
        "gff_we": dense(jax.random.fold_in(kg, 2), (4, C, 1), 1),
        "gff_be": dense(jax.random.fold_in(kg, 3), (4, C, 1), 1),
        "gff_wo": dense(jax.random.fold_in(kg, 4), (4, C, C), C),
        "gff_bo": dense(jax.random.fold_in(kg, 5), (4, C, 1), C),
        # 3 ConvWFusion modules actually used by forward (conwf4, conwf3, conwf2)
        "cwf_wwx": dense(jax.random.fold_in(kc, 0), (3, C, C), 2 * C),
        "cwf_wwy": dense(jax.random.fold_in(kc, 1), (3, C, C), 2 * C),
        "cwf_bw":  dense(jax.random.fold_in(kc, 2), (3, C, 1), 2 * C),
        "cwf_wo":  dense(jax.random.fold_in(kc, 3), (3, C, C), C),
        "cwf_bo":  dense(jax.random.fold_in(kc, 4), (3, C, 1), C),
    }


# ---------------------------------------------------------------------------
# Pure-JAX reference — same math, same bf16 matmul operands / bf16 gate storage
# ---------------------------------------------------------------------------
def mld_sfcm_reference(layers_nchw, edge_nchw, params):
    f32, bf16 = jnp.float32, jnp.bfloat16
    n, c, h, w = layers_nchw[0].shape
    hw = h * w
    ls = [l.reshape(n, c, hw) for l in layers_nchw]          # bf16
    e = edge_nchw.reshape(n, 1, hw).astype(f32)

    def conv(wm, x):  # wm f32 [Cout,Cin], x [N,Cin,P] -> f32 [N,Cout,P] (bf16 operands)
        return jnp.einsum("oc,ncp->nop", wm.astype(bf16), x.astype(bf16),
                          preferred_element_type=f32)

    gffs = []
    for i in range(4):
        wg = params["gff_wg"][i * C:(i + 1) * C]
        bg = params["gff_bg"][i * C:(i + 1) * C]

        def gate(xj):
            return jax.nn.sigmoid(conv(wg, xj) + bg).astype(bf16).astype(f32)

        gx = gate(ls[i])
        acc = (1.0 + gx) * ls[i].astype(f32)
        for j in range(4):
            if j == i:
                continue
            acc = acc + (1.0 - gx) * gate(ls[j]) * ls[j].astype(f32)
        ea = jax.nn.sigmoid(e * params["gff_we"][i] + params["gff_be"][i])
        fused = acc * ea + acc
        gffs.append(jnp.maximum(conv(params["gff_wo"][i], fused)
                                + params["gff_bo"][i], 0.0))
    gffs.reverse()
    x = gffs[0]
    out = None
    for k in range(1, 4):
        y = gffs[k]
        wmix = jax.nn.sigmoid(conv(params["cwf_wwx"][k - 1], x)
                              + conv(params["cwf_wwy"][k - 1], y)
                              + params["cwf_bw"][k - 1])
        f = wmix * x + (1.0 - wmix) * y
        out = jnp.maximum(conv(params["cwf_wo"][k - 1], f)
                          + params["cwf_bo"][k - 1], 0.0)
        x = y  # faithful to the PyTorch forward (x = y, not x = out)
    return out.reshape(n, c, h, w)


# ---------------------------------------------------------------------------
if __name__ == "__main__":
    key = jax.random.PRNGKey(0)
    N, H, W = 2, 16, 16   # HW = 256: one 256-wide spatial tile per batch element

    k_layers = jax.random.split(key, 5)
    # inputs created once in bf16 so the kernel and the reference consume identical
    # (bf16-rounded) values; all elementwise math is f32, matmuls are bf16 x bf16 -> f32
    layers = [jax.random.normal(k_layers[i], (N, C, H, W), jnp.float32).astype(jnp.bfloat16)
              for i in range(4)]
    edge = jax.random.normal(k_layers[4], (N, 1, H, W), jnp.float32).astype(jnp.bfloat16)

    params = init_params(jax.random.PRNGKey(42))

    out = mld_sfcm_forward(layers, edge, params)
    out = jax.block_until_ready(out)

    ref = mld_sfcm_reference(layers, edge, params).astype(jnp.bfloat16)
    assert out.shape == (N, C, H, W)
    assert jnp.allclose(out.astype(jnp.float32), ref.astype(jnp.float32),
                        rtol=2e-2, atol=2e-2), "Pallas output mismatch vs JAX reference"

    print("KERNEL_OK")
</pallas_src>

<mosaic_0001>
module attributes {stable_mosaic.version = 11 : i64} {
  func.func @_fused_kernel(%arg0: i32, %arg1: i32, %arg2: memref<1x32x256xbf16, #tpu.memory_space<vmem>>, %arg3: memref<1x32x256xbf16, #tpu.memory_space<vmem>>, %arg4: memref<1x32x256xbf16, #tpu.memory_space<vmem>>, %arg5: memref<1x32x256xbf16, #tpu.memory_space<vmem>>, %arg6: memref<1x1x256xbf16, #tpu.memory_space<vmem>>, %arg7: memref<128x32xbf16, #tpu.memory_space<vmem>>, %arg8: memref<128x1xf32, #tpu.memory_space<vmem>>, %arg9: memref<4x32x1xf32, #tpu.memory_space<vmem>>, %arg10: memref<4x32x1xf32, #tpu.memory_space<vmem>>, %arg11: memref<128x128xbf16, #tpu.memory_space<vmem>>, %arg12: memref<128x1xf32, #tpu.memory_space<vmem>>, %arg13: memref<3x32x64xbf16, #tpu.memory_space<vmem>>, %arg14: memref<3x32x1xf32, #tpu.memory_space<vmem>>, %arg15: memref<3x32x32xbf16, #tpu.memory_space<vmem>>, %arg16: memref<3x32x1xf32, #tpu.memory_space<vmem>>, %arg17: memref<1x32x256xbf16, #tpu.memory_space<vmem>>) attributes {dimension_semantics = [#tpu.dimension_semantics<parallel>, #tpu.dimension_semantics<parallel>], iteration_bounds = array<i64: 2, 1>, scalar_prefetch = 0 : i64, scratch_operands = 0 : i64, tpu.core_type = #tpu.core_type<tc>, window_params = [{transform_indices = @transform_0, window_bounds = array<i64: 1, 32, 256>}, {transform_indices = @transform_1, window_bounds = array<i64: 1, 32, 256>}, {transform_indices = @transform_2, window_bounds = array<i64: 1, 32, 256>}, {transform_indices = @transform_3, window_bounds = array<i64: 1, 32, 256>}, {transform_indices = @transform_4, window_bounds = array<i64: 1, 1, 256>}, {pipeline_mode = #tpu.pipeline_mode<synchronous>, transform_indices = @transform_5, window_bounds = array<i64: 128, 32>}, {pipeline_mode = #tpu.pipeline_mode<synchronous>, transform_indices = @transform_6, window_bounds = array<i64: 128, 1>}, {pipeline_mode = #tpu.pipeline_mode<synchronous>, transform_indices = @transform_7, window_bounds = array<i64: 4, 32, 1>}, {pipeline_mode = #tpu.pipeline_mode<synchronous>, transform_indices = @transform_8, window_bounds = array<i64: 4, 32, 1>}, {pipeline_mode = #tpu.pipeline_mode<synchronous>, transform_indices = @transform_9, window_bounds = array<i64: 128, 128>}, {pipeline_mode = #tpu.pipeline_mode<synchronous>, transform_indices = @transform_10, window_bounds = array<i64: 128, 1>}, {pipeline_mode = #tpu.pipeline_mode<synchronous>, transform_indices = @transform_11, window_bounds = array<i64: 3, 32, 64>}, {pipeline_mode = #tpu.pipeline_mode<synchronous>, transform_indices = @transform_12, window_bounds = array<i64: 3, 32, 1>}, {pipeline_mode = #tpu.pipeline_mode<synchronous>, transform_indices = @transform_13, window_bounds = array<i64: 3, 32, 32>}, {pipeline_mode = #tpu.pipeline_mode<synchronous>, transform_indices = @transform_14, window_bounds = array<i64: 3, 32, 1>}, {transform_indices = @transform_15, window_bounds = array<i64: 1, 32, 256>}]} {
    %c0 = arith.constant 0 : index
    %c0_0 = arith.constant 0 : index
    %c0_1 = arith.constant 0 : index
    %0 = vector.load %arg2[%c0, %c0_0, %c0_1] : memref<1x32x256xbf16, #tpu.memory_space<vmem>>, vector<1x32x256xbf16>
    %1 = vector.shape_cast %0 : vector<1x32x256xbf16> to vector<32x256xbf16>
    %c0_2 = arith.constant 0 : index
    %c0_3 = arith.constant 0 : index
    %c0_4 = arith.constant 0 : index
    %2 = vector.load %arg3[%c0_2, %c0_3, %c0_4] : memref<1x32x256xbf16, #tpu.memory_space<vmem>>, vector<1x32x256xbf16>
    %3 = vector.shape_cast %2 : vector<1x32x256xbf16> to vector<32x256xbf16>
    %c0_5 = arith.constant 0 : index
    %c0_6 = arith.constant 0 : index
    %c0_7 = arith.constant 0 : index
    %4 = vector.load %arg4[%c0_5, %c0_6, %c0_7] : memref<1x32x256xbf16, #tpu.memory_space<vmem>>, vector<1x32x256xbf16>
    %5 = vector.shape_cast %4 : vector<1x32x256xbf16> to vector<32x256xbf16>
    %c0_8 = arith.constant 0 : index
    %c0_9 = arith.constant 0 : index
    %c0_10 = arith.constant 0 : index
    %6 = vector.load %arg5[%c0_8, %c0_9, %c0_10] : memref<1x32x256xbf16, #tpu.memory_space<vmem>>, vector<1x32x256xbf16>
    %7 = vector.shape_cast %6 : vector<1x32x256xbf16> to vector<32x256xbf16>
    %8 = arith.extf %1 : vector<32x256xbf16> to vector<32x256xf32>
    %9 = arith.extf %3 : vector<32x256xbf16> to vector<32x256xf32>
    %10 = arith.extf %5 : vector<32x256xbf16> to vector<32x256xf32>
    %11 = arith.extf %7 : vector<32x256xbf16> to vector<32x256xf32>
    %c0_11 = arith.constant 0 : index
    %c0_12 = arith.constant 0 : index
    %c0_13 = arith.constant 0 : index
    %12 = vector.load %arg6[%c0_11, %c0_12, %c0_13] : memref<1x1x256xbf16, #tpu.memory_space<vmem>>, vector<1x1x256xbf16>
    %13 = vector.shape_cast %12 : vector<1x1x256xbf16> to vector<1x256xbf16>
    %14 = arith.extf %13 : vector<1x256xbf16> to vector<1x256xf32>
    %15 = tpu.concatenate %1, %3, %5, %7 in 1 : vector<32x256xbf16>, vector<32x256xbf16>, vector<32x256xbf16>, vector<32x256xbf16> -> vector<32x1024xbf16>
    %c0_14 = arith.constant 0 : index
    %c0_15 = arith.constant 0 : index
    %16 = vector.load %arg7[%c0_14, %c0_15] : memref<128x32xbf16, #tpu.memory_space<vmem>>, vector<128x32xbf16>
    %cst = arith.constant dense<0.000000e+00> : vector<128x1024xf32>
    %17 = tpu.matmul %16, %15, %cst {dimension_numbers = #tpu.dot_dimension_numbers<[1], [0], [0], [1], [0, 0, 1, 1], [], []>} : vector<128x32xbf16>, vector<32x1024xbf16>, vector<128x1024xf32> -> vector<128x1024xf32>
    %c0_16 = arith.constant 0 : index
    %c0_17 = arith.constant 0 : index
    %18 = vector.load %arg8[%c0_16, %c0_17] : memref<128x1xf32, #tpu.memory_space<vmem>>, vector<128x1xf32>
    %19 = vector.broadcast %18 : vector<128x1xf32> to vector<128x1024xf32>
    %20 = arith.addf %17, %19 : vector<128x1024xf32>
    %21 = arith.negf %20 : vector<128x1024xf32>
    %22 = math.exp %21 : vector<128x1024xf32>
    %cst_18 = arith.constant 1.000000e+00 : f32
    %23 = vector.broadcast %cst_18 : f32 to vector<128x1024xf32>
    %24 = arith.addf %23, %22 : vector<128x1024xf32>
    %25 = arith.divf %23, %24 : vector<128x1024xf32>
    %26 = arith.truncf %25 : vector<128x1024xf32> to vector<128x1024xbf16>
    %27 = vector.extract_strided_slice %26 {offsets = [0, 0], sizes = [32, 256], strides = [1, 1]} : vector<128x1024xbf16> to vector<32x256xbf16>
    %28 = arith.extf %27 : vector<32x256xbf16> to vector<32x256xf32>
    %cst_19 = arith.constant 1.000000e+00 : f32
    %29 = vector.broadcast %cst_19 : f32 to vector<32x256xf32>
    %30 = arith.subf %29, %28 : vector<32x256xf32>
    %cst_20 = arith.constant 1.000000e+00 : f32
    %31 = vector.broadcast %cst_20 : f32 to vector<32x256xf32>
    %32 = arith.addf %31, %28 : vector<32x256xf32>
    %33 = arith.mulf %32, %8 : vector<32x256xf32>
    %34 = vector.extract_strided_slice %26 {offsets = [0, 256], sizes = [32, 256], strides = [1, 1]} : vector<128x1024xbf16> to vector<32x256xbf16>
    %35 = arith.extf %34 : vector<32x256xbf16> to vector<32x256xf32>
    %36 = arith.mulf %30, %35 : vector<32x256xf32>
    %37 = arith.mulf %36, %9 : vector<32x256xf32>
    %38 = arith.addf %33, %37 : vector<32x256xf32>
    %39 = vector.extract_strided_slice %26 {offsets = [0, 512], sizes = [32, 256], strides = [1, 1]} : vector<128x1024xbf16> to vector<32x256xbf16>
    %40 = arith.extf %39 : vector<32x256xbf16> to vector<32x256xf32>
    %41 = arith.mulf %30, %40 : vector<32x256xf32>
    %42 = arith.mulf %41, %10 : vector<32x256xf32>
    %43 = arith.addf %38, %42 : vector<32x256xf32>
    %44 = vector.extract_strided_slice %26 {offsets = [0, 768], sizes = [32, 256], strides = [1, 1]} : vector<128x1024xbf16> to vector<32x256xbf16>
    %45 = arith.extf %44 : vector<32x256xbf16> to vector<32x256xf32>
    %46 = arith.mulf %30, %45 : vector<32x256xf32>
    %47 = arith.mulf %46, %11 : vector<32x256xf32>
    %48 = arith.addf %43, %47 : vector<32x256xf32>
    %c0_21 = arith.constant 0 : index
    %c0_22 = arith.constant 0 : index
    %c0_23 = arith.constant 0 : index
    %49 = vector.load %arg9[%c0_21, %c0_22, %c0_23] : memref<4x32x1xf32, #tpu.memory_space<vmem>>, vector<1x32x1xf32>
    %50 = vector.shape_cast %49 : vector<1x32x1xf32> to vector<32x1xf32>
    %51 = vector.broadcast %14 : vector<1x256xf32> to vector<32x256xf32>
    %52 = vector.broadcast %50 : vector<32x1xf32> to vector<32x256xf32>
    %53 = arith.mulf %51, %52 : vector<32x256xf32>
    %c0_24 = arith.constant 0 : index
    %c0_25 = arith.constant 0 : index
    %c0_26 = arith.constant 0 : index
    %54 = vector.load %arg10[%c0_24, %c0_25, %c0_26] : memref<4x32x1xf32, #tpu.memory_space<vmem>>, vector<1x32x1xf32>
    %55 = vector.shape_cast %54 : vector<1x32x1xf32> to vector<32x1xf32>
    %56 = vector.broadcast %55 : vector<32x1xf32> to vector<32x256xf32>
    %57 = arith.addf %53, %56 : vector<32x256xf32>
    %58 = arith.negf %57 : vector<32x256xf32>
    %59 = math.exp %58 : vector<32x256xf32>
    %cst_27 = arith.constant 1.000000e+00 : f32
    %60 = vector.broadcast %cst_27 : f32 to vector<32x256xf32>
    %61 = arith.addf %60, %59 : vector<32x256xf32>
    %62 = arith.divf %60, %61 : vector<32x256xf32>
    %63 = arith.mulf %48, %62 : vector<32x256xf32>
    %64 = arith.addf %63, %48 : vector<32x256xf32>
    %65 = vector.extract_strided_slice %26 {offsets = [32, 256], sizes = [32, 256], strides = [1, 1]} : vector<128x1024xbf16> to vector<32x256xbf16>
    %66 = arith.extf %65 : vector<32x256xbf16> to vector<32x256xf32>
    %cst_28 = arith.constant 1.000000e+00 : f32
    %67 = vector.broadcast %cst_28 : f32 to vector<32x256xf32>
    %68 = arith.subf %67, %66 : vector<32x256xf32>
    %cst_29 = arith.constant 1.000000e+00 : f32
    %69 = vector.broadcast %cst_29 : f32 to vector<32x256xf32>
    %70 = arith.addf %69, %66 : vector<32x256xf32>
    %71 = arith.mulf %70, %9 : vector<32x256xf32>
    %72 = vector.extract_strided_slice %26 {offsets = [32, 0], sizes = [32, 256], strides = [1, 1]} : vector<128x1024xbf16> to vector<32x256xbf16>
    %73 = arith.extf %72 : vector<32x256xbf16> to vector<32x256xf32>
    %74 = arith.mulf %68, %73 : vector<32x256xf32>
    %75 = arith.mulf %74, %8 : vector<32x256xf32>
    %76 = arith.addf %71, %75 : vector<32x256xf32>
    %77 = vector.extract_strided_slice %26 {offsets = [32, 512], sizes = [32, 256], strides = [1, 1]} : vector<128x1024xbf16> to vector<32x256xbf16>
    %78 = arith.extf %77 : vector<32x256xbf16> to vector<32x256xf32>
    %79 = arith.mulf %68, %78 : vector<32x256xf32>
    %80 = arith.mulf %79, %10 : vector<32x256xf32>
    %81 = arith.addf %76, %80 : vector<32x256xf32>
    %82 = vector.extract_strided_slice %26 {offsets = [32, 768], sizes = [32, 256], strides = [1, 1]} : vector<128x1024xbf16> to vector<32x256xbf16>
    %83 = arith.extf %82 : vector<32x256xbf16> to vector<32x256xf32>
    %84 = arith.mulf %68, %83 : vector<32x256xf32>
    %85 = arith.mulf %84, %11 : vector<32x256xf32>
    %86 = arith.addf %81, %85 : vector<32x256xf32>
    %c1 = arith.constant 1 : index
    %c0_30 = arith.constant 0 : index
    %c0_31 = arith.constant 0 : index
    %87 = vector.load %arg9[%c1, %c0_30, %c0_31] : memref<4x32x1xf32, #tpu.memory_space<vmem>>, vector<1x32x1xf32>
    %88 = vector.shape_cast %87 : vector<1x32x1xf32> to vector<32x1xf32>
    %89 = vector.broadcast %14 : vector<1x256xf32> to vector<32x256xf32>
    %90 = vector.broadcast %88 : vector<32x1xf32> to vector<32x256xf32>
    %91 = arith.mulf %89, %90 : vector<32x256xf32>
    %c1_32 = arith.constant 1 : index
    %c0_33 = arith.constant 0 : index
    %c0_34 = arith.constant 0 : index
    %92 = vector.load %arg10[%c1_32, %c0_33, %c0_34] : memref<4x32x1xf32, #tpu.memory_space<vmem>>, vector<1x32x1xf32>
    %93 = vector.shape_cast %92 : vector<1x32x1xf32> to vector<32x1xf32>
    %94 = vector.broadcast %93 : vector<32x1xf32> to vector<32x256xf32>
    %95 = arith.addf %91, %94 : vector<32x256xf32>
    %96 = arith.negf %95 : vector<32x256xf32>
    %97 = math.exp %96 : vector<32x256xf32>
    %cst_35 = arith.constant 1.000000e+00 : f32
    %98 = vector.broadcast %cst_35 : f32 to vector<32x256xf32>
    %99 = arith.addf %98, %97 : vector<32x256xf32>
    %100 = arith.divf %98, %99 : vector<32x256xf32>
    %101 = arith.mulf %86, %100 : vector<32x256xf32>
    %102 = arith.addf %101, %86 : vector<32x256xf32>
    %103 = vector.extract_strided_slice %26 {offsets = [64, 512], sizes = [32, 256], strides = [1, 1]} : vector<128x1024xbf16> to vector<32x256xbf16>
    %104 = arith.extf %103 : vector<32x256xbf16> to vector<32x256xf32>
    %cst_36 = arith.constant 1.000000e+00 : f32
    %105 = vector.broadcast %cst_36 : f32 to vector<32x256xf32>
    %106 = arith.subf %105, %104 : vector<32x256xf32>
    %cst_37 = arith.constant 1.000000e+00 : f32
    %107 = vector.broadcast %cst_37 : f32 to vector<32x256xf32>
    %108 = arith.addf %107, %104 : vector<32x256xf32>
    %109 = arith.mulf %108, %10 : vector<32x256xf32>
    %110 = vector.extract_strided_slice %26 {offsets = [64, 0], sizes = [32, 256], strides = [1, 1]} : vector<128x1024xbf16> to vector<32x256xbf16>
    %111 = arith.extf %110 : vector<32x256xbf16> to vector<32x256xf32>
    %112 = arith.mulf %106, %111 : vector<32x256xf32>
    %113 = arith.mulf %112, %8 : vector<32x256xf32>
    %114 = arith.addf %109, %113 : vector<32x256xf32>
    %115 = vector.extract_strided_slice %26 {offsets = [64, 256], sizes = [32, 256], strides = [1, 1]} : vector<128x1024xbf16> to vector<32x256xbf16>
    %116 = arith.extf %115 : vector<32x256xbf16> to vector<32x256xf32>
    %117 = arith.mulf %106, %116 : vector<32x256xf32>
    %118 = arith.mulf %117, %9 : vector<32x256xf32>
    %119 = arith.addf %114, %118 : vector<32x256xf32>
    %120 = vector.extract_strided_slice %26 {offsets = [64, 768], sizes = [32, 256], strides = [1, 1]} : vector<128x1024xbf16> to vector<32x256xbf16>
    %121 = arith.extf %120 : vector<32x256xbf16> to vector<32x256xf32>
    %122 = arith.mulf %106, %121 : vector<32x256xf32>
    %123 = arith.mulf %122, %11 : vector<32x256xf32>
    %124 = arith.addf %119, %123 : vector<32x256xf32>
    %c2 = arith.constant 2 : index
    %c0_38 = arith.constant 0 : index
    %c0_39 = arith.constant 0 : index
    %125 = vector.load %arg9[%c2, %c0_38, %c0_39] : memref<4x32x1xf32, #tpu.memory_space<vmem>>, vector<1x32x1xf32>
    %126 = vector.shape_cast %125 : vector<1x32x1xf32> to vector<32x1xf32>
    %127 = vector.broadcast %14 : vector<1x256xf32> to vector<32x256xf32>
    %128 = vector.broadcast %126 : vector<32x1xf32> to vector<32x256xf32>
    %129 = arith.mulf %127, %128 : vector<32x256xf32>
    %c2_40 = arith.constant 2 : index
    %c0_41 = arith.constant 0 : index
    %c0_42 = arith.constant 0 : index
    %130 = vector.load %arg10[%c2_40, %c0_41, %c0_42] : memref<4x32x1xf32, #tpu.memory_space<vmem>>, vector<1x32x1xf32>
    %131 = vector.shape_cast %130 : vector<1x32x1xf32> to vector<32x1xf32>
    %132 = vector.broadcast %131 : vector<32x1xf32> to vector<32x256xf32>
    %133 = arith.addf %129, %132 : vector<32x256xf32>
    %134 = arith.negf %133 : vector<32x256xf32>
    %135 = math.exp %134 : vector<32x256xf32>
    %cst_43 = arith.constant 1.000000e+00 : f32
    %136 = vector.broadcast %cst_43 : f32 to vector<32x256xf32>
    %137 = arith.addf %136, %135 : vector<32x256xf32>
    %138 = arith.divf %136, %137 : vector<32x256xf32>
    %139 = arith.mulf %124, %138 : vector<32x256xf32>
    %140 = arith.addf %139, %124 : vector<32x256xf32>
    %141 = vector.extract_strided_slice %26 {offsets = [96, 768], sizes = [32, 256], strides = [1, 1]} : vector<128x1024xbf16> to vector<32x256xbf16>
    %142 = arith.extf %141 : vector<32x256xbf16> to vector<32x256xf32>
    %cst_44 = arith.constant 1.000000e+00 : f32
    %143 = vector.broadcast %cst_44 : f32 to vector<32x256xf32>
    %144 = arith.subf %143, %142 : vector<32x256xf32>
    %cst_45 = arith.constant 1.000000e+00 : f32
    %145 = vector.broadcast %cst_45 : f32 to vector<32x256xf32>
    %146 = arith.addf %145, %142 : vector<32x256xf32>
    %147 = arith.mulf %146, %11 : vector<32x256xf32>
    %148 = vector.extract_strided_slice %26 {offsets = [96, 0], sizes = [32, 256], strides = [1, 1]} : vector<128x1024xbf16> to vector<32x256xbf16>
    %149 = arith.extf %148 : vector<32x256xbf16> to vector<32x256xf32>
    %150 = arith.mulf %144, %149 : vector<32x256xf32>
    %151 = arith.mulf %150, %8 : vector<32x256xf32>
    %152 = arith.addf %147, %151 : vector<32x256xf32>
    %153 = vector.extract_strided_slice %26 {offsets = [96, 256], sizes = [32, 256], strides = [1, 1]} : vector<128x1024xbf16> to vector<32x256xbf16>
    %154 = arith.extf %153 : vector<32x256xbf16> to vector<32x256xf32>
    %155 = arith.mulf %144, %154 : vector<32x256xf32>
    %156 = arith.mulf %155, %9 : vector<32x256xf32>
    %157 = arith.addf %152, %156 : vector<32x256xf32>
    %158 = vector.extract_strided_slice %26 {offsets = [96, 512], sizes = [32, 256], strides = [1, 1]} : vector<128x1024xbf16> to vector<32x256xbf16>
    %159 = arith.extf %158 : vector<32x256xbf16> to vector<32x256xf32>
    %160 = arith.mulf %144, %159 : vector<32x256xf32>
    %161 = arith.mulf %160, %10 : vector<32x256xf32>
    %162 = arith.addf %157, %161 : vector<32x256xf32>
    %c3 = arith.constant 3 : index
    %c0_46 = arith.constant 0 : index
    %c0_47 = arith.constant 0 : index
    %163 = vector.load %arg9[%c3, %c0_46, %c0_47] : memref<4x32x1xf32, #tpu.memory_space<vmem>>, vector<1x32x1xf32>
    %164 = vector.shape_cast %163 : vector<1x32x1xf32> to vector<32x1xf32>
    %165 = vector.broadcast %14 : vector<1x256xf32> to vector<32x256xf32>
    %166 = vector.broadcast %164 : vector<32x1xf32> to vector<32x256xf32>
    %167 = arith.mulf %165, %166 : vector<32x256xf32>
    %c3_48 = arith.constant 3 : index
    %c0_49 = arith.constant 0 : index
    %c0_50 = arith.constant 0 : index
    %168 = vector.load %arg10[%c3_48, %c0_49, %c0_50] : memref<4x32x1xf32, #tpu.memory_space<vmem>>, vector<1x32x1xf32>
    %169 = vector.shape_cast %168 : vector<1x32x1xf32> to vector<32x1xf32>
    %170 = vector.broadcast %169 : vector<32x1xf32> to vector<32x256xf32>
    %171 = arith.addf %167, %170 : vector<32x256xf32>
    %172 = arith.negf %171 : vector<32x256xf32>
    %173 = math.exp %172 : vector<32x256xf32>
    %cst_51 = arith.constant 1.000000e+00 : f32
    %174 = vector.broadcast %cst_51 : f32 to vector<32x256xf32>
    %175 = arith.addf %174, %173 : vector<32x256xf32>
    %176 = arith.divf %174, %175 : vector<32x256xf32>
    %177 = arith.mulf %162, %176 : vector<32x256xf32>
    %178 = arith.addf %177, %162 : vector<32x256xf32>
    %179 = tpu.concatenate %64, %102, %140, %178 in 0 : vector<32x256xf32>, vector<32x256xf32>, vector<32x256xf32>, vector<32x256xf32> -> vector<128x256xf32>
    %180 = arith.truncf %179 : vector<128x256xf32> to vector<128x256xbf16>
    %c0_52 = arith.constant 0 : index
    %c0_53 = arith.constant 0 : index
    %181 = vector.load %arg11[%c0_52, %c0_53] : memref<128x128xbf16, #tpu.memory_space<vmem>>, vector<128x128xbf16>
    %cst_54 = arith.constant dense<0.000000e+00> : vector<128x256xf32>
    %182 = tpu.matmul %181, %180, %cst_54 {dimension_numbers = #tpu.dot_dimension_numbers<[1], [0], [0], [1], [0, 0, 1, 1], [], []>} : vector<128x128xbf16>, vector<128x256xbf16>, vector<128x256xf32> -> vector<128x256xf32>
    %c0_55 = arith.constant 0 : index
    %c0_56 = arith.constant 0 : index
    %183 = vector.load %arg12[%c0_55, %c0_56] : memref<128x1xf32, #tpu.memory_space<vmem>>, vector<128x1xf32>
    %184 = vector.broadcast %183 : vector<128x1xf32> to vector<128x256xf32>
    %185 = arith.addf %182, %184 : vector<128x256xf32>
    %cst_57 = arith.constant 0.000000e+00 : f32
    %186 = vector.broadcast %cst_57 : f32 to vector<128x256xf32>
    %187 = arith.maximumf %185, %186 : vector<128x256xf32>
    %188 = vector.extract_strided_slice %187 {offsets = [32, 0], sizes = [32, 256], strides = [1, 1]} : vector<128x256xf32> to vector<32x256xf32>
    %189 = vector.extract_strided_slice %187 {offsets = [0, 0], sizes = [32, 256], strides = [1, 1]} : vector<128x256xf32> to vector<32x256xf32>
    %190 = tpu.concatenate %188, %189 in 0 : vector<32x256xf32>, vector<32x256xf32> -> vector<64x256xf32>
    %191 = arith.truncf %190 : vector<64x256xf32> to vector<64x256xbf16>
    %c2_58 = arith.constant 2 : index
    %c0_59 = arith.constant 0 : index
    %c0_60 = arith.constant 0 : index
    %192 = vector.load %arg13[%c2_58, %c0_59, %c0_60] : memref<3x32x64xbf16, #tpu.memory_space<vmem>>, vector<1x32x64xbf16>
    %193 = vector.shape_cast %192 : vector<1x32x64xbf16> to vector<32x64xbf16>
    %cst_61 = arith.constant dense<0.000000e+00> : vector<32x256xf32>
    %194 = tpu.matmul %193, %191, %cst_61 {dimension_numbers = #tpu.dot_dimension_numbers<[1], [0], [0], [1], [0, 0, 1, 1], [], []>} : vector<32x64xbf16>, vector<64x256xbf16>, vector<32x256xf32> -> vector<32x256xf32>
    %c2_62 = arith.constant 2 : index
    %c0_63 = arith.constant 0 : index
    %c0_64 = arith.constant 0 : index
    %195 = vector.load %arg14[%c2_62, %c0_63, %c0_64] : memref<3x32x1xf32, #tpu.memory_space<vmem>>, vector<1x32x1xf32>
    %196 = vector.shape_cast %195 : vector<1x32x1xf32> to vector<32x1xf32>
    %197 = vector.broadcast %196 : vector<32x1xf32> to vector<32x256xf32>
    %198 = arith.addf %194, %197 : vector<32x256xf32>
    %199 = arith.negf %198 : vector<32x256xf32>
    %200 = math.exp %199 : vector<32x256xf32>
    %cst_65 = arith.constant 1.000000e+00 : f32
    %201 = vector.broadcast %cst_65 : f32 to vector<32x256xf32>
    %202 = arith.addf %201, %200 : vector<32x256xf32>
    %203 = arith.divf %201, %202 : vector<32x256xf32>
    %204 = arith.mulf %203, %188 : vector<32x256xf32>
    %cst_66 = arith.constant 1.000000e+00 : f32
    %205 = vector.broadcast %cst_66 : f32 to vector<32x256xf32>
    %206 = arith.subf %205, %203 : vector<32x256xf32>
    %207 = arith.mulf %206, %189 : vector<32x256xf32>
    %208 = arith.addf %204, %207 : vector<32x256xf32>
    %c2_67 = arith.constant 2 : index
    %c0_68 = arith.constant 0 : index
    %c0_69 = arith.constant 0 : index
    %209 = vector.load %arg15[%c2_67, %c0_68, %c0_69] : memref<3x32x32xbf16, #tpu.memory_space<vmem>>, vector<1x32x32xbf16>
    %210 = vector.shape_cast %209 : vector<1x32x32xbf16> to vector<32x32xbf16>
    %211 = arith.truncf %208 : vector<32x256xf32> to vector<32x256xbf16>
    %cst_70 = arith.constant dense<0.000000e+00> : vector<32x256xf32>
    %212 = tpu.matmul %210, %211, %cst_70 {dimension_numbers = #tpu.dot_dimension_numbers<[1], [0], [0], [1], [0, 0, 1, 1], [], []>} : vector<32x32xbf16>, vector<32x256xbf16>, vector<32x256xf32> -> vector<32x256xf32>
    %c2_71 = arith.constant 2 : index
    %c0_72 = arith.constant 0 : index
    %c0_73 = arith.constant 0 : index
    %213 = vector.load %arg16[%c2_71, %c0_72, %c0_73] : memref<3x32x1xf32, #tpu.memory_space<vmem>>, vector<1x32x1xf32>
    %214 = vector.shape_cast %213 : vector<1x32x1xf32> to vector<32x1xf32>
    %215 = vector.broadcast %214 : vector<32x1xf32> to vector<32x256xf32>
    %216 = arith.addf %212, %215 : vector<32x256xf32>
    %cst_74 = arith.constant 0.000000e+00 : f32
    %217 = vector.broadcast %cst_74 : f32 to vector<32x256xf32>
    %218 = arith.maximumf %216, %217 : vector<32x256xf32>
    %219 = arith.truncf %218 : vector<32x256xf32> to vector<32x256xbf16>
    %c0_75 = arith.constant 0 : index
    %c0_76 = arith.constant 0 : index
    %c0_77 = arith.constant 0 : index
    %220 = vector.load %arg17[%c0_75, %c0_76, %c0_77] : memref<1x32x256xbf16, #tpu.memory_space<vmem>>, vector<1x32x256xbf16>
    %221 = vector.shape_cast %220 : vector<1x32x256xbf16> to vector<32x256xbf16>
    %222 = vector.shape_cast %219 : vector<32x256xbf16> to vector<1x32x256xbf16>
    tpu.vector_store %arg17[%c0_75, %c0_76, %c0_77], %222 {strides = array<i32>} : memref<1x32x256xbf16, #tpu.memory_space<vmem>>, vector<1x32x256xbf16>,
    return
  }
  func.func @transform_0(%arg0: i32, %arg1: i32) -> (i32, i32, i32) {
    %c0_i32 = arith.constant 0 : i32
    %c0_i32_0 = arith.constant 0 : i32
    return %arg0, %c0_i32, %arg1 : i32, i32, i32
  }
  func.func @transform_1(%arg0: i32, %arg1: i32) -> (i32, i32, i32) {
    %c0_i32 = arith.constant 0 : i32
    %c0_i32_0 = arith.constant 0 : i32
    return %arg0, %c0_i32, %arg1 : i32, i32, i32
  }
  func.func @transform_2(%arg0: i32, %arg1: i32) -> (i32, i32, i32) {
    %c0_i32 = arith.constant 0 : i32
    %c0_i32_0 = arith.constant 0 : i32
    return %arg0, %c0_i32, %arg1 : i32, i32, i32
  }
  func.func @transform_3(%arg0: i32, %arg1: i32) -> (i32, i32, i32) {
    %c0_i32 = arith.constant 0 : i32
    %c0_i32_0 = arith.constant 0 : i32
    return %arg0, %c0_i32, %arg1 : i32, i32, i32
  }
  func.func @transform_4(%arg0: i32, %arg1: i32) -> (i32, i32, i32) {
    %c0_i32 = arith.constant 0 : i32
    %c0_i32_0 = arith.constant 0 : i32
    return %arg0, %c0_i32, %arg1 : i32, i32, i32
  }
  func.func @transform_5(%arg0: i32, %arg1: i32) -> (i32, i32) {
    %c0_i32 = arith.constant 0 : i32
    %c0_i32_0 = arith.constant 0 : i32
    %c0_i32_1 = arith.constant 0 : i32
    return %c0_i32, %c0_i32_0 : i32, i32
  }
  func.func @transform_6(%arg0: i32, %arg1: i32) -> (i32, i32) {
    %c0_i32 = arith.constant 0 : i32
    %c0_i32_0 = arith.constant 0 : i32
    %c0_i32_1 = arith.constant 0 : i32
    return %c0_i32, %c0_i32_0 : i32, i32
  }
  func.func @transform_7(%arg0: i32, %arg1: i32) -> (i32, i32, i32) {
    %c0_i32 = arith.constant 0 : i32
    %c0_i32_0 = arith.constant 0 : i32
    %c0_i32_1 = arith.constant 0 : i32
    %c0_i32_2 = arith.constant 0 : i32
    return %c0_i32, %c0_i32_0, %c0_i32_1 : i32, i32, i32
  }
  func.func @transform_8(%arg0: i32, %arg1: i32) -> (i32, i32, i32) {
    %c0_i32 = arith.constant 0 : i32
    %c0_i32_0 = arith.constant 0 : i32
    %c0_i32_1 = arith.constant 0 : i32
    %c0_i32_2 = arith.constant 0 : i32
    return %c0_i32, %c0_i32_0, %c0_i32_1 : i32, i32, i32
  }
  func.func @transform_9(%arg0: i32, %arg1: i32) -> (i32, i32) {
    %c0_i32 = arith.constant 0 : i32
    %c0_i32_0 = arith.constant 0 : i32
    %c0_i32_1 = arith.constant 0 : i32
    return %c0_i32, %c0_i32_0 : i32, i32
  }
  func.func @transform_10(%arg0: i32, %arg1: i32) -> (i32, i32) {
    %c0_i32 = arith.constant 0 : i32
    %c0_i32_0 = arith.constant 0 : i32
    %c0_i32_1 = arith.constant 0 : i32
    return %c0_i32, %c0_i32_0 : i32, i32
  }
  func.func @transform_11(%arg0: i32, %arg1: i32) -> (i32, i32, i32) {
    %c0_i32 = arith.constant 0 : i32
    %c0_i32_0 = arith.constant 0 : i32
    %c0_i32_1 = arith.constant 0 : i32
    %c0_i32_2 = arith.constant 0 : i32
    return %c0_i32, %c0_i32_0, %c0_i32_1 : i32, i32, i32
  }
  func.func @transform_12(%arg0: i32, %arg1: i32) -> (i32, i32, i32) {
    %c0_i32 = arith.constant 0 : i32
    %c0_i32_0 = arith.constant 0 : i32
    %c0_i32_1 = arith.constant 0 : i32
    %c0_i32_2 = arith.constant 0 : i32
    return %c0_i32, %c0_i32_0, %c0_i32_1 : i32, i32, i32
  }
  func.func @transform_13(%arg0: i32, %arg1: i32) -> (i32, i32, i32) {
    %c0_i32 = arith.constant 0 : i32
    %c0_i32_0 = arith.constant 0 : i32
    %c0_i32_1 = arith.constant 0 : i32
    %c0_i32_2 = arith.constant 0 : i32
    return %c0_i32, %c0_i32_0, %c0_i32_1 : i32, i32, i32
  }
  func.func @transform_14(%arg0: i32, %arg1: i32) -> (i32, i32, i32) {
    %c0_i32 = arith.constant 0 : i32
    %c0_i32_0 = arith.constant 0 : i32
    %c0_i32_1 = arith.constant 0 : i32
    %c0_i32_2 = arith.constant 0 : i32
    return %c0_i32, %c0_i32_0, %c0_i32_1 : i32, i32, i32
  }
  func.func @transform_15(%arg0: i32, %arg1: i32) -> (i32, i32, i32) {
    %c0_i32 = arith.constant 0 : i32
    %c0_i32_0 = arith.constant 0 : i32
    return %arg0, %c0_i32, %arg1 : i32, i32, i32
  }
}

</mosaic_0001>

<llo_original>
// kernel: tpu_custom_call.1
$region0: #{tpu_custom_call.1}
  #allocation0 [shape = 'u32[]', space=smem, size = 0x4, offset = 0x4, fixed_abs, tag = 'smem constant byte address 0x4 - core index']
  #allocation1 [shape = 'u32[144,128]{1,0:T(1,128)}', space=vmem, size = 0x12000, scoped, tag = 'internal scratch']
  %s0 = inlined_call_operand.vmem [shape: bf16[2,32,256], index: 0, kind: input, shape index: {}]
  %s1 = inlined_call_operand.vmem [shape: bf16[2,32,256], index: 1, kind: input, shape index: {}]
  %s2 = inlined_call_operand.vmem [shape: bf16[2,32,256], index: 2, kind: input, shape index: {}]
  %s3 = inlined_call_operand.vmem [shape: bf16[2,32,256], index: 3, kind: input, shape index: {}]
  %s4 = inlined_call_operand.vmem [shape: bf16[2,1,256], index: 4, kind: input, shape index: {}]
  %s5 = inlined_call_operand.vmem [shape: bf16[128,32], index: 5, kind: input, shape index: {}]
  %s6 = inlined_call_operand.vmem [shape: f32[128,1], index: 6, kind: input, shape index: {}]
  %s7 = inlined_call_operand.vmem [shape: f32[4,32,1], index: 7, kind: input, shape index: {}]
  %s8 = inlined_call_operand.vmem [shape: f32[4,32,1], index: 8, kind: input, shape index: {}]
  %s9 = inlined_call_operand.vmem [shape: bf16[128,128], index: 9, kind: input, shape index: {}]
  %s10 = inlined_call_operand.vmem [shape: f32[128,1], index: 10, kind: input, shape index: {}]
  %s11 = inlined_call_operand.vmem [shape: bf16[3,32,64], index: 11, kind: input, shape index: {}]
  %s12 = inlined_call_operand.vmem [shape: f32[3,32,1], index: 12, kind: input, shape index: {}]
  %s13 = inlined_call_operand.vmem [shape: bf16[3,32,32], index: 13, kind: input, shape index: {}]
  %s14 = inlined_call_operand.vmem [shape: f32[3,32,1], index: 14, kind: input, shape index: {}]
  %s15 = inlined_call_operand.hbm [shape: bf16[2,32,256], index: 15, kind: output, shape index: {}]
  %s16 = sld [smem:[#allocation0]]
  $region93: #{tpu_custom_call.1} parent=0
    _
  %s18 = ssub.s32 1, %s16
  %s19 = scalar_select 0, %s18, %s16
  $region1: #{tpu_custom_call.1} parent=0
    #allocation2 [shape = 'u8[32768]{0}', space=vmem, size = 0x8000, scoped, tag = 'output window, operand 0']
    #allocation3 [shape = 's32[2]{0}', space=sflag, size = 0x8, scoped, tag = 'scoped memory for tpu_custom_call.1']
    %20 = vsyncpa [#allocation3], 0
    %s21 = scalar_lea.sflag [#allocation3], 1
    %22 = vsyncpa %s21, 0
    loop: start=0, step=1, limit=4
    $region2: #{tpu_custom_call.1} parent=1 // loop_pre_header
      _
    $region3: #{tpu_custom_call.1} parent=1 // loop_header
      %s24 = sphi 0, %s28
      %p25 = scmp.ge.s32.totalorder %s24, 4
      %s31 = sphi 0, %s43
      %s32 = sphi 0, %s39
      %s33 = sphi 0, %s31
      %s34 = sphi 0, %s32
      %s35 = sphi 0, %s33
      %s36 = sphi 0, %s34
      %s48 = sphi 0, %s50
      %s51 = sphi 0, %s48
      %s52 = sphi 0, %s51
      %s68 = sphi 0, %s52
      %s76 = sphi 0, %s78
      %s79 = sphi 0, %s76
      %s80 = sphi 0, %s79
      %s96 = sphi 0, %s80
      %s104 = sphi 0, %s106
      %s107 = sphi 0, %s104
      %s108 = sphi 0, %s107
      %s124 = sphi 0, %s108
      %s132 = sphi 0, %s134
      %s135 = sphi 0, %s132
      %s136 = sphi 0, %s135
      %s152 = sphi 0, %s136
      %s160 = sphi 0, %s162
      %s163 = sphi 0, %s160
      %s164 = sphi 0, %s163
      %s180 = sphi 0, %s164
      %s184 = sphi 0, %s184
      %s186 = sphi 0, %s184
      %s187 = sphi 0, %s186
      %s201 = sphi 0, %s187
      %s205 = sphi 0, %s205
      %s207 = sphi 0, %s205
      %s208 = sphi 0, %s207
      %s222 = sphi 0, %s208
      %s226 = sphi 0, %s226
      %s228 = sphi 0, %s226
      %s229 = sphi 0, %s228
      %s243 = sphi 0, %s229
      %s247 = sphi 0, %s247
      %s249 = sphi 0, %s247
      %s250 = sphi 0, %s249
      %s264 = sphi 0, %s250
      %s268 = sphi 0, %s268
      %s270 = sphi 0, %s268
      %s271 = sphi 0, %s270
      %s285 = sphi 0, %s271
      %s289 = sphi 0, %s289
      %s291 = sphi 0, %s289
      %s292 = sphi 0, %s291
      %s306 = sphi 0, %s292
      %s310 = sphi 0, %s310
      %s312 = sphi 0, %s310
      %s313 = sphi 0, %s312
      %s327 = sphi 0, %s313
      %s331 = sphi 0, %s331
      %s333 = sphi 0, %s331
      %s334 = sphi 0, %s333
      %s348 = sphi 0, %s334
      %s352 = sphi 0, %s352
      %s354 = sphi 0, %s352
      %s355 = sphi 0, %s354
      %s369 = sphi 0, %s355
      %s373 = sphi 0, %s373
      %s375 = sphi 0, %s373
      %s376 = sphi 0, %s375
      %s390 = sphi 0, %s376
      %s398 = sphi 0, %s400
      %s401 = sphi 0, %s398
      %s402 = sphi 0, %s401
      %s418 = sphi 0, %s402
    $region4: #{tpu_custom_call.1} parent=1 // loop_header_branch
      %27 = sbr.rel (%p25) target = $region8
    $region5: #{tpu_custom_call.1} parent=1 // loop_body
      %s29 = ssub.s32 %s24, 1
      %s30 = ssub.s32 %s24, 2
      %s37 = sadd.s32 1, %s32
      %p38 = scmp.ge.s32.totalorder %s37, 1
      %s39 = scalar_select %p38, 0, %s37
      %s40 = sadd.s32 1, %s31
      %s41 = scalar_select %p38, %s40, %s31
      %p42 = scmp.ge.s32.totalorder %s41, 2
      %s43 = scalar_select %p42, 0, %s41
      %s44 = ssub.s32 %s31, %s43
      %s45 = ssub.s32 %s32, %s39
      %s46 = sor.u32 %s44, %s45
      %p47 = scmp.eq.s32.totalorder %s46, 0
      %s49 = sadd.s32 %s48, 1
      %s50 = scalar_select %p47, %s48, %s49
      %p53 = pneg %p47
      %p54 = scmp.eq.s32.totalorder %s24, 1
      %p55 = por %p53, %p54
      %p56 = scmp.ne.s32.totalorder %s48, %s51
      %p57 = scmp.eq.s32.totalorder %s24, 0
      %p58 = por %p56, %p57
      %p59 = scmp.ne.s32.totalorder %s48, %s51
      %p60 = scmp.eq.s32.totalorder %s29, 1
      %p61 = por %p59, %p60
      %p62 = scmp.ne.s32.totalorder %s51, %s52
      %p63 = scmp.eq.s32.totalorder %s29, 0
      %p64 = por %p62, %p63
      %p65 = scmp.ne.s32.totalorder %s51, %s52
      %p66 = scmp.eq.s32.totalorder %s30, 1
      %p67 = por %p65, %p66
      %p69 = scmp.ne.s32.totalorder %s52, %s68
      %p70 = scmp.eq.s32.totalorder %s30, 0
      %p71 = por %p69, %p70
      %s72 = ssub.s32 %s31, %s43
      %s73 = ssub.s32 %s32, %s39
      %s74 = sor.u32 %s72, %s73
      %p75 = scmp.eq.s32.totalorder %s74, 0
      %s77 = sadd.s32 %s76, 1
      %s78 = scalar_select %p75, %s76, %s77
      %p81 = pneg %p75
      %p82 = scmp.eq.s32.totalorder %s24, 1
      %p83 = por %p81, %p82
      %p84 = scmp.ne.s32.totalorder %s76, %s79
      %p85 = scmp.eq.s32.totalorder %s24, 0
      %p86 = por %p84, %p85
      %p87 = scmp.ne.s32.totalorder %s76, %s79
      %p88 = scmp.eq.s32.totalorder %s29, 1
      %p89 = por %p87, %p88
      %p90 = scmp.ne.s32.totalorder %s79, %s80
      %p91 = scmp.eq.s32.totalorder %s29, 0
      %p92 = por %p90, %p91
      %p93 = scmp.ne.s32.totalorder %s79, %s80
      %p94 = scmp.eq.s32.totalorder %s30, 1
      %p95 = por %p93, %p94
      %p97 = scmp.ne.s32.totalorder %s80, %s96
      %p98 = scmp.eq.s32.totalorder %s30, 0
      %p99 = por %p97, %p98
      %s100 = ssub.s32 %s31, %s43
      %s101 = ssub.s32 %s32, %s39
      %s102 = sor.u32 %s100, %s101
      %p103 = scmp.eq.s32.totalorder %s102, 0
      %s105 = sadd.s32 %s104, 1
      %s106 = scalar_select %p103, %s104, %s105
      %p109 = pneg %p103
      %p110 = scmp.eq.s32.totalorder %s24, 1
      %p111 = por %p109, %p110
      %p112 = scmp.ne.s32.totalorder %s104, %s107
      %p113 = scmp.eq.s32.totalorder %s24, 0
      %p114 = por %p112, %p113
      %p115 = scmp.ne.s32.totalorder %s104, %s107
      %p116 = scmp.eq.s32.totalorder %s29, 1
      %p117 = por %p115, %p116
      %p118 = scmp.ne.s32.totalorder %s107, %s108
      %p119 = scmp.eq.s32.totalorder %s29, 0
      %p120 = por %p118, %p119
      %p121 = scmp.ne.s32.totalorder %s107, %s108
      %p122 = scmp.eq.s32.totalorder %s30, 1
      %p123 = por %p121, %p122
      %p125 = scmp.ne.s32.totalorder %s108, %s124
      %p126 = scmp.eq.s32.totalorder %s30, 0
      %p127 = por %p125, %p126
      %s128 = ssub.s32 %s31, %s43
      %s129 = ssub.s32 %s32, %s39
      %s130 = sor.u32 %s128, %s129
      %p131 = scmp.eq.s32.totalorder %s130, 0
      %s133 = sadd.s32 %s132, 1
      %s134 = scalar_select %p131, %s132, %s133
      %p137 = pneg %p131
      %p138 = scmp.eq.s32.totalorder %s24, 1
      %p139 = por %p137, %p138
      %p140 = scmp.ne.s32.totalorder %s132, %s135
      %p141 = scmp.eq.s32.totalorder %s24, 0
      %p142 = por %p140, %p141
      %p143 = scmp.ne.s32.totalorder %s132, %s135
      %p144 = scmp.eq.s32.totalorder %s29, 1
      %p145 = por %p143, %p144
      %p146 = scmp.ne.s32.totalorder %s135, %s136
      %p147 = scmp.eq.s32.totalorder %s29, 0
      %p148 = por %p146, %p147
      %p149 = scmp.ne.s32.totalorder %s135, %s136
      %p150 = scmp.eq.s32.totalorder %s30, 1
      %p151 = por %p149, %p150
      %p153 = scmp.ne.s32.totalorder %s136, %s152
      %p154 = scmp.eq.s32.totalorder %s30, 0
      %p155 = por %p153, %p154
      %s156 = ssub.s32 %s31, %s43
      %s157 = ssub.s32 %s32, %s39
      %s158 = sor.u32 %s156, %s157
      %p159 = scmp.eq.s32.totalorder %s158, 0
      %s161 = sadd.s32 %s160, 1
      %s162 = scalar_select %p159, %s160, %s161
      %p165 = pneg %p159
      %p166 = scmp.eq.s32.totalorder %s24, 1
      %p167 = por %p165, %p166
      %p168 = scmp.ne.s32.totalorder %s160, %s163
      %p169 = scmp.eq.s32.totalorder %s24, 0
      %p170 = por %p168, %p169
      %p171 = scmp.ne.s32.totalorder %s160, %s163
      %p172 = scmp.eq.s32.totalorder %s29, 1
      %p173 = por %p171, %p172
      %p174 = scmp.ne.s32.totalorder %s163, %s164
      %p175 = scmp.eq.s32.totalorder %s29, 0
      %p176 = por %p174, %p175
      %p177 = scmp.ne.s32.totalorder %s163, %s164
      %p178 = scmp.eq.s32.totalorder %s30, 1
      %p179 = por %p177, %p178
      %p181 = scmp.ne.s32.totalorder %s164, %s180
      %p182 = scmp.eq.s32.totalorder %s30, 0
      %p183 = por %p181, %p182
      %s185 = sadd.s32 %s184, 1
      %p188 = scmp.eq.s32.totalorder %s24, 1
      %p189 = scmp.ne.s32.totalorder %s184, %s186
      %p190 = scmp.eq.s32.totalorder %s24, 0
      %p191 = por %p189, %p190
      %p192 = scmp.ne.s32.totalorder %s184, %s186
      %p193 = scmp.eq.s32.totalorder %s29, 1
      %p194 = por %p192, %p193
      %p195 = scmp.ne.s32.totalorder %s186, %s187
      %p196 = scmp.eq.s32.totalorder %s29, 0
      %p197 = por %p195, %p196
      %p198 = scmp.ne.s32.totalorder %s186, %s187
      %p199 = scmp.eq.s32.totalorder %s30, 1
      %p200 = por %p198, %p199
      %p202 = scmp.ne.s32.totalorder %s187, %s201
      %p203 = scmp.eq.s32.totalorder %s30, 0
      %p204 = por %p202, %p203
      %s206 = sadd.s32 %s205, 1
      %p209 = scmp.eq.s32.totalorder %s24, 1
      %p210 = scmp.ne.s32.totalorder %s205, %s207
      %p211 = scmp.eq.s32.totalorder %s24, 0
      %p212 = por %p210, %p211
      %p213 = scmp.ne.s32.totalorder %s205, %s207
      %p214 = scmp.eq.s32.totalorder %s29, 1
      %p215 = por %p213, %p214
      %p216 = scmp.ne.s32.totalorder %s207, %s208
      %p217 = scmp.eq.s32.totalorder %s29, 0
      %p218 = por %p216, %p217
      %p219 = scmp.ne.s32.totalorder %s207, %s208
      %p220 = scmp.eq.s32.totalorder %s30, 1
      %p221 = por %p219, %p220
      %p223 = scmp.ne.s32.totalorder %s208, %s222
      %p224 = scmp.eq.s32.totalorder %s30, 0
      %p225 = por %p223, %p224
      %s227 = sadd.s32 %s226, 1
      %p230 = scmp.eq.s32.totalorder %s24, 1
      %p231 = scmp.ne.s32.totalorder %s226, %s228
      %p232 = scmp.eq.s32.totalorder %s24, 0
      %p233 = por %p231, %p232
      %p234 = scmp.ne.s32.totalorder %s226, %s228
      %p235 = scmp.eq.s32.totalorder %s29, 1
      %p236 = por %p234, %p235
      %p237 = scmp.ne.s32.totalorder %s228, %s229
      %p238 = scmp.eq.s32.totalorder %s29, 0
      %p239 = por %p237, %p238
      %p240 = scmp.ne.s32.totalorder %s228, %s229
      %p241 = scmp.eq.s32.totalorder %s30, 1
      %p242 = por %p240, %p241
      %p244 = scmp.ne.s32.totalorder %s229, %s243
      %p245 = scmp.eq.s32.totalorder %s30, 0
      %p246 = por %p244, %p245
      %s248 = sadd.s32 %s247, 1
      %p251 = scmp.eq.s32.totalorder %s24, 1
      %p252 = scmp.ne.s32.totalorder %s247, %s249
      %p253 = scmp.eq.s32.totalorder %s24, 0
      %p254 = por %p252, %p253
      %p255 = scmp.ne.s32.totalorder %s247, %s249
      %p256 = scmp.eq.s32.totalorder %s29, 1
      %p257 = por %p255, %p256
      %p258 = scmp.ne.s32.totalorder %s249, %s250
      %p259 = scmp.eq.s32.totalorder %s29, 0
      %p260 = por %p258, %p259
      %p261 = scmp.ne.s32.totalorder %s249, %s250
      %p262 = scmp.eq.s32.totalorder %s30, 1
      %p263 = por %p261, %p262
      %p265 = scmp.ne.s32.totalorder %s250, %s264
      %p266 = scmp.eq.s32.totalorder %s30, 0
      %p267 = por %p265, %p266
      %s269 = sadd.s32 %s268, 1
      %p272 = scmp.eq.s32.totalorder %s24, 1
      %p273 = scmp.ne.s32.totalorder %s268, %s270
      %p274 = scmp.eq.s32.totalorder %s24, 0
      %p275 = por %p273, %p274
      %p276 = scmp.ne.s32.totalorder %s268, %s270
      %p277 = scmp.eq.s32.totalorder %s29, 1
      %p278 = por %p276, %p277
      %p279 = scmp.ne.s32.totalorder %s270, %s271
      %p280 = scmp.eq.s32.totalorder %s29, 0
      %p281 = por %p279, %p280
      %p282 = scmp.ne.s32.totalorder %s270, %s271
      %p283 = scmp.eq.s32.totalorder %s30, 1
      %p284 = por %p282, %p283
      %p286 = scmp.ne.s32.totalorder %s271, %s285
      %p287 = scmp.eq.s32.totalorder %s30, 0
      %p288 = por %p286, %p287
      %s290 = sadd.s32 %s289, 1
      %p293 = scmp.eq.s32.totalorder %s24, 1
      %p294 = scmp.ne.s32.totalorder %s289, %s291
      %p295 = scmp.eq.s32.totalorder %s24, 0
      %p296 = por %p294, %p295
      %p297 = scmp.ne.s32.totalorder %s289, %s291
      %p298 = scmp.eq.s32.totalorder %s29, 1
      %p299 = por %p297, %p298
      %p300 = scmp.ne.s32.totalorder %s291, %s292
      %p301 = scmp.eq.s32.totalorder %s29, 0
      %p302 = por %p300, %p301
      %p303 = scmp.ne.s32.totalorder %s291, %s292
      %p304 = scmp.eq.s32.totalorder %s30, 1
      %p305 = por %p303, %p304
      %p307 = scmp.ne.s32.totalorder %s292, %s306
      %p308 = scmp.eq.s32.totalorder %s30, 0
      %p309 = por %p307, %p308
      %s311 = sadd.s32 %s310, 1
      %p314 = scmp.eq.s32.totalorder %s24, 1
      %p315 = scmp.ne.s32.totalorder %s310, %s312
      %p316 = scmp.eq.s32.totalorder %s24, 0
      %p317 = por %p315, %p316
      %p318 = scmp.ne.s32.totalorder %s310, %s312
      %p319 = scmp.eq.s32.totalorder %s29, 1
      %p320 = por %p318, %p319
      %p321 = scmp.ne.s32.totalorder %s312, %s313
      %p322 = scmp.eq.s32.totalorder %s29, 0
      %p323 = por %p321, %p322
      %p324 = scmp.ne.s32.totalorder %s312, %s313
      %p325 = scmp.eq.s32.totalorder %s30, 1
      %p326 = por %p324, %p325
      %p328 = scmp.ne.s32.totalorder %s313, %s327
      %p329 = scmp.eq.s32.totalorder %s30, 0
      %p330 = por %p328, %p329
      %s332 = sadd.s32 %s331, 1
      %p335 = scmp.eq.s32.totalorder %s24, 1
      %p336 = scmp.ne.s32.totalorder %s331, %s333
      %p337 = scmp.eq.s32.totalorder %s24, 0
      %p338 = por %p336, %p337
      %p339 = scmp.ne.s32.totalorder %s331, %s333
      %p340 = scmp.eq.s32.totalorder %s29, 1
      %p341 = por %p339, %p340
      %p342 = scmp.ne.s32.totalorder %s333, %s334
      %p343 = scmp.eq.s32.totalorder %s29, 0
      %p344 = por %p342, %p343
      %p345 = scmp.ne.s32.totalorder %s333, %s334
      %p346 = scmp.eq.s32.totalorder %s30, 1
      %p347 = por %p345, %p346
      %p349 = scmp.ne.s32.totalorder %s334, %s348
      %p350 = scmp.eq.s32.totalorder %s30, 0
      %p351 = por %p349, %p350
      %s353 = sadd.s32 %s352, 1
      %p356 = scmp.eq.s32.totalorder %s24, 1
      %p357 = scmp.ne.s32.totalorder %s352, %s354
      %p358 = scmp.eq.s32.totalorder %s24, 0
      %p359 = por %p357, %p358
      %p360 = scmp.ne.s32.totalorder %s352, %s354
      %p361 = scmp.eq.s32.totalorder %s29, 1
      %p362 = por %p360, %p361
      %p363 = scmp.ne.s32.totalorder %s354, %s355
      %p364 = scmp.eq.s32.totalorder %s29, 0
      %p365 = por %p363, %p364
      %p366 = scmp.ne.s32.totalorder %s354, %s355
      %p367 = scmp.eq.s32.totalorder %s30, 1
      %p368 = por %p366, %p367
      %p370 = scmp.ne.s32.totalorder %s355, %s369
      %p371 = scmp.eq.s32.totalorder %s30, 0
      %p372 = por %p370, %p371
      %s374 = sadd.s32 %s373, 1
      %p377 = scmp.eq.s32.totalorder %s24, 1
      %p378 = scmp.ne.s32.totalorder %s373, %s375
      %p379 = scmp.eq.s32.totalorder %s24, 0
      %p380 = por %p378, %p379
      %p381 = scmp.ne.s32.totalorder %s373, %s375
      %p382 = scmp.eq.s32.totalorder %s29, 1
      %p383 = por %p381, %p382
      %p384 = scmp.ne.s32.totalorder %s375, %s376
      %p385 = scmp.eq.s32.totalorder %s29, 0
      %p386 = por %p384, %p385
      %p387 = scmp.ne.s32.totalorder %s375, %s376
      %p388 = scmp.eq.s32.totalorder %s30, 1
      %p389 = por %p387, %p388
      %p391 = scmp.ne.s32.totalorder %s376, %s390
      %p392 = scmp.eq.s32.totalorder %s30, 0
      %p393 = por %p391, %p392
      %s394 = ssub.s32 %s31, %s43
      %s395 = ssub.s32 %s32, %s39
      %s396 = sor.u32 %s394, %s395
      %p397 = scmp.eq.s32.totalorder %s396, 0
      %s399 = sadd.s32 %s398, 1
      %s400 = scalar_select %p397, %s398, %s399
      %p403 = pneg %p397
      %p404 = scmp.eq.s32.totalorder %s24, 1
      %p405 = por %p403, %p404
      %p406 = scmp.ne.s32.totalorder %s398, %s401
      %p407 = scmp.eq.s32.totalorder %s24, 0
      %p408 = por %p406, %p407
      %p409 = scmp.ne.s32.totalorder %s398, %s401
      %p410 = scmp.eq.s32.totalorder %s29, 1
      %p411 = por %p409, %p410
      %p412 = scmp.ne.s32.totalorder %s401, %s402
      %p413 = scmp.eq.s32.totalorder %s29, 0
      %p414 = por %p412, %p413
      %p415 = scmp.ne.s32.totalorder %s401, %s402
      %p416 = scmp.eq.s32.totalorder %s30, 1
      %p417 = por %p415, %p416
      %p419 = scmp.ne.s32.totalorder %s402, %s418
      %p420 = scmp.eq.s32.totalorder %s30, 0
      %p421 = por %p419, %p420
      %p422 = scmp.le.s32.totalorder 1, %s24
      %p423 = scmp.lt.s32.totalorder %s24, 3
      %p424 = pnand %p422, %p423
      %p425 = pneg %p424
      // Predicated region
      $region9: #{tpu_custom_call.1} parent=5 // pred_check
        _
      $region10: #{tpu_custom_call.1} parent=5 // pred_check_branch
        %427 = sbr.rel (%p424) target = $region12
      $region11: #{tpu_custom_call.1} parent=5 // pred_region
        %s428 = ssub.s32 %s24, 1
        // Predicated region
        $region13: #{tpu_custom_call.1} parent=11 // pred_check
          %p429 = pneg %p197
        $region14: #{tpu_custom_call.1} parent=11 // pred_check_branch
          %431 = sbr.rel (%p429) target = $region16
        $region15: #{tpu_custom_call.1} parent=11 // pred_region
          _
        $region16: #{tpu_custom_call.1} parent=11 // pred_fallthru
          _
        // Predicated region
        $region17: #{tpu_custom_call.1} parent=11 // pred_check
          %p432 = pneg %p218
        $region18: #{tpu_custom_call.1} parent=11 // pred_check_branch
          %434 = sbr.rel (%p432) target = $region20
        $region19: #{tpu_custom_call.1} parent=11 // pred_region
          _
        $region20: #{tpu_custom_call.1} parent=11 // pred_fallthru
          _
        // Predicated region
        $region21: #{tpu_custom_call.1} parent=11 // pred_check
          %p435 = pneg %p239
        $region22: #{tpu_custom_call.1} parent=11 // pred_check_branch
          %437 = sbr.rel (%p435) target = $region24
        $region23: #{tpu_custom_call.1} parent=11 // pred_region
          _
        $region24: #{tpu_custom_call.1} parent=11 // pred_fallthru
          _
        // Predicated region
        $region25: #{tpu_custom_call.1} parent=11 // pred_check
          %p438 = pneg %p260
        $region26: #{tpu_custom_call.1} parent=11 // pred_check_branch
          %440 = sbr.rel (%p438) target = $region28
        $region27: #{tpu_custom_call.1} parent=11 // pred_region
          _
        $region28: #{tpu_custom_call.1} parent=11 // pred_fallthru
          _
        // Predicated region
        $region29: #{tpu_custom_call.1} parent=11 // pred_check
          %p441 = pneg %p281
        $region30: #{tpu_custom_call.1} parent=11 // pred_check_branch
          %443 = sbr.rel (%p441) target = $region32
        $region31: #{tpu_custom_call.1} parent=11 // pred_region
          _
        $region32: #{tpu_custom_call.1} parent=11 // pred_fallthru
          _
        // Predicated region
        $region33: #{tpu_custom_call.1} parent=11 // pred_check
          %p444 = pneg %p302
        $region34: #{tpu_custom_call.1} parent=11 // pred_check_branch
          %446 = sbr.rel (%p444) target = $region36
        $region35: #{tpu_custom_call.1} parent=11 // pred_region
          _
        $region36: #{tpu_custom_call.1} parent=11 // pred_fallthru
          _
        // Predicated region
        $region37: #{tpu_custom_call.1} parent=11 // pred_check
          %p447 = pneg %p323
        $region38: #{tpu_custom_call.1} parent=11 // pred_check_branch
          %449 = sbr.rel (%p447) target = $region40
        $region39: #{tpu_custom_call.1} parent=11 // pred_region
          _
        $region40: #{tpu_custom_call.1} parent=11 // pred_fallthru
          _
        // Predicated region
        $region41: #{tpu_custom_call.1} parent=11 // pred_check
          %p450 = pneg %p344
        $region42: #{tpu_custom_call.1} parent=11 // pred_check_branch
          %452 = sbr.rel (%p450) target = $region44
        $region43: #{tpu_custom_call.1} parent=11 // pred_region
          _
        $region44: #{tpu_custom_call.1} parent=11 // pred_fallthru
          _
        // Predicated region
        $region45: #{tpu_custom_call.1} parent=11 // pred_check
          %p453 = pneg %p365
        $region46: #{tpu_custom_call.1} parent=11 // pred_check_branch
          %455 = sbr.rel (%p453) target = $region48
        $region47: #{tpu_custom_call.1} parent=11 // pred_region
          _
        $region48: #{tpu_custom_call.1} parent=11 // pred_fallthru
          _
        // Predicated region
        $region49: #{tpu_custom_call.1} parent=11 // pred_check
          %p456 = pneg %p386
        $region50: #{tpu_custom_call.1} parent=11 // pred_check_branch
          %458 = sbr.rel (%p456) target = $region52
        $region51: #{tpu_custom_call.1} parent=11 // pred_region
          _
        $region52: #{tpu_custom_call.1} parent=11 // pred_fallthru
          _
      $region12: #{tpu_custom_call.1} parent=5 // pred_fallthru
        _
      %p459 = scmp.lt.s32.totalorder %s24, 2
      // Predicated region
      $region53: #{tpu_custom_call.1} parent=5 // pred_check
        %p460 = pneg %p459
      $region54: #{tpu_custom_call.1} parent=5 // pred_check_branch
        %462 = sbr.rel (%p460) target = $region56
      $region55: #{tpu_custom_call.1} parent=5 // pred_region
        // Predicated region
        $region57: #{tpu_custom_call.1} parent=55 // pred_check
          %p463 = pneg %p58
        $region58: #{tpu_custom_call.1} parent=55 // pred_check_branch
          %465 = sbr.rel (%p463) target = $region60
        $region59: #{tpu_custom_call.1} parent=55 // pred_region
          %s466 = smul.u32 2, %s32
          %p467 = scmp.lt.s32.totalorder %s31, 1
          %s468 = scalar_select %p467, %s31, 1
          %p469 = scmp.lt.s32.totalorder %s466, 1
          %s470 = scalar_select %p469, %s466, 1
          %s471 = smul.addr %s468, 8
          %s472 = sadd.s32 %s470, %s471
          %s473 = smul.addr %s472, 4
          %s474 = scalar_lea.vmem %s0, %s473
          %s475 = smul.u32 2, %s32
        $region60: #{tpu_custom_call.1} parent=55 // pred_fallthru
          _
        // Predicated region
        $region61: #{tpu_custom_call.1} parent=55 // pred_check
          %p476 = pneg %p86
        $region62: #{tpu_custom_call.1} parent=55 // pred_check_branch
          %478 = sbr.rel (%p476) target = $region64
        $region63: #{tpu_custom_call.1} parent=55 // pred_region
          %s479 = smul.u32 2, %s32
          %p480 = scmp.lt.s32.totalorder %s31, 1
          %s481 = scalar_select %p480, %s31, 1
          %p482 = scmp.lt.s32.totalorder %s479, 1
          %s483 = scalar_select %p482, %s479, 1
          %s484 = smul.addr %s481, 8
          %s485 = sadd.s32 %s483, %s484
          %s486 = smul.addr %s485, 4
          %s487 = scalar_lea.vmem %s1, %s486
          %s488 = smul.u32 2, %s32
        $region64: #{tpu_custom_call.1} parent=55 // pred_fallthru
          _
        // Predicated region
        $region65: #{tpu_custom_call.1} parent=55 // pred_check
          %p489 = pneg %p114
        $region66: #{tpu_custom_call.1} parent=55 // pred_check_branch
          %491 = sbr.rel (%p489) target = $region68
        $region67: #{tpu_custom_call.1} parent=55 // pred_region
          %s492 = smul.u32 2, %s32
          %p493 = scmp.lt.s32.totalorder %s31, 1
          %s494 = scalar_select %p493, %s31, 1
          %p495 = scmp.lt.s32.totalorder %s492, 1
          %s496 = scalar_select %p495, %s492, 1
          %s497 = smul.addr %s494, 8
          %s498 = sadd.s32 %s496, %s497
          %s499 = smul.addr %s498, 4
          %s500 = scalar_lea.vmem %s2, %s499
          %s501 = smul.u32 2, %s32
        $region68: #{tpu_custom_call.1} parent=55 // pred_fallthru
          _
        // Predicated region
        $region69: #{tpu_custom_call.1} parent=55 // pred_check
          %p502 = pneg %p142
        $region70: #{tpu_custom_call.1} parent=55 // pred_check_branch
          %504 = sbr.rel (%p502) target = $region72
        $region71: #{tpu_custom_call.1} parent=55 // pred_region
          %s505 = smul.u32 2, %s32
          %p506 = scmp.lt.s32.totalorder %s31, 1
          %s507 = scalar_select %p506, %s31, 1
          %p508 = scmp.lt.s32.totalorder %s505, 1
          %s509 = scalar_select %p508, %s505, 1
          %s510 = smul.addr %s507, 8
          %s511 = sadd.s32 %s509, %s510
          %s512 = smul.addr %s511, 4
          %s513 = scalar_lea.vmem %s3, %s512
          %s514 = smul.u32 2, %s32
        $region72: #{tpu_custom_call.1} parent=55 // pred_fallthru
          _
        // Predicated region
        $region73: #{tpu_custom_call.1} parent=55 // pred_check
          %p515 = pneg %p170
        $region74: #{tpu_custom_call.1} parent=55 // pred_check_branch
          %517 = sbr.rel (%p515) target = $region76
        $region75: #{tpu_custom_call.1} parent=55 // pred_region
          %s518 = smul.u32 2, %s32
          %p519 = scmp.lt.s32.totalorder %s31, 1
          %s520 = scalar_select %p519, %s31, 1
          %p521 = scmp.lt.s32.totalorder %s518, 1
          %s522 = scalar_select %p521, %s518, 1
          %s523 = smul.addr %s520, 2
          %s524 = sadd.s32 %s522, %s523
          %s525 = scalar_lea.vmem %s4, %s524
          %s526 = smul.u32 2, %s32
        $region76: #{tpu_custom_call.1} parent=55 // pred_fallthru
          _
      $region56: #{tpu_custom_call.1} parent=5 // pred_fallthru
        _
      %p527 = scmp.le.s32.totalorder 1, %s24
      %p528 = scmp.lt.s32.totalorder %s24, 3
      %p529 = pnand %p527, %p528
      %p530 = pneg %p529
      // Predicated region
      $region77: #{tpu_custom_call.1} parent=5 // pred_check
        _
      $region78: #{tpu_custom_call.1} parent=5 // pred_check_branch
        %532 = sbr.rel (%p529) target = $region80
      $region79: #{tpu_custom_call.1} parent=5 // pred_region
        %s533 = ssub.s32 %s24, 1
        %s534 = smul.u32 2, %s34
        %p535 = scmp.lt.s32.totalorder %s33, 1
        %s536 = scalar_select %p535, %s33, 1
        %p537 = scmp.lt.s32.totalorder %s534, 1
        %s538 = scalar_select %p537, %s534, 1
        %s539 = smul.addr %s536, 8
        %s540 = sadd.s32 %s538, %s539
        %s541 = smul.addr %s540, 4
        %s542 = scalar_lea.vmem %s0, %s541
        %p543 = pneg %p64
        %p544 = pneg %p61
        %s545 = smul.u32 2, %s34
        %p546 = scmp.lt.s32.totalorder %s33, 1
        %s547 = scalar_select %p546, %s33, 1
        %p548 = scmp.lt.s32.totalorder %s545, 1
        %s549 = scalar_select %p548, %s545, 1
        %s550 = smul.addr %s547, 8
        %s551 = sadd.s32 %s549, %s550
        %s552 = smul.addr %s551, 4
        %s553 = scalar_lea.vmem %s1, %s552
        %p554 = pneg %p92
        %p555 = pneg %p89
        %s556 = smul.u32 2, %s34
        %p557 = scmp.lt.s32.totalorder %s33, 1
        %s558 = scalar_select %p557, %s33, 1
        %p559 = scmp.lt.s32.totalorder %s556, 1
        %s560 = scalar_select %p559, %s556, 1
        %s561 = smul.addr %s558, 8
        %s562 = sadd.s32 %s560, %s561
        %s563 = smul.addr %s562, 4
        %s564 = scalar_lea.vmem %s2, %s563
        %p565 = pneg %p120
        %p566 = pneg %p117
        %s567 = smul.u32 2, %s34
        %p568 = scmp.lt.s32.totalorder %s33, 1
        %s569 = scalar_select %p568, %s33, 1
        %p570 = scmp.lt.s32.totalorder %s567, 1
        %s571 = scalar_select %p570, %s567, 1
        %s572 = smul.addr %s569, 8
        %s573 = sadd.s32 %s571, %s572
        %s574 = smul.addr %s573, 4
        %s575 = scalar_lea.vmem %s3, %s574
        %p576 = pneg %p148
        %p577 = pneg %p145
        %s578 = smul.u32 2, %s34
        %p579 = scmp.lt.s32.totalorder %s33, 1
        %s580 = scalar_select %p579, %s33, 1
        %p581 = scmp.lt.s32.totalorder %s578, 1
        %s582 = scalar_select %p581, %s578, 1
        %s583 = smul.addr %s580, 2
        %s584 = sadd.s32 %s582, %s583
        %s585 = scalar_lea.vmem %s4, %s584
        %p586 = pneg %p176
        %p587 = pneg %p173
        %p588 = pneg %p197
        %p589 = pneg %p194
        %p590 = pneg %p218
        %p591 = pneg %p215
        %p592 = pneg %p239
        %p593 = pneg %p236
        %p594 = pneg %p260
        %p595 = pneg %p257
        %p596 = pneg %p281
        %p597 = pneg %p278
        %p598 = pneg %p302
        %p599 = pneg %p299
        %p600 = pneg %p323
        %p601 = pneg %p320
        %p602 = pneg %p344
        %p603 = pneg %p341
        %p604 = pneg %p365
        %p605 = pneg %p362
        %p606 = pneg %p386
        %p607 = pneg %p383
        %p608 = pneg %p414
        %p609 = pneg %p411
        %s610 = sand.u32 %s401, 1
        %s611 = scalar_lea.sflag [#allocation3], %s610
        %s612 = sand.u32 %s401, 1
        %s613 = smul.addr %s612, 32
        %s614 = scalar_lea.vmem [#allocation2], %s613
        %s615 = smul.u32 2, %s34
        %p616 = scmp.lt.s32.totalorder %s33, 1
        %s617 = scalar_select %p616, %s33, 1
        %p618 = scmp.lt.s32.totalorder %s615, 1
        %s619 = scalar_select %p618, %s615, 1
        %s620 = smul.addr %s617, 8
        %s621 = sadd.s32 %s619, %s620
        %s622 = smul.addr %s621, 4
        %s623 = scalar_lea.vmem %s0, %s622
        %s624 = smul.u32 2, %s34
        %s625 = smul.u32 2, %s34
        %p626 = scmp.lt.s32.totalorder %s33, 1
        %s627 = scalar_select %p626, %s33, 1
        %p628 = scmp.lt.s32.totalorder %s625, 1
        %s629 = scalar_select %p628, %s625, 1
        %s630 = smul.addr %s627, 8
        %s631 = sadd.s32 %s629, %s630
        %s632 = smul.addr %s631, 4
        %s633 = scalar_lea.vmem %s1, %s632
        %s634 = smul.u32 2, %s34
        %s635 = smul.u32 2, %s34
        %p636 = scmp.lt.s32.totalorder %s33, 1
        %s637 = scalar_select %p636, %s33, 1
        %p638 = scmp.lt.s32.totalorder %s635, 1
        %s639 = scalar_select %p638, %s635, 1
        %s640 = smul.addr %s637, 8
        %s641 = sadd.s32 %s639, %s640
        %s642 = smul.addr %s641, 4
        %s643 = scalar_lea.vmem %s2, %s642
        %s644 = smul.u32 2, %s34
        %s645 = smul.u32 2, %s34
        %p646 = scmp.lt.s32.totalorder %s33, 1
        %s647 = scalar_select %p646, %s33, 1
        %p648 = scmp.lt.s32.totalorder %s645, 1
        %s649 = scalar_select %p648, %s645, 1
        %s650 = smul.addr %s647, 8
        %s651 = sadd.s32 %s649, %s650
        %s652 = smul.addr %s651, 4
        %s653 = scalar_lea.vmem %s3, %s652
        %s654 = smul.u32 2, %s34
        %s655 = smul.u32 2, %s34
        %p656 = scmp.lt.s32.totalorder %s33, 1
        %s657 = scalar_select %p656, %s33, 1
        %p658 = scmp.lt.s32.totalorder %s655, 1
        %s659 = scalar_select %p658, %s655, 1
        %s660 = smul.addr %s657, 2
        %s661 = sadd.s32 %s659, %s660
        %s662 = scalar_lea.vmem %s4, %s661
        %s663 = smul.u32 2, %s34
        %s664 = smul.u32 2, %s34
        %v666 = vld [vmem:[%s623] sm:$0xff]
        %v667 = vld [vmem:[%s623 + $0x8] sm:$0xff]
        %v668 = vld [vmem:[%s623 + $0x10] sm:$0xff]
        %v669 = vld [vmem:[%s623 + $0x18] sm:$0xff]
        %v670 = vld [vmem:[%s633] sm:$0xff]
        %v671 = vld [vmem:[%s633 + $0x8] sm:$0xff]
        %v672 = vld [vmem:[%s633 + $0x10] sm:$0xff]
        %v673 = vld [vmem:[%s633 + $0x18] sm:$0xff]
        %v674 = vld [vmem:[%s643] sm:$0xff]
        %v675 = vld [vmem:[%s643 + $0x8] sm:$0xff]
        %v676 = vld [vmem:[%s643 + $0x10] sm:$0xff]
        %v677 = vld [vmem:[%s643 + $0x18] sm:$0xff]
        %v678 = vld [vmem:[%s653] sm:$0xff]
        %v679 = vld [vmem:[%s653 + $0x8] sm:$0xff]
        %v680 = vld [vmem:[%s653 + $0x10] sm:$0xff]
        %v681 = vld [vmem:[%s653 + $0x18] sm:$0xff]
        %v682 = vunpack.c.l.bf16 %v666
        %v683 = vunpack.c.h.bf16 %v666
        %v684 = vunpack.c.l.bf16 %v667
        %v685 = vunpack.c.h.bf16 %v667
        %v686 = vunpack.c.l.bf16 %v668
        %v687 = vunpack.c.h.bf16 %v668
        %v688 = vunpack.c.l.bf16 %v669
        %v689 = vunpack.c.h.bf16 %v669
        %v690 = vunpack.c.l.bf16 %v670
        %v691 = vunpack.c.h.bf16 %v670
        %v692 = vunpack.c.l.bf16 %v671
        %v693 = vunpack.c.h.bf16 %v671
        %v694 = vunpack.c.l.bf16 %v672
        %v695 = vunpack.c.h.bf16 %v672
        %v696 = vunpack.c.l.bf16 %v673
        %v697 = vunpack.c.h.bf16 %v673
        %v698 = vunpack.c.l.bf16 %v674
        %v699 = vunpack.c.h.bf16 %v674
        %v700 = vunpack.c.l.bf16 %v675
        %v701 = vunpack.c.h.bf16 %v675
        %v702 = vunpack.c.l.bf16 %v676
        %v703 = vunpack.c.h.bf16 %v676
        %v704 = vunpack.c.l.bf16 %v677
        %v705 = vunpack.c.h.bf16 %v677
        %v706 = vunpack.c.l.bf16 %v678
        %v707 = vunpack.c.h.bf16 %v678
        %v708 = vunpack.c.l.bf16 %v679
        %v709 = vunpack.c.h.bf16 %v679
        %v710 = vunpack.c.l.bf16 %v680
        %v711 = vunpack.c.h.bf16 %v680
        %v712 = vunpack.c.l.bf16 %v681
        %v713 = vunpack.c.h.bf16 %v681
        %v714 = vld [vmem:[%s662] sm:$0x3]
        %v715 = vunpack.c.l.bf16 %v714
        %v720 = vunpack.c.l.b16 %v666
        %v721 = vunpack.c.h.b16 %v666
        %v722 = vunpack.c.l.b16 %v667
        %v723 = vunpack.c.h.b16 %v667
        %v724 = vunpack.c.l.b16 %v668
        %v725 = vunpack.c.h.b16 %v668
        %v726 = vunpack.c.l.b16 %v669
        %v727 = vunpack.c.h.b16 %v669
        %v728 = vpack.c.b16 %v722, %v720
        %v729 = vpack.c.b16 %v723, %v721
        %v730 = vpack.c.b16 %v726, %v724
        %v731 = vpack.c.b16 %v727, %v725
        %v740 = vunpack.c.l.b16 %v670
        %v741 = vunpack.c.h.b16 %v670
        %v742 = vunpack.c.l.b16 %v671
        %v743 = vunpack.c.h.b16 %v671
        %v744 = vunpack.c.l.b16 %v672
        %v745 = vunpack.c.h.b16 %v672
        %v746 = vunpack.c.l.b16 %v673
        %v747 = vunpack.c.h.b16 %v673
        %v748 = vpack.c.b16 %v742, %v740
        %v749 = vpack.c.b16 %v743, %v741
        %v750 = vpack.c.b16 %v746, %v744
        %v751 = vpack.c.b16 %v747, %v745
        %v760 = vunpack.c.l.b16 %v674
        %v761 = vunpack.c.h.b16 %v674
        %v762 = vunpack.c.l.b16 %v675
        %v763 = vunpack.c.h.b16 %v675
        %v764 = vunpack.c.l.b16 %v676
        %v765 = vunpack.c.h.b16 %v676
        %v766 = vunpack.c.l.b16 %v677
        %v767 = vunpack.c.h.b16 %v677
        %v768 = vpack.c.b16 %v762, %v760
        %v769 = vpack.c.b16 %v763, %v761
        %v770 = vpack.c.b16 %v766, %v764
        %v771 = vpack.c.b16 %v767, %v765
        %v780 = vunpack.c.l.b16 %v678
        %v781 = vunpack.c.h.b16 %v678
        %v782 = vunpack.c.l.b16 %v679
        %v783 = vunpack.c.h.b16 %v679
        %v784 = vunpack.c.l.b16 %v680
        %v785 = vunpack.c.h.b16 %v680
        %v786 = vunpack.c.l.b16 %v681
        %v787 = vunpack.c.h.b16 %v681
        %v788 = vpack.c.b16 %v782, %v780
        %v789 = vpack.c.b16 %v783, %v781
        %v790 = vpack.c.b16 %v786, %v784
        %v791 = vpack.c.b16 %v787, %v785
        %v796 = vld [vmem:[%s5] sm:$0xf]
        %v797 = vld [vmem:[%s5 + $0x4] sm:$0xf]
        %v798 = vld [vmem:[%s5 + $0x8] sm:$0xf]
        %v799 = vld [vmem:[%s5 + $0xc] sm:$0xf]
        %v800 = vld [vmem:[%s5 + $0x10] sm:$0xf]
        %v801 = vld [vmem:[%s5 + $0x14] sm:$0xf]
        %v802 = vld [vmem:[%s5 + $0x18] sm:$0xf]
        %v803 = vld [vmem:[%s5 + $0x1c] sm:$0xf]
        %v804 = vld [vmem:[%s5 + $0x20] sm:$0xf]
        %v805 = vld [vmem:[%s5 + $0x24] sm:$0xf]
        %v806 = vld [vmem:[%s5 + $0x28] sm:$0xf]
        %v807 = vld [vmem:[%s5 + $0x2c] sm:$0xf]
        %v808 = vld [vmem:[%s5 + $0x30] sm:$0xf]
        %v809 = vld [vmem:[%s5 + $0x34] sm:$0xf]
        %v810 = vld [vmem:[%s5 + $0x38] sm:$0xf]
        %v811 = vld [vmem:[%s5 + $0x3c] sm:$0xf]
        %v812 = vld [vmem:[%s6] sm:$0xff]
        %v813 = vld [vmem:[%s6 + $0x8] sm:$0xff]
        %v814 = vld [vmem:[%s6 + $0x10] sm:$0xff]
        %v815 = vld [vmem:[%s6 + $0x18] sm:$0xff]
        %v816 = vld [vmem:[%s6 + $0x20] sm:$0xff]
        %v817 = vld [vmem:[%s6 + $0x28] sm:$0xff]
        %v818 = vld [vmem:[%s6 + $0x30] sm:$0xff]
        %v819 = vld [vmem:[%s6 + $0x38] sm:$0xff]
        %v820 = vld [vmem:[%s6 + $0x40] sm:$0xff]
        %v821 = vld [vmem:[%s6 + $0x48] sm:$0xff]
        %v822 = vld [vmem:[%s6 + $0x50] sm:$0xff]
        %v823 = vld [vmem:[%s6 + $0x58] sm:$0xff]
        %v824 = vld [vmem:[%s6 + $0x60] sm:$0xff]
        %v825 = vld [vmem:[%s6 + $0x68] sm:$0xff]
        %v826 = vld [vmem:[%s6 + $0x70] sm:$0xff]
        %v827 = vld [vmem:[%s6 + $0x78] sm:$0xff]
        %829 = vset.pattern.permute.xlu0 0
        %830 = vperm.xlu0 %829, %v812
        %v831 = vpop.permute.xlu0 %830
        %834 = vset.pattern.permute.xlu0 0
        %835 = vperm.xlu0 %834, %v813
        %v836 = vpop.permute.xlu0 %835
        %839 = vset.pattern.permute.xlu0 0
        %840 = vperm.xlu0 %839, %v814
        %v841 = vpop.permute.xlu0 %840
        %844 = vset.pattern.permute.xlu0 0
        %845 = vperm.xlu0 %844, %v815
        %v846 = vpop.permute.xlu0 %845
        %849 = vset.pattern.permute.xlu0 0
        %850 = vperm.xlu0 %849, %v816
        %v851 = vpop.permute.xlu0 %850
        %854 = vset.pattern.permute.xlu0 0
        %855 = vperm.xlu0 %854, %v817
        %v856 = vpop.permute.xlu0 %855
        %859 = vset.pattern.permute.xlu0 0
        %860 = vperm.xlu0 %859, %v818
        %v861 = vpop.permute.xlu0 %860
        %864 = vset.pattern.permute.xlu0 0
        %865 = vperm.xlu0 %864, %v819
        %v866 = vpop.permute.xlu0 %865
        %869 = vset.pattern.permute.xlu0 0
        %870 = vperm.xlu0 %869, %v820
        %v871 = vpop.permute.xlu0 %870
        %874 = vset.pattern.permute.xlu0 0
        %875 = vperm.xlu0 %874, %v821
        %v876 = vpop.permute.xlu0 %875
        %879 = vset.pattern.permute.xlu0 0
        %880 = vperm.xlu0 %879, %v822
        %v881 = vpop.permute.xlu0 %880
        %884 = vset.pattern.permute.xlu0 0
        %885 = vperm.xlu0 %884, %v823
        %v886 = vpop.permute.xlu0 %885
        %889 = vset.pattern.permute.xlu0 0
        %890 = vperm.xlu0 %889, %v824
        %v891 = vpop.permute.xlu0 %890
        %894 = vset.pattern.permute.xlu0 0
        %895 = vperm.xlu0 %894, %v825
        %v896 = vpop.permute.xlu0 %895
        %899 = vset.pattern.permute.xlu0 0
        %900 = vperm.xlu0 %899, %v826
        %v901 = vpop.permute.xlu0 %900
        %904 = vset.pattern.permute.xlu0 0
        %905 = vperm.xlu0 %904, %v827
        %v906 = vpop.permute.xlu0 %905
        %v924 = vunpack.c.l.b16 %v796
        %v925 = vunpack.c.l.b16 %v797
        %v926 = vunpack.c.l.b16 %v798
        %v927 = vunpack.c.l.b16 %v799
        %v928 = vunpack.c.l.b16 %v800
        %v929 = vunpack.c.l.b16 %v801
        %v930 = vunpack.c.l.b16 %v802
        %v931 = vunpack.c.l.b16 %v803
        %v932 = vunpack.c.l.b16 %v804
        %v933 = vunpack.c.l.b16 %v805
        %v934 = vunpack.c.l.b16 %v806
        %v935 = vunpack.c.l.b16 %v807
        %v936 = vunpack.c.l.b16 %v808
        %v937 = vunpack.c.l.b16 %v809
        %v938 = vunpack.c.l.b16 %v810
        %v939 = vunpack.c.l.b16 %v811
        %v940 = vpack.c.b16 %v925, %v924
        %v941 = vpack.c.b16 %v927, %v926
        %v942 = vpack.c.b16 %v929, %v928
        %v943 = vpack.c.b16 %v931, %v930
        %v944 = vpack.c.b16 %v933, %v932
        %v945 = vpack.c.b16 %v935, %v934
        %v946 = vpack.c.b16 %v937, %v936
        %v947 = vpack.c.b16 %v939, %v938
        %vm948 = vcmask 261120
        %v950 = vsel %vm948, %v940, 0
        %v953 = vsel %vm948, %v941, 0
        %v956 = vsel %vm948, %v942, 0
        %v959 = vsel %vm948, %v943, 0
        %v962 = vsel %vm948, %v944, 0
        %v965 = vsel %vm948, %v945, 0
        %v968 = vsel %vm948, %v946, 0
        %v971 = vsel %vm948, %v947, 0
        %973 = vmatprep.subr.bf16.mxu0 %v729
        %974 = vmatpush1.bf16.msra.mxu0 %v728
        %975 = vmatprep.subr.bf16.mxu0 %v731
        %976 = vmatpush1.bf16.msra.mxu0 %v730
        %977 = vmatprep.subr.bf16.mxu0 0
        %978 = vmatpush1.bf16.msra.mxu0 0
        %979 = vmatprep.subr.bf16.mxu0 0
        %980 = vmatpush1.bf16.msra.mxu0 0
        %981 = vmatprep.subr.bf16.mxu0 0
        %982 = vmatpush1.bf16.msra.mxu0 0
        %983 = vmatprep.subr.bf16.mxu0 0
        %984 = vmatpush1.bf16.msra.mxu0 0
        %985 = vmatprep.subr.bf16.mxu0 0
        %986 = vmatpush1.bf16.msra.mxu0 0
        %987 = vmatprep.subr.bf16.mxu0 0
        %988 = vmatpush1.bf16.msra.mxu0 0
        %989 = vmatprep.subr.bf16.mxu0 0
        %990 = vmatpush1.bf16.msra.mxu0 0
        %991 = vmatprep.subr.bf16.mxu0 0
        %992 = vmatpush1.bf16.msra.mxu0 0
        %993 = vmatprep.subr.bf16.mxu0 0
        %994 = vmatpush1.bf16.msra.mxu0 0
        %995 = vmatprep.subr.bf16.mxu0 0
        %996 = vmatpush1.bf16.msra.mxu0 0
        %997 = vmatprep.subr.bf16.mxu0 0
        %998 = vmatpush1.bf16.msra.mxu0 0
        %999 = vmatprep.subr.bf16.mxu0 0
        %1000 = vmatpush1.bf16.msra.mxu0 0
        %1001 = vmatprep.subr.bf16.mxu0 0
        %1002 = vmatpush1.bf16.msra.mxu0 0
        %1003 = vmatprep.subr.bf16.mxu0 0
        %1004 = vmatpush1.bf16.msra.mxu0 0
        %1005 = vmatprep.mubr.bf16.mxu0 0
        %1006 = vmatmul.mubr.bf16.gmra.mrb[0].mxu0 %v950
        %v1007 = vpop.f32.mrb[0].mxu0
        %v1008 = vadd.f32 %v831, %v1007
        %v1009 = vpop.f32.mrb[0].mxu0
        %v1010 = vadd.f32 %v831, %v1009
        %v1011 = vpop.f32.mrb[0].mxu0
        %v1012 = vadd.f32 %v836, %v1011
        %v1013 = vpop.f32.mrb[0].mxu0
        %v1014 = vadd.f32 %v836, %v1013
        %1015 = vmatprep.mubr.bf16.mxu0 0
        %1016 = vmatmul.mubr.bf16.gmra.mrb[0].mxu0 %v953
        %v1017 = vpop.f32.mrb[0].mxu0
        %v1018 = vadd.f32 %v841, %v1017
        %v1019 = vpop.f32.mrb[0].mxu0
        %v1020 = vadd.f32 %v841, %v1019
        %v1021 = vpop.f32.mrb[0].mxu0
        %v1022 = vadd.f32 %v846, %v1021
        %v1023 = vpop.f32.mrb[0].mxu0
        %v1024 = vadd.f32 %v846, %v1023
        %1025 = vmatprep.mubr.bf16.mxu0 0
        %1026 = vmatmul.mubr.bf16.gmra.mrb[0].mxu0 %v956
        %v1027 = vpop.f32.mrb[0].mxu0
        %v1028 = vadd.f32 %v851, %v1027
        %v1029 = vpop.f32.mrb[0].mxu0
        %v1030 = vadd.f32 %v851, %v1029
        %v1031 = vpop.f32.mrb[0].mxu0
        %v1032 = vadd.f32 %v856, %v1031
        %v1033 = vpop.f32.mrb[0].mxu0
        %v1034 = vadd.f32 %v856, %v1033
        %1035 = vmatprep.mubr.bf16.mxu0 0
        %1036 = vmatmul.mubr.bf16.gmra.mrb[0].mxu0 %v959
        %v1037 = vpop.f32.mrb[0].mxu0
        %v1038 = vadd.f32 %v861, %v1037
        %v1039 = vpop.f32.mrb[0].mxu0
        %v1040 = vadd.f32 %v861, %v1039
        %v1041 = vpop.f32.mrb[0].mxu0
        %v1042 = vadd.f32 %v866, %v1041
        %v1043 = vpop.f32.mrb[0].mxu0
        %v1044 = vadd.f32 %v866, %v1043
        %1045 = vmatprep.mubr.bf16.mxu0 0
        %1046 = vmatmul.mubr.bf16.gmra.mrb[0].mxu0 %v962
        %v1047 = vpop.f32.mrb[0].mxu0
        %v1048 = vadd.f32 %v871, %v1047
        %v1049 = vpop.f32.mrb[0].mxu0
        %v1050 = vadd.f32 %v871, %v1049
        %v1051 = vpop.f32.mrb[0].mxu0
        %v1052 = vadd.f32 %v876, %v1051
        %v1053 = vpop.f32.mrb[0].mxu0
        %v1054 = vadd.f32 %v876, %v1053
        %1055 = vmatprep.mubr.bf16.mxu0 0
        %1056 = vmatmul.mubr.bf16.gmra.mrb[0].mxu0 %v965
        %v1057 = vpop.f32.mrb[0].mxu0
        %v1058 = vadd.f32 %v881, %v1057
        %v1059 = vpop.f32.mrb[0].mxu0
        %v1060 = vadd.f32 %v881, %v1059
        %v1061 = vpop.f32.mrb[0].mxu0
        %v1062 = vadd.f32 %v886, %v1061
        %v1063 = vpop.f32.mrb[0].mxu0
        %v1064 = vadd.f32 %v886, %v1063
        %1065 = vmatprep.mubr.bf16.mxu0 0
        %1066 = vmatmul.mubr.bf16.gmra.mrb[0].mxu0 %v968
        %v1067 = vpop.f32.mrb[0].mxu0
        %v1068 = vadd.f32 %v891, %v1067
        %v1069 = vpop.f32.mrb[0].mxu0
        %v1070 = vadd.f32 %v891, %v1069
        %v1071 = vpop.f32.mrb[0].mxu0
        %v1072 = vadd.f32 %v896, %v1071
        %v1073 = vpop.f32.mrb[0].mxu0
        %v1074 = vadd.f32 %v896, %v1073
        %1075 = vmatprep.mubr.bf16.mxu0 0
        %1076 = vmatmul.mubr.bf16.gmra.mrb[0].mxu0 %v971
        %v1077 = vpop.f32.mrb[0].mxu0
        %v1078 = vadd.f32 %v901, %v1077
        %v1079 = vpop.f32.mrb[0].mxu0
        %v1080 = vadd.f32 %v901, %v1079
        %v1081 = vpop.f32.mrb[0].mxu0
        %v1082 = vadd.f32 %v906, %v1081
        %v1083 = vpop.f32.mrb[0].mxu0
        %v1084 = vadd.f32 %v906, %v1083
        %1085 = vdwg.mxu0
        %1086 = vmatprep.subr.bf16.mxu0 %v749
        %1087 = vmatpush1.bf16.msra.mxu0 %v748
        %1088 = vmatprep.subr.bf16.mxu0 %v751
        %1089 = vmatpush1.bf16.msra.mxu0 %v750
        %1090 = vmatprep.subr.bf16.mxu0 0
        %1091 = vmatpush1.bf16.msra.mxu0 0
        %1092 = vmatprep.subr.bf16.mxu0 0
        %1093 = vmatpush1.bf16.msra.mxu0 0
        %1094 = vmatprep.subr.bf16.mxu0 0
        %1095 = vmatpush1.bf16.msra.mxu0 0
        %1096 = vmatprep.subr.bf16.mxu0 0
        %1097 = vmatpush1.bf16.msra.mxu0 0
        %1098 = vmatprep.subr.bf16.mxu0 0
        %1099 = vmatpush1.bf16.msra.mxu0 0
        %1100 = vmatprep.subr.bf16.mxu0 0
        %1101 = vmatpush1.bf16.msra.mxu0 0
        %1102 = vmatprep.subr.bf16.mxu0 0
        %1103 = vmatpush1.bf16.msra.mxu0 0
        %1104 = vmatprep.subr.bf16.mxu0 0
        %1105 = vmatpush1.bf16.msra.mxu0 0
        %1106 = vmatprep.subr.bf16.mxu0 0
        %1107 = vmatpush1.bf16.msra.mxu0 0
        %1108 = vmatprep.subr.bf16.mxu0 0
        %1109 = vmatpush1.bf16.msra.mxu0 0
        %1110 = vmatprep.subr.bf16.mxu0 0
        %1111 = vmatpush1.bf16.msra.mxu0 0
        %1112 = vmatprep.subr.bf16.mxu0 0
        %1113 = vmatpush1.bf16.msra.mxu0 0
        %1114 = vmatprep.subr.bf16.mxu0 0
        %1115 = vmatpush1.bf16.msra.mxu0 0
        %1116 = vmatprep.subr.bf16.mxu0 0
        %1117 = vmatpush1.bf16.msra.mxu0 0
        %1118 = vmatprep.mubr.bf16.mxu0 0
        %1119 = vmatmul.mubr.bf16.gmra.mrb[0].mxu0 %v950
        %v1120 = vpop.f32.mrb[0].mxu0
        %v1121 = vadd.f32 %v831, %v1120
        %v1122 = vpop.f32.mrb[0].mxu0
        %v1123 = vadd.f32 %v831, %v1122
        %v1124 = vpop.f32.mrb[0].mxu0
        %v1125 = vadd.f32 %v836, %v1124
        %v1126 = vpop.f32.mrb[0].mxu0
        %v1127 = vadd.f32 %v836, %v1126
        %1128 = vmatprep.mubr.bf16.mxu0 0
        %1129 = vmatmul.mubr.bf16.gmra.mrb[0].mxu0 %v953
        %v1130 = vpop.f32.mrb[0].mxu0
        %v1131 = vadd.f32 %v841, %v1130
        %v1132 = vpop.f32.mrb[0].mxu0
        %v1133 = vadd.f32 %v841, %v1132
        %v1134 = vpop.f32.mrb[0].mxu0
        %v1135 = vadd.f32 %v846, %v1134
        %v1136 = vpop.f32.mrb[0].mxu0
        %v1137 = vadd.f32 %v846, %v1136
        %1138 = vmatprep.mubr.bf16.mxu0 0
        %1139 = vmatmul.mubr.bf16.gmra.mrb[0].mxu0 %v956
        %v1140 = vpop.f32.mrb[0].mxu0
        %v1141 = vadd.f32 %v851, %v1140
        %v1142 = vpop.f32.mrb[0].mxu0
        %v1143 = vadd.f32 %v851, %v1142
        %v1144 = vpop.f32.mrb[0].mxu0
        %v1145 = vadd.f32 %v856, %v1144
        %v1146 = vpop.f32.mrb[0].mxu0
        %v1147 = vadd.f32 %v856, %v1146
        %1148 = vmatprep.mubr.bf16.mxu0 0
        %1149 = vmatmul.mubr.bf16.gmra.mrb[0].mxu0 %v959
        %v1150 = vpop.f32.mrb[0].mxu0
        %v1151 = vadd.f32 %v861, %v1150
        %v1152 = vpop.f32.mrb[0].mxu0
        %v1153 = vadd.f32 %v861, %v1152
        %v1154 = vpop.f32.mrb[0].mxu0
        %v1155 = vadd.f32 %v866, %v1154
        %v1156 = vpop.f32.mrb[0].mxu0
        %v1157 = vadd.f32 %v866, %v1156
        %1158 = vmatprep.mubr.bf16.mxu0 0
        %1159 = vmatmul.mubr.bf16.gmra.mrb[0].mxu0 %v962
        %v1160 = vpop.f32.mrb[0].mxu0
        %v1161 = vadd.f32 %v871, %v1160
        %v1162 = vpop.f32.mrb[0].mxu0
        %v1163 = vadd.f32 %v871, %v1162
        %v1164 = vpop.f32.mrb[0].mxu0
        %v1165 = vadd.f32 %v876, %v1164
        %v1166 = vpop.f32.mrb[0].mxu0
        %v1167 = vadd.f32 %v876, %v1166
        %1168 = vmatprep.mubr.bf16.mxu0 0
        %1169 = vmatmul.mubr.bf16.gmra.mrb[0].mxu0 %v965
        %v1170 = vpop.f32.mrb[0].mxu0
        %v1171 = vadd.f32 %v881, %v1170
        %v1172 = vpop.f32.mrb[0].mxu0
        %v1173 = vadd.f32 %v881, %v1172
        %v1174 = vpop.f32.mrb[0].mxu0
        %v1175 = vadd.f32 %v886, %v1174
        %v1176 = vpop.f32.mrb[0].mxu0
        %v1177 = vadd.f32 %v886, %v1176
        %1178 = vmatprep.mubr.bf16.mxu0 0
        %1179 = vmatmul.mubr.bf16.gmra.mrb[0].mxu0 %v968
        %v1180 = vpop.f32.mrb[0].mxu0
        %v1181 = vadd.f32 %v891, %v1180
        %v1182 = vpop.f32.mrb[0].mxu0
        %v1183 = vadd.f32 %v891, %v1182
        %v1184 = vpop.f32.mrb[0].mxu0
        %v1185 = vadd.f32 %v896, %v1184
        %v1186 = vpop.f32.mrb[0].mxu0
        %v1187 = vadd.f32 %v896, %v1186
        %1188 = vmatprep.mubr.bf16.mxu0 0
        %1189 = vmatmul.mubr.bf16.gmra.mrb[0].mxu0 %v971
        %v1190 = vpop.f32.mrb[0].mxu0
        %v1191 = vadd.f32 %v901, %v1190
        %v1192 = vpop.f32.mrb[0].mxu0
        %v1193 = vadd.f32 %v901, %v1192
        %v1194 = vpop.f32.mrb[0].mxu0
        %v1195 = vadd.f32 %v906, %v1194
        %v1196 = vpop.f32.mrb[0].mxu0
        %v1197 = vadd.f32 %v906, %v1196
        %1198 = vdwg.mxu0
        %1199 = vmatprep.subr.bf16.mxu0 %v769
        %1200 = vmatpush1.bf16.msra.mxu0 %v768
        %1201 = vmatprep.subr.bf16.mxu0 %v771
        %1202 = vmatpush1.bf16.msra.mxu0 %v770
        %1203 = vmatprep.subr.bf16.mxu0 0
        %1204 = vmatpush1.bf16.msra.mxu0 0
        %1205 = vmatprep.subr.bf16.mxu0 0
        %1206 = vmatpush1.bf16.msra.mxu0 0
        %1207 = vmatprep.subr.bf16.mxu0 0
        %1208 = vmatpush1.bf16.msra.mxu0 0
        %1209 = vmatprep.subr.bf16.mxu0 0
        %1210 = vmatpush1.bf16.msra.mxu0 0
        %1211 = vmatprep.subr.bf16.mxu0 0
        %1212 = vmatpush1.bf16.msra.mxu0 0
        %1213 = vmatprep.subr.bf16.mxu0 0
        %1214 = vmatpush1.bf16.msra.mxu0 0
        %1215 = vmatprep.subr.bf16.mxu0 0
        %1216 = vmatpush1.bf16.msra.mxu0 0
        %1217 = vmatprep.subr.bf16.mxu0 0
        %1218 = vmatpush1.bf16.msra.mxu0 0
        %1219 = vmatprep.subr.bf16.mxu0 0
        %1220 = vmatpush1.bf16.msra.mxu0 0
        %1221 = vmatprep.subr.bf16.mxu0 0
        %1222 = vmatpush1.bf16.msra.mxu0 0
        %1223 = vmatprep.subr.bf16.mxu0 0
        %1224 = vmatpush1.bf16.msra.mxu0 0
        %1225 = vmatprep.subr.bf16.mxu0 0
        %1226 = vmatpush1.bf16.msra.mxu0 0
        %1227 = vmatprep.subr.bf16.mxu0 0
        %1228 = vmatpush1.bf16.msra.mxu0 0
        %1229 = vmatprep.subr.bf16.mxu0 0
        %1230 = vmatpush1.bf16.msra.mxu0 0
        %1231 = vmatprep.mubr.bf16.mxu0 0
        %1232 = vmatmul.mubr.bf16.gmra.mrb[0].mxu0 %v950
        %v1233 = vpop.f32.mrb[0].mxu0
        %v1234 = vadd.f32 %v831, %v1233
        %v1235 = vpop.f32.mrb[0].mxu0
        %v1236 = vadd.f32 %v831, %v1235
        %v1237 = vpop.f32.mrb[0].mxu0
        %v1238 = vadd.f32 %v836, %v1237
        %v1239 = vpop.f32.mrb[0].mxu0
        %v1240 = vadd.f32 %v836, %v1239
        %1241 = vmatprep.mubr.bf16.mxu0 0
        %1242 = vmatmul.mubr.bf16.gmra.mrb[0].mxu0 %v953
        %v1243 = vpop.f32.mrb[0].mxu0
        %v1244 = vadd.f32 %v841, %v1243
        %v1245 = vpop.f32.mrb[0].mxu0
        %v1246 = vadd.f32 %v841, %v1245
        %v1247 = vpop.f32.mrb[0].mxu0
        %v1248 = vadd.f32 %v846, %v1247
        %v1249 = vpop.f32.mrb[0].mxu0
        %v1250 = vadd.f32 %v846, %v1249
        %1251 = vmatprep.mubr.bf16.mxu0 0
        %1252 = vmatmul.mubr.bf16.gmra.mrb[0].mxu0 %v956
        %v1253 = vpop.f32.mrb[0].mxu0
        %v1254 = vadd.f32 %v851, %v1253
        %v1255 = vpop.f32.mrb[0].mxu0
        %v1256 = vadd.f32 %v851, %v1255
        %v1257 = vpop.f32.mrb[0].mxu0
        %v1258 = vadd.f32 %v856, %v1257
        %v1259 = vpop.f32.mrb[0].mxu0
        %v1260 = vadd.f32 %v856, %v1259
        %1261 = vmatprep.mubr.bf16.mxu0 0
        %1262 = vmatmul.mubr.bf16.gmra.mrb[0].mxu0 %v959
        %v1263 = vpop.f32.mrb[0].mxu0
        %v1264 = vadd.f32 %v861, %v1263
        %v1265 = vpop.f32.mrb[0].mxu0
        %v1266 = vadd.f32 %v861, %v1265
        %v1267 = vpop.f32.mrb[0].mxu0
        %v1268 = vadd.f32 %v866, %v1267
        %v1269 = vpop.f32.mrb[0].mxu0
        %v1270 = vadd.f32 %v866, %v1269
        %1271 = vmatprep.mubr.bf16.mxu0 0
        %1272 = vmatmul.mubr.bf16.gmra.mrb[0].mxu0 %v962
        %v1273 = vpop.f32.mrb[0].mxu0
        %v1274 = vadd.f32 %v871, %v1273
        %v1275 = vpop.f32.mrb[0].mxu0
        %v1276 = vadd.f32 %v871, %v1275
        %v1277 = vpop.f32.mrb[0].mxu0
        %v1278 = vadd.f32 %v876, %v1277
        %v1279 = vpop.f32.mrb[0].mxu0
        %v1280 = vadd.f32 %v876, %v1279
        %1281 = vmatprep.mubr.bf16.mxu0 0
        %1282 = vmatmul.mubr.bf16.gmra.mrb[0].mxu0 %v965
        %v1283 = vpop.f32.mrb[0].mxu0
        %v1284 = vadd.f32 %v881, %v1283
        %v1285 = vpop.f32.mrb[0].mxu0
        %v1286 = vadd.f32 %v881, %v1285
        %v1287 = vpop.f32.mrb[0].mxu0
        %v1288 = vadd.f32 %v886, %v1287
        %v1289 = vpop.f32.mrb[0].mxu0
        %v1290 = vadd.f32 %v886, %v1289
        %1291 = vmatprep.mubr.bf16.mxu0 0
        %1292 = vmatmul.mubr.bf16.gmra.mrb[0].mxu0 %v968
        %v1293 = vpop.f32.mrb[0].mxu0
        %v1294 = vadd.f32 %v891, %v1293
        %v1295 = vpop.f32.mrb[0].mxu0
        %v1296 = vadd.f32 %v891, %v1295
        %v1297 = vpop.f32.mrb[0].mxu0
        %v1298 = vadd.f32 %v896, %v1297
        %v1299 = vpop.f32.mrb[0].mxu0
        %v1300 = vadd.f32 %v896, %v1299
        %1301 = vmatprep.mubr.bf16.mxu0 0
        %1302 = vmatmul.mubr.bf16.gmra.mrb[0].mxu0 %v971
        %v1303 = vpop.f32.mrb[0].mxu0
        %v1304 = vadd.f32 %v901, %v1303
        %v1305 = vpop.f32.mrb[0].mxu0
        %v1306 = vadd.f32 %v901, %v1305
        %v1307 = vpop.f32.mrb[0].mxu0
        %v1308 = vadd.f32 %v906, %v1307
        %v1309 = vpop.f32.mrb[0].mxu0
        %v1310 = vadd.f32 %v906, %v1309
        %1311 = vdwg.mxu0
        %1312 = vmatprep.subr.bf16.mxu0 %v789
        %1313 = vmatpush1.bf16.msra.mxu0 %v788
        %1314 = vmatprep.subr.bf16.mxu0 %v791
        %1315 = vmatpush1.bf16.msra.mxu0 %v790
        %1316 = vmatprep.subr.bf16.mxu0 0
        %1317 = vmatpush1.bf16.msra.mxu0 0
        %1318 = vmatprep.subr.bf16.mxu0 0
        %1319 = vmatpush1.bf16.msra.mxu0 0
        %1320 = vmatprep.subr.bf16.mxu0 0
        %1321 = vmatpush1.bf16.msra.mxu0 0
        %1322 = vmatprep.subr.bf16.mxu0 0
        %1323 = vmatpush1.bf16.msra.mxu0 0
        %1324 = vmatprep.subr.bf16.mxu0 0
        %1325 = vmatpush1.bf16.msra.mxu0 0
        %1326 = vmatprep.subr.bf16.mxu0 0
        %1327 = vmatpush1.bf16.msra.mxu0 0
        %1328 = vmatprep.subr.bf16.mxu0 0
        %1329 = vmatpush1.bf16.msra.mxu0 0
        %1330 = vmatprep.subr.bf16.mxu0 0
        %1331 = vmatpush1.bf16.msra.mxu0 0
        %1332 = vmatprep.subr.bf16.mxu0 0
        %1333 = vmatpush1.bf16.msra.mxu0 0
        %1334 = vmatprep.subr.bf16.mxu0 0
        %1335 = vmatpush1.bf16.msra.mxu0 0
        %1336 = vmatprep.subr.bf16.mxu0 0
        %1337 = vmatpush1.bf16.msra.mxu0 0
        %1338 = vmatprep.subr.bf16.mxu0 0
        %1339 = vmatpush1.bf16.msra.mxu0 0
        %1340 = vmatprep.subr.bf16.mxu0 0
        %1341 = vmatpush1.bf16.msra.mxu0 0
        %1342 = vmatprep.subr.bf16.mxu0 0
        %1343 = vmatpush1.bf16.msra.mxu0 0
        %1344 = vmatprep.mubr.bf16.mxu0 0
        %1345 = vmatmul.mubr.bf16.gmra.mrb[0].mxu0 %v950
        %v1346 = vpop.f32.mrb[0].mxu0
        %v1347 = vadd.f32 %v831, %v1346
        %v1348 = vpop.f32.mrb[0].mxu0
        %v1349 = vadd.f32 %v831, %v1348
        %v1350 = vpop.f32.mrb[0].mxu0
        %v1351 = vadd.f32 %v836, %v1350
        %v1352 = vpop.f32.mrb[0].mxu0
        %v1353 = vadd.f32 %v836, %v1352
        %1354 = vmatprep.mubr.bf16.mxu0 0
        %1355 = vmatmul.mubr.bf16.gmra.mrb[0].mxu0 %v953
        %v1356 = vpop.f32.mrb[0].mxu0
        %v1357 = vadd.f32 %v841, %v1356
        %v1358 = vpop.f32.mrb[0].mxu0
        %v1359 = vadd.f32 %v841, %v1358
        %v1360 = vpop.f32.mrb[0].mxu0
        %v1361 = vadd.f32 %v846, %v1360
        %v1362 = vpop.f32.mrb[0].mxu0
        %v1363 = vadd.f32 %v846, %v1362
        %1364 = vmatprep.mubr.bf16.mxu0 0
        %1365 = vmatmul.mubr.bf16.gmra.mrb[0].mxu0 %v956
        %v1366 = vpop.f32.mrb[0].mxu0
        %v1367 = vadd.f32 %v851, %v1366
        %v1368 = vpop.f32.mrb[0].mxu0
        %v1369 = vadd.f32 %v851, %v1368
        %v1370 = vpop.f32.mrb[0].mxu0
        %v1371 = vadd.f32 %v856, %v1370
        %v1372 = vpop.f32.mrb[0].mxu0
        %v1373 = vadd.f32 %v856, %v1372
        %1374 = vmatprep.mubr.bf16.mxu0 0
        %1375 = vmatmul.mubr.bf16.gmra.mrb[0].mxu0 %v959
        %v1376 = vpop.f32.mrb[0].mxu0
        %v1377 = vadd.f32 %v861, %v1376
        %v1378 = vpop.f32.mrb[0].mxu0
        %v1379 = vadd.f32 %v861, %v1378
        %v1380 = vpop.f32.mrb[0].mxu0
        %v1381 = vadd.f32 %v866, %v1380
        %v1382 = vpop.f32.mrb[0].mxu0
        %v1383 = vadd.f32 %v866, %v1382
        %1384 = vmatprep.mubr.bf16.mxu0 0
        %1385 = vmatmul.mubr.bf16.gmra.mrb[0].mxu0 %v962
        %v1386 = vpop.f32.mrb[0].mxu0
        %v1387 = vadd.f32 %v871, %v1386
        %v1388 = vpop.f32.mrb[0].mxu0
        %v1389 = vadd.f32 %v871, %v1388
        %v1390 = vpop.f32.mrb[0].mxu0
        %v1391 = vadd.f32 %v876, %v1390
        %v1392 = vpop.f32.mrb[0].mxu0
        %v1393 = vadd.f32 %v876, %v1392
        %1394 = vmatprep.mubr.bf16.mxu0 0
        %1395 = vmatmul.mubr.bf16.gmra.mrb[0].mxu0 %v965
        %v1396 = vpop.f32.mrb[0].mxu0
        %v1397 = vadd.f32 %v881, %v1396
        %v1398 = vpop.f32.mrb[0].mxu0
        %v1399 = vadd.f32 %v881, %v1398
        %v1400 = vpop.f32.mrb[0].mxu0
        %v1401 = vadd.f32 %v886, %v1400
        %v1402 = vpop.f32.mrb[0].mxu0
        %v1403 = vadd.f32 %v886, %v1402
        %1404 = vmatprep.mubr.bf16.mxu0 0
        %1405 = vmatmul.mubr.bf16.gmra.mrb[0].mxu0 %v968
        %v1406 = vpop.f32.mrb[0].mxu0
        %v1407 = vadd.f32 %v891, %v1406
        %v1408 = vpop.f32.mrb[0].mxu0
        %v1409 = vadd.f32 %v891, %v1408
        %v1410 = vpop.f32.mrb[0].mxu0
        %v1411 = vadd.f32 %v896, %v1410
        %v1412 = vpop.f32.mrb[0].mxu0
        %v1413 = vadd.f32 %v896, %v1412
        %1414 = vmatprep.mubr.bf16.mxu0 0
        %1415 = vmatmul.mubr.bf16.gmra.mrb[0].mxu0 %v971
        %v1416 = vpop.f32.mrb[0].mxu0
        %v1417 = vadd.f32 %v901, %v1416
        %v1418 = vpop.f32.mrb[0].mxu0
        %v1419 = vadd.f32 %v901, %v1418
        %v1420 = vpop.f32.mrb[0].mxu0
        %v1421 = vadd.f32 %v906, %v1420
        %v1422 = vpop.f32.mrb[0].mxu0
        %v1423 = vadd.f32 %v906, %v1422
        %1424 = vdwg.mxu0
        %v1425 = vxor.u32 %v1008, 2147483648
        %v1426 = vxor.u32 %v1010, 2147483648
        %v1427 = vxor.u32 %v1121, 2147483648
        %v1428 = vxor.u32 %v1123, 2147483648
        %v1429 = vxor.u32 %v1234, 2147483648
        %v1430 = vxor.u32 %v1236, 2147483648
        %v1431 = vxor.u32 %v1347, 2147483648
        %v1432 = vxor.u32 %v1349, 2147483648
        %v1433 = vxor.u32 %v1012, 2147483648
        %v1434 = vxor.u32 %v1014, 2147483648
        %v1435 = vxor.u32 %v1125, 2147483648
        %v1436 = vxor.u32 %v1127, 2147483648
        %v1437 = vxor.u32 %v1238, 2147483648
        %v1438 = vxor.u32 %v1240, 2147483648
        %v1439 = vxor.u32 %v1351, 2147483648
        %v1440 = vxor.u32 %v1353, 2147483648
        %v1441 = vxor.u32 %v1018, 2147483648
        %v1442 = vxor.u32 %v1020, 2147483648
        %v1443 = vxor.u32 %v1131, 2147483648
        %v1444 = vxor.u32 %v1133, 2147483648
        %v1445 = vxor.u32 %v1244, 2147483648
        %v1446 = vxor.u32 %v1246, 2147483648
        %v1447 = vxor.u32 %v1357, 2147483648
        %v1448 = vxor.u32 %v1359, 2147483648
        %v1449 = vxor.u32 %v1022, 2147483648
        %v1450 = vxor.u32 %v1024, 2147483648
        %v1451 = vxor.u32 %v1135, 2147483648
        %v1452 = vxor.u32 %v1137, 2147483648
        %v1453 = vxor.u32 %v1248, 2147483648
        %v1454 = vxor.u32 %v1250, 2147483648
        %v1455 = vxor.u32 %v1361, 2147483648
        %v1456 = vxor.u32 %v1363, 2147483648
        %v1457 = vxor.u32 %v1028, 2147483648
        %v1458 = vxor.u32 %v1030, 2147483648
        %v1459 = vxor.u32 %v1141, 2147483648
        %v1460 = vxor.u32 %v1143, 2147483648
        %v1461 = vxor.u32 %v1254, 2147483648
        %v1462 = vxor.u32 %v1256, 2147483648
        %v1463 = vxor.u32 %v1367, 2147483648
        %v1464 = vxor.u32 %v1369, 2147483648
        %v1465 = vxor.u32 %v1032, 2147483648
        %v1466 = vxor.u32 %v1034, 2147483648
        %v1467 = vxor.u32 %v1145, 2147483648
        %v1468 = vxor.u32 %v1147, 2147483648
        %v1469 = vxor.u32 %v1258, 2147483648
        %v1470 = vxor.u32 %v1260, 2147483648
        %v1471 = vxor.u32 %v1371, 2147483648
        %v1472 = vxor.u32 %v1373, 2147483648
        %v1473 = vxor.u32 %v1038, 2147483648
        %v1474 = vxor.u32 %v1040, 2147483648
        %v1475 = vxor.u32 %v1151, 2147483648
        %v1476 = vxor.u32 %v1153, 2147483648
        %v1477 = vxor.u32 %v1264, 2147483648
        %v1478 = vxor.u32 %v1266, 2147483648
        %v1479 = vxor.u32 %v1377, 2147483648
        %v1480 = vxor.u32 %v1379, 2147483648
        %v1481 = vxor.u32 %v1042, 2147483648
        %v1482 = vxor.u32 %v1044, 2147483648
        %v1483 = vxor.u32 %v1155, 2147483648
        %v1484 = vxor.u32 %v1157, 2147483648
        %v1485 = vxor.u32 %v1268, 2147483648
        %v1486 = vxor.u32 %v1270, 2147483648
        %v1487 = vxor.u32 %v1381, 2147483648
        %v1488 = vxor.u32 %v1383, 2147483648
        %v1489 = vxor.u32 %v1048, 2147483648
        %v1490 = vxor.u32 %v1050, 2147483648
        %v1491 = vxor.u32 %v1161, 2147483648
        %v1492 = vxor.u32 %v1163, 2147483648
        %v1493 = vxor.u32 %v1274, 2147483648
        %v1494 = vxor.u32 %v1276, 2147483648
        %v1495 = vxor.u32 %v1387, 2147483648
        %v1496 = vxor.u32 %v1389, 2147483648
        %v1497 = vxor.u32 %v1052, 2147483648
        %v1498 = vxor.u32 %v1054, 2147483648
        %v1499 = vxor.u32 %v1165, 2147483648
        %v1500 = vxor.u32 %v1167, 2147483648
        %v1501 = vxor.u32 %v1278, 2147483648
        %v1502 = vxor.u32 %v1280, 2147483648
        %v1503 = vxor.u32 %v1391, 2147483648
        %v1504 = vxor.u32 %v1393, 2147483648
        %v1505 = vxor.u32 %v1058, 2147483648
        %v1506 = vxor.u32 %v1060, 2147483648
        %v1507 = vxor.u32 %v1171, 2147483648
        %v1508 = vxor.u32 %v1173, 2147483648
        %v1509 = vxor.u32 %v1284, 2147483648
        %v1510 = vxor.u32 %v1286, 2147483648
        %v1511 = vxor.u32 %v1397, 2147483648
        %v1512 = vxor.u32 %v1399, 2147483648
        %v1513 = vxor.u32 %v1062, 2147483648
        %v1514 = vxor.u32 %v1064, 2147483648
        %v1515 = vxor.u32 %v1175, 2147483648
        %v1516 = vxor.u32 %v1177, 2147483648
        %v1517 = vxor.u32 %v1288, 2147483648
        %v1518 = vxor.u32 %v1290, 2147483648
        %v1519 = vxor.u32 %v1401, 2147483648
        %v1520 = vxor.u32 %v1403, 2147483648
        %v1521 = vxor.u32 %v1068, 2147483648
        %v1522 = vxor.u32 %v1070, 2147483648
        %v1523 = vxor.u32 %v1181, 2147483648
        %v1524 = vxor.u32 %v1183, 2147483648
        %v1525 = vxor.u32 %v1294, 2147483648
        %v1526 = vxor.u32 %v1296, 2147483648
        %v1527 = vxor.u32 %v1407, 2147483648
        %v1528 = vxor.u32 %v1409, 2147483648
        %v1529 = vxor.u32 %v1072, 2147483648
        %v1530 = vxor.u32 %v1074, 2147483648
        %v1531 = vxor.u32 %v1185, 2147483648
        %v1532 = vxor.u32 %v1187, 2147483648
        %v1533 = vxor.u32 %v1298, 2147483648
        %v1534 = vxor.u32 %v1300, 2147483648
        %v1535 = vxor.u32 %v1411, 2147483648
        %v1536 = vxor.u32 %v1413, 2147483648
        %v1537 = vxor.u32 %v1078, 2147483648
        %v1538 = vxor.u32 %v1080, 2147483648
        %v1539 = vxor.u32 %v1191, 2147483648
        %v1540 = vxor.u32 %v1193, 2147483648
        %v1541 = vxor.u32 %v1304, 2147483648
        %v1542 = vxor.u32 %v1306, 2147483648
        %v1543 = vxor.u32 %v1417, 2147483648
        %v1544 = vxor.u32 %v1419, 2147483648
        %v1545 = vxor.u32 %v1082, 2147483648
        %v1546 = vxor.u32 %v1084, 2147483648
        %v1547 = vxor.u32 %v1195, 2147483648
        %v1548 = vxor.u32 %v1197, 2147483648
        %v1549 = vxor.u32 %v1308, 2147483648
        %v1550 = vxor.u32 %v1310, 2147483648
        %v1551 = vxor.u32 %v1421, 2147483648
        %v1552 = vxor.u32 %v1423, 2147483648
        %v1553 = vmul.f32 %v1425, 1.442695
        %v1554 = vpow.pop %v1553
        %v1555 = vmul.f32 %v1426, 1.442695
        %v1556 = vpow.pop %v1555
        %v1557 = vmul.f32 %v1427, 1.442695
        %v1558 = vpow.pop %v1557
        %v1559 = vmul.f32 %v1428, 1.442695
        %v1560 = vpow.pop %v1559
        %v1561 = vmul.f32 %v1429, 1.442695
        %v1562 = vpow.pop %v1561
        %v1563 = vmul.f32 %v1430, 1.442695
        %v1564 = vpow.pop %v1563
        %v1565 = vmul.f32 %v1431, 1.442695
        %v1566 = vpow.pop %v1565
        %v1567 = vmul.f32 %v1432, 1.442695
        %v1568 = vpow.pop %v1567
        %v1569 = vmul.f32 %v1433, 1.442695
        %v1570 = vpow.pop %v1569
        %v1571 = vmul.f32 %v1434, 1.442695
        %v1572 = vpow.pop %v1571
        %v1573 = vmul.f32 %v1435, 1.442695
        %v1574 = vpow.pop %v1573
        %v1575 = vmul.f32 %v1436, 1.442695
        %v1576 = vpow.pop %v1575
        %v1577 = vmul.f32 %v1437, 1.442695
        %v1578 = vpow.pop %v1577
        %v1579 = vmul.f32 %v1438, 1.442695
        %v1580 = vpow.pop %v1579
        %v1581 = vmul.f32 %v1439, 1.442695
        %v1582 = vpow.pop %v1581
        %v1583 = vmul.f32 %v1440, 1.442695
        %v1584 = vpow.pop %v1583
        %v1585 = vmul.f32 %v1441, 1.442695
        %v1586 = vpow.pop %v1585
        %v1587 = vmul.f32 %v1442, 1.442695
        %v1588 = vpow.pop %v1587
        %v1589 = vmul.f32 %v1443, 1.442695
        %v1590 = vpow.pop %v1589
        %v1591 = vmul.f32 %v1444, 1.442695
        %v1592 = vpow.pop %v1591
        %v1593 = vmul.f32 %v1445, 1.442695
        %v1594 = vpow.pop %v1593
        %v1595 = vmul.f32 %v1446, 1.442695
        %v1596 = vpow.pop %v1595
        %v1597 = vmul.f32 %v1447, 1.442695
        %v1598 = vpow.pop %v1597
        %v1599 = vmul.f32 %v1448, 1.442695
        %v1600 = vpow.pop %v1599
        %v1601 = vmul.f32 %v1449, 1.442695
        %v1602 = vpow.pop %v1601
        %v1603 = vmul.f32 %v1450, 1.442695
        %v1604 = vpow.pop %v1603
        %v1605 = vmul.f32 %v1451, 1.442695
        %v1606 = vpow.pop %v1605
        %v1607 = vmul.f32 %v1452, 1.442695
        %v1608 = vpow.pop %v1607
        %v1609 = vmul.f32 %v1453, 1.442695
        %v1610 = vpow.pop %v1609
        %v1611 = vmul.f32 %v1454, 1.442695
        %v1612 = vpow.pop %v1611
        %v1613 = vmul.f32 %v1455, 1.442695
        %v1614 = vpow.pop %v1613
        %v1615 = vmul.f32 %v1456, 1.442695
        %v1616 = vpow.pop %v1615
        %v1617 = vmul.f32 %v1457, 1.442695
        %v1618 = vpow.pop %v1617
        %v1619 = vmul.f32 %v1458, 1.442695
        %v1620 = vpow.pop %v1619
        %v1621 = vmul.f32 %v1459, 1.442695
        %v1622 = vpow.pop %v1621
        %v1623 = vmul.f32 %v1460, 1.442695
        %v1624 = vpow.pop %v1623
        %v1625 = vmul.f32 %v1461, 1.442695
        %v1626 = vpow.pop %v1625
        %v1627 = vmul.f32 %v1462, 1.442695
        %v1628 = vpow.pop %v1627
        %v1629 = vmul.f32 %v1463, 1.442695
        %v1630 = vpow.pop %v1629
        %v1631 = vmul.f32 %v1464, 1.442695
        %v1632 = vpow.pop %v1631
        %v1633 = vmul.f32 %v1465, 1.442695
        %v1634 = vpow.pop %v1633
        %v1635 = vmul.f32 %v1466, 1.442695
        %v1636 = vpow.pop %v1635
        %v1637 = vmul.f32 %v1467, 1.442695
        %v1638 = vpow.pop %v1637
        %v1639 = vmul.f32 %v1468, 1.442695
        %v1640 = vpow.pop %v1639
        %v1641 = vmul.f32 %v1469, 1.442695
        %v1642 = vpow.pop %v1641
        %v1643 = vmul.f32 %v1470, 1.442695
        %v1644 = vpow.pop %v1643
        %v1645 = vmul.f32 %v1471, 1.442695
        %v1646 = vpow.pop %v1645
        %v1647 = vmul.f32 %v1472, 1.442695
        %v1648 = vpow.pop %v1647
        %v1649 = vmul.f32 %v1473, 1.442695
        %v1650 = vpow.pop %v1649
        %v1651 = vmul.f32 %v1474, 1.442695
        %v1652 = vpow.pop %v1651
        %v1653 = vmul.f32 %v1475, 1.442695
        %v1654 = vpow.pop %v1653
        %v1655 = vmul.f32 %v1476, 1.442695
        %v1656 = vpow.pop %v1655
        %v1657 = vmul.f32 %v1477, 1.442695
        %v1658 = vpow.pop %v1657
        %v1659 = vmul.f32 %v1478, 1.442695
        %v1660 = vpow.pop %v1659
        %v1661 = vmul.f32 %v1479, 1.442695
        %v1662 = vpow.pop %v1661
        %v1663 = vmul.f32 %v1480, 1.442695
        %v1664 = vpow.pop %v1663
        %v1665 = vmul.f32 %v1481, 1.442695
        %v1666 = vpow.pop %v1665
        %v1667 = vmul.f32 %v1482, 1.442695
        %v1668 = vpow.pop %v1667
        %v1669 = vmul.f32 %v1483, 1.442695
        %v1670 = vpow.pop %v1669
        %v1671 = vmul.f32 %v1484, 1.442695
        %v1672 = vpow.pop %v1671
        %v1673 = vmul.f32 %v1485, 1.442695
        %v1674 = vpow.pop %v1673
        %v1675 = vmul.f32 %v1486, 1.442695
        %v1676 = vpow.pop %v1675
        %v1677 = vmul.f32 %v1487, 1.442695
        %v1678 = vpow.pop %v1677
        %v1679 = vmul.f32 %v1488, 1.442695
        %v1680 = vpow.pop %v1679
        %v1681 = vmul.f32 %v1489, 1.442695
        %v1682 = vpow.pop %v1681
        %v1683 = vmul.f32 %v1490, 1.442695
        %v1684 = vpow.pop %v1683
        %v1685 = vmul.f32 %v1491, 1.442695
        %v1686 = vpow.pop %v1685
        %v1687 = vmul.f32 %v1492, 1.442695
        %v1688 = vpow.pop %v1687
        %v1689 = vmul.f32 %v1493, 1.442695
        %v1690 = vpow.pop %v1689
        %v1691 = vmul.f32 %v1494, 1.442695
        %v1692 = vpow.pop %v1691
        %v1693 = vmul.f32 %v1495, 1.442695
        %v1694 = vpow.pop %v1693
        %v1695 = vmul.f32 %v1496, 1.442695
        %v1696 = vpow.pop %v1695
        %v1697 = vmul.f32 %v1497, 1.442695
        %v1698 = vpow.pop %v1697
        %v1699 = vmul.f32 %v1498, 1.442695
        %v1700 = vpow.pop %v1699
        %v1701 = vmul.f32 %v1499, 1.442695
        %v1702 = vpow.pop %v1701
        %v1703 = vmul.f32 %v1500, 1.442695
        %v1704 = vpow.pop %v1703
        %v1705 = vmul.f32 %v1501, 1.442695
        %v1706 = vpow.pop %v1705
        %v1707 = vmul.f32 %v1502, 1.442695
        %v1708 = vpow.pop %v1707
        %v1709 = vmul.f32 %v1503, 1.442695
        %v1710 = vpow.pop %v1709
        %v1711 = vmul.f32 %v1504, 1.442695
        %v1712 = vpow.pop %v1711
        %v1713 = vmul.f32 %v1505, 1.442695
        %v1714 = vpow.pop %v1713
        %v1715 = vmul.f32 %v1506, 1.442695
        %v1716 = vpow.pop %v1715
        %v1717 = vmul.f32 %v1507, 1.442695
        %v1718 = vpow.pop %v1717
        %v1719 = vmul.f32 %v1508, 1.442695
        %v1720 = vpow.pop %v1719
        %v1721 = vmul.f32 %v1509, 1.442695
        %v1722 = vpow.pop %v1721
        %v1723 = vmul.f32 %v1510, 1.442695
        %v1724 = vpow.pop %v1723
        %v1725 = vmul.f32 %v1511, 1.442695
        %v1726 = vpow.pop %v1725
        %v1727 = vmul.f32 %v1512, 1.442695
        %v1728 = vpow.pop %v1727
        %v1729 = vmul.f32 %v1513, 1.442695
        %v1730 = vpow.pop %v1729
        %v1731 = vmul.f32 %v1514, 1.442695
        %v1732 = vpow.pop %v1731
        %v1733 = vmul.f32 %v1515, 1.442695
        %v1734 = vpow.pop %v1733
        %v1735 = vmul.f32 %v1516, 1.442695
        %v1736 = vpow.pop %v1735
        %v1737 = vmul.f32 %v1517, 1.442695
        %v1738 = vpow.pop %v1737
        %v1739 = vmul.f32 %v1518, 1.442695
        %v1740 = vpow.pop %v1739
        %v1741 = vmul.f32 %v1519, 1.442695
        %v1742 = vpow.pop %v1741
        %v1743 = vmul.f32 %v1520, 1.442695
        %v1744 = vpow.pop %v1743
        %v1745 = vmul.f32 %v1521, 1.442695
        %v1746 = vpow.pop %v1745
        %v1747 = vmul.f32 %v1522, 1.442695
        %v1748 = vpow.pop %v1747
        %v1749 = vmul.f32 %v1523, 1.442695
        %v1750 = vpow.pop %v1749
        %v1751 = vmul.f32 %v1524, 1.442695
        %v1752 = vpow.pop %v1751
        %v1753 = vmul.f32 %v1525, 1.442695
        %v1754 = vpow.pop %v1753
        %v1755 = vmul.f32 %v1526, 1.442695
        %v1756 = vpow.pop %v1755
        %v1757 = vmul.f32 %v1527, 1.442695
        %v1758 = vpow.pop %v1757
        %v1759 = vmul.f32 %v1528, 1.442695
        %v1760 = vpow.pop %v1759
        %v1761 = vmul.f32 %v1529, 1.442695
        %v1762 = vpow.pop %v1761
        %v1763 = vmul.f32 %v1530, 1.442695
        %v1764 = vpow.pop %v1763
        %v1765 = vmul.f32 %v1531, 1.442695
        %v1766 = vpow.pop %v1765
        %v1767 = vmul.f32 %v1532, 1.442695
        %v1768 = vpow.pop %v1767
        %v1769 = vmul.f32 %v1533, 1.442695
        %v1770 = vpow.pop %v1769
        %v1771 = vmul.f32 %v1534, 1.442695
        %v1772 = vpow.pop %v1771
        %v1773 = vmul.f32 %v1535, 1.442695
        %v1774 = vpow.pop %v1773
        %v1775 = vmul.f32 %v1536, 1.442695
        %v1776 = vpow.pop %v1775
        %v1777 = vmul.f32 %v1537, 1.442695
        %v1778 = vpow.pop %v1777
        %v1779 = vmul.f32 %v1538, 1.442695
        %v1780 = vpow.pop %v1779
        %v1781 = vmul.f32 %v1539, 1.442695
        %v1782 = vpow.pop %v1781
        %v1783 = vmul.f32 %v1540, 1.442695
        %v1784 = vpow.pop %v1783
        %v1785 = vmul.f32 %v1541, 1.442695
        %v1786 = vpow.pop %v1785
        %v1787 = vmul.f32 %v1542, 1.442695
        %v1788 = vpow.pop %v1787
        %v1789 = vmul.f32 %v1543, 1.442695
        %v1790 = vpow.pop %v1789
        %v1791 = vmul.f32 %v1544, 1.442695
        %v1792 = vpow.pop %v1791
        %v1793 = vmul.f32 %v1545, 1.442695
        %v1794 = vpow.pop %v1793
        %v1795 = vmul.f32 %v1546, 1.442695
        %v1796 = vpow.pop %v1795
        %v1797 = vmul.f32 %v1547, 1.442695
        %v1798 = vpow.pop %v1797
        %v1799 = vmul.f32 %v1548, 1.442695
        %v1800 = vpow.pop %v1799
        %v1801 = vmul.f32 %v1549, 1.442695
        %v1802 = vpow.pop %v1801
        %v1803 = vmul.f32 %v1550, 1.442695
        %v1804 = vpow.pop %v1803
        %v1805 = vmul.f32 %v1551, 1.442695
        %v1806 = vpow.pop %v1805
        %v1807 = vmul.f32 %v1552, 1.442695
        %v1808 = vpow.pop %v1807
        %v1809 = vadd.f32 %v1554, 1.0
        %v1810 = vadd.f32 %v1556, 1.0
        %v1811 = vadd.f32 %v1558, 1.0
        %v1812 = vadd.f32 %v1560, 1.0
        %v1813 = vadd.f32 %v1562, 1.0
        %v1814 = vadd.f32 %v1564, 1.0
        %v1815 = vadd.f32 %v1566, 1.0
        %v1816 = vadd.f32 %v1568, 1.0
        %v1817 = vadd.f32 %v1570, 1.0
        %v1818 = vadd.f32 %v1572, 1.0
        %v1819 = vadd.f32 %v1574, 1.0
        %v1820 = vadd.f32 %v1576, 1.0
        %v1821 = vadd.f32 %v1578, 1.0
        %v1822 = vadd.f32 %v1580, 1.0
        %v1823 = vadd.f32 %v1582, 1.0
        %v1824 = vadd.f32 %v1584, 1.0
        %v1825 = vadd.f32 %v1586, 1.0
        %v1826 = vadd.f32 %v1588, 1.0
        %v1827 = vadd.f32 %v1590, 1.0
        %v1828 = vadd.f32 %v1592, 1.0
        %v1829 = vadd.f32 %v1594, 1.0
        %v1830 = vadd.f32 %v1596, 1.0
        %v1831 = vadd.f32 %v1598, 1.0
        %v1832 = vadd.f32 %v1600, 1.0
        %v1833 = vadd.f32 %v1602, 1.0
        %v1834 = vadd.f32 %v1604, 1.0
        %v1835 = vadd.f32 %v1606, 1.0
        %v1836 = vadd.f32 %v1608, 1.0
        %v1837 = vadd.f32 %v1610, 1.0
        %v1838 = vadd.f32 %v1612, 1.0
        %v1839 = vadd.f32 %v1614, 1.0
        %v1840 = vadd.f32 %v1616, 1.0
        %v1841 = vadd.f32 %v1618, 1.0
        %v1842 = vadd.f32 %v1620, 1.0
        %v1843 = vadd.f32 %v1622, 1.0
        %v1844 = vadd.f32 %v1624, 1.0
        %v1845 = vadd.f32 %v1626, 1.0
        %v1846 = vadd.f32 %v1628, 1.0
        %v1847 = vadd.f32 %v1630, 1.0
        %v1848 = vadd.f32 %v1632, 1.0
        %v1849 = vadd.f32 %v1634, 1.0
        %v1850 = vadd.f32 %v1636, 1.0
        %v1851 = vadd.f32 %v1638, 1.0
        %v1852 = vadd.f32 %v1640, 1.0
        %v1853 = vadd.f32 %v1642, 1.0
        %v1854 = vadd.f32 %v1644, 1.0
        %v1855 = vadd.f32 %v1646, 1.0
        %v1856 = vadd.f32 %v1648, 1.0
        %v1857 = vadd.f32 %v1650, 1.0
        %v1858 = vadd.f32 %v1652, 1.0
        %v1859 = vadd.f32 %v1654, 1.0
        %v1860 = vadd.f32 %v1656, 1.0
        %v1861 = vadd.f32 %v1658, 1.0
        %v1862 = vadd.f32 %v1660, 1.0
        %v1863 = vadd.f32 %v1662, 1.0
        %v1864 = vadd.f32 %v1664, 1.0
        %v1865 = vadd.f32 %v1666, 1.0
        %v1866 = vadd.f32 %v1668, 1.0
        %v1867 = vadd.f32 %v1670, 1.0
        %v1868 = vadd.f32 %v1672, 1.0
        %v1869 = vadd.f32 %v1674, 1.0
        %v1870 = vadd.f32 %v1676, 1.0
        %v1871 = vadd.f32 %v1678, 1.0
        %v1872 = vadd.f32 %v1680, 1.0
        %v1873 = vadd.f32 %v1682, 1.0
        %v1874 = vadd.f32 %v1684, 1.0
        %v1875 = vadd.f32 %v1686, 1.0
        %v1876 = vadd.f32 %v1688, 1.0
        %v1877 = vadd.f32 %v1690, 1.0
        %v1878 = vadd.f32 %v1692, 1.0
        %v1879 = vadd.f32 %v1694, 1.0
        %v1880 = vadd.f32 %v1696, 1.0
        %v1881 = vadd.f32 %v1698, 1.0
        %v1882 = vadd.f32 %v1700, 1.0
        %v1883 = vadd.f32 %v1702, 1.0
        %v1884 = vadd.f32 %v1704, 1.0
        %v1885 = vadd.f32 %v1706, 1.0
        %v1886 = vadd.f32 %v1708, 1.0
        %v1887 = vadd.f32 %v1710, 1.0
        %v1888 = vadd.f32 %v1712, 1.0
        %v1889 = vadd.f32 %v1714, 1.0
        %v1890 = vadd.f32 %v1716, 1.0
        %v1891 = vadd.f32 %v1718, 1.0
        %v1892 = vadd.f32 %v1720, 1.0
        %v1893 = vadd.f32 %v1722, 1.0
        %v1894 = vadd.f32 %v1724, 1.0
        %v1895 = vadd.f32 %v1726, 1.0
        %v1896 = vadd.f32 %v1728, 1.0
        %v1897 = vadd.f32 %v1730, 1.0
        %v1898 = vadd.f32 %v1732, 1.0
        %v1899 = vadd.f32 %v1734, 1.0
        %v1900 = vadd.f32 %v1736, 1.0
        %v1901 = vadd.f32 %v1738, 1.0
        %v1902 = vadd.f32 %v1740, 1.0
        %v1903 = vadd.f32 %v1742, 1.0
        %v1904 = vadd.f32 %v1744, 1.0
        %v1905 = vadd.f32 %v1746, 1.0
        %v1906 = vadd.f32 %v1748, 1.0
        %v1907 = vadd.f32 %v1750, 1.0
        %v1908 = vadd.f32 %v1752, 1.0
        %v1909 = vadd.f32 %v1754, 1.0
        %v1910 = vadd.f32 %v1756, 1.0
        %v1911 = vadd.f32 %v1758, 1.0
        %v1912 = vadd.f32 %v1760, 1.0
        %v1913 = vadd.f32 %v1762, 1.0
        %v1914 = vadd.f32 %v1764, 1.0
        %v1915 = vadd.f32 %v1766, 1.0
        %v1916 = vadd.f32 %v1768, 1.0
        %v1917 = vadd.f32 %v1770, 1.0
        %v1918 = vadd.f32 %v1772, 1.0
        %v1919 = vadd.f32 %v1774, 1.0
        %v1920 = vadd.f32 %v1776, 1.0
        %v1921 = vadd.f32 %v1778, 1.0
        %v1922 = vadd.f32 %v1780, 1.0
        %v1923 = vadd.f32 %v1782, 1.0
        %v1924 = vadd.f32 %v1784, 1.0
        %v1925 = vadd.f32 %v1786, 1.0
        %v1926 = vadd.f32 %v1788, 1.0
        %v1927 = vadd.f32 %v1790, 1.0
        %v1928 = vadd.f32 %v1792, 1.0
        %v1929 = vadd.f32 %v1794, 1.0
        %v1930 = vadd.f32 %v1796, 1.0
        %v1931 = vadd.f32 %v1798, 1.0
        %v1932 = vadd.f32 %v1800, 1.0
        %v1933 = vadd.f32 %v1802, 1.0
        %v1934 = vadd.f32 %v1804, 1.0
        %v1935 = vadd.f32 %v1806, 1.0
        %v1936 = vadd.f32 %v1808, 1.0
        %v1937 = vrcp.pop %v1809
        %v1938 = vmul.f32 1.0, %v1937
        %v1939 = vrcp.pop %v1810
        %v1940 = vmul.f32 1.0, %v1939
        %v1941 = vrcp.pop %v1811
        %v1942 = vmul.f32 1.0, %v1941
        %v1943 = vrcp.pop %v1812
        %v1944 = vmul.f32 1.0, %v1943
        %v1945 = vrcp.pop %v1813
        %v1946 = vmul.f32 1.0, %v1945
        %v1947 = vrcp.pop %v1814
        %v1948 = vmul.f32 1.0, %v1947
        %v1949 = vrcp.pop %v1815
        %v1950 = vmul.f32 1.0, %v1949
        %v1951 = vrcp.pop %v1816
        %v1952 = vmul.f32 1.0, %v1951
        %v1953 = vrcp.pop %v1817
        %v1954 = vmul.f32 1.0, %v1953
        %v1955 = vrcp.pop %v1818
        %v1956 = vmul.f32 1.0, %v1955
        %v1957 = vrcp.pop %v1819
        %v1958 = vmul.f32 1.0, %v1957
        %v1959 = vrcp.pop %v1820
        %v1960 = vmul.f32 1.0, %v1959
        %v1961 = vrcp.pop %v1821
        %v1962 = vmul.f32 1.0, %v1961
        %v1963 = vrcp.pop %v1822
        %v1964 = vmul.f32 1.0, %v1963
        %v1965 = vrcp.pop %v1823
        %v1966 = vmul.f32 1.0, %v1965
        %v1967 = vrcp.pop %v1824
        %v1968 = vmul.f32 1.0, %v1967
        %v1969 = vrcp.pop %v1825
        %v1970 = vmul.f32 1.0, %v1969
        %v1971 = vrcp.pop %v1826
        %v1972 = vmul.f32 1.0, %v1971
        %v1973 = vrcp.pop %v1827
        %v1974 = vmul.f32 1.0, %v1973
        %v1975 = vrcp.pop %v1828
        %v1976 = vmul.f32 1.0, %v1975
        %v1977 = vrcp.pop %v1829
        %v1978 = vmul.f32 1.0, %v1977
        %v1979 = vrcp.pop %v1830
        %v1980 = vmul.f32 1.0, %v1979
        %v1981 = vrcp.pop %v1831
        %v1982 = vmul.f32 1.0, %v1981
        %v1983 = vrcp.pop %v1832
        %v1984 = vmul.f32 1.0, %v1983
        %v1985 = vrcp.pop %v1833
        %v1986 = vmul.f32 1.0, %v1985
        %v1987 = vrcp.pop %v1834
        %v1988 = vmul.f32 1.0, %v1987
        %v1989 = vrcp.pop %v1835
        %v1990 = vmul.f32 1.0, %v1989
        %v1991 = vrcp.pop %v1836
        %v1992 = vmul.f32 1.0, %v1991
        %v1993 = vrcp.pop %v1837
        %v1994 = vmul.f32 1.0, %v1993
        %v1995 = vrcp.pop %v1838
        %v1996 = vmul.f32 1.0, %v1995
        %v1997 = vrcp.pop %v1839
        %v1998 = vmul.f32 1.0, %v1997
        %v1999 = vrcp.pop %v1840
        %v2000 = vmul.f32 1.0, %v1999
        %v2001 = vrcp.pop %v1841
        %v2002 = vmul.f32 1.0, %v2001
        %v2003 = vrcp.pop %v1842
        %v2004 = vmul.f32 1.0, %v2003
        %v2005 = vrcp.pop %v1843
        %v2006 = vmul.f32 1.0, %v2005
        %v2007 = vrcp.pop %v1844
        %v2008 = vmul.f32 1.0, %v2007
        %v2009 = vrcp.pop %v1845
        %v2010 = vmul.f32 1.0, %v2009
        %v2011 = vrcp.pop %v1846
        %v2012 = vmul.f32 1.0, %v2011
        %v2013 = vrcp.pop %v1847
        %v2014 = vmul.f32 1.0, %v2013
        %v2015 = vrcp.pop %v1848
        %v2016 = vmul.f32 1.0, %v2015
        %v2017 = vrcp.pop %v1849
        %v2018 = vmul.f32 1.0, %v2017
        %v2019 = vrcp.pop %v1850
        %v2020 = vmul.f32 1.0, %v2019
        %v2021 = vrcp.pop %v1851
        %v2022 = vmul.f32 1.0, %v2021
        %v2023 = vrcp.pop %v1852
        %v2024 = vmul.f32 1.0, %v2023
        %v2025 = vrcp.pop %v1853
        %v2026 = vmul.f32 1.0, %v2025
        %v2027 = vrcp.pop %v1854
        %v2028 = vmul.f32 1.0, %v2027
        %v2029 = vrcp.pop %v1855
        %v2030 = vmul.f32 1.0, %v2029
        %v2031 = vrcp.pop %v1856
        %v2032 = vmul.f32 1.0, %v2031
        %v2033 = vrcp.pop %v1857
        %v2034 = vmul.f32 1.0, %v2033
        %v2035 = vrcp.pop %v1858
        %v2036 = vmul.f32 1.0, %v2035
        %v2037 = vrcp.pop %v1859
        %v2038 = vmul.f32 1.0, %v2037
        %v2039 = vrcp.pop %v1860
        %v2040 = vmul.f32 1.0, %v2039
        %v2041 = vrcp.pop %v1861
        %v2042 = vmul.f32 1.0, %v2041
        %v2043 = vrcp.pop %v1862
        %v2044 = vmul.f32 1.0, %v2043
        %v2045 = vrcp.pop %v1863
        %v2046 = vmul.f32 1.0, %v2045
        %v2047 = vrcp.pop %v1864
        %v2048 = vmul.f32 1.0, %v2047
        %v2049 = vrcp.pop %v1865
        %v2050 = vmul.f32 1.0, %v2049
        %v2051 = vrcp.pop %v1866
        %v2052 = vmul.f32 1.0, %v2051
        %v2053 = vrcp.pop %v1867
        %v2054 = vmul.f32 1.0, %v2053
        %v2055 = vrcp.pop %v1868
        %v2056 = vmul.f32 1.0, %v2055
        %v2057 = vrcp.pop %v1869
        %v2058 = vmul.f32 1.0, %v2057
        %v2059 = vrcp.pop %v1870
        %v2060 = vmul.f32 1.0, %v2059
        %v2061 = vrcp.pop %v1871
        %v2062 = vmul.f32 1.0, %v2061
        %v2063 = vrcp.pop %v1872
        %v2064 = vmul.f32 1.0, %v2063
        %v2065 = vrcp.pop %v1873
        %v2066 = vmul.f32 1.0, %v2065
        %v2067 = vrcp.pop %v1874
        %v2068 = vmul.f32 1.0, %v2067
        %v2069 = vrcp.pop %v1875
        %v2070 = vmul.f32 1.0, %v2069
        %v2071 = vrcp.pop %v1876
        %v2072 = vmul.f32 1.0, %v2071
        %v2073 = vrcp.pop %v1877
        %v2074 = vmul.f32 1.0, %v2073
        %v2075 = vrcp.pop %v1878
        %v2076 = vmul.f32 1.0, %v2075
        %v2077 = vrcp.pop %v1879
        %v2078 = vmul.f32 1.0, %v2077
        %v2079 = vrcp.pop %v1880
        %v2080 = vmul.f32 1.0, %v2079
        %v2081 = vrcp.pop %v1881
        %v2082 = vmul.f32 1.0, %v2081
        %v2083 = vrcp.pop %v1882
        %v2084 = vmul.f32 1.0, %v2083
        %v2085 = vrcp.pop %v1883
        %v2086 = vmul.f32 1.0, %v2085
        %v2087 = vrcp.pop %v1884
        %v2088 = vmul.f32 1.0, %v2087
        %v2089 = vrcp.pop %v1885
        %v2090 = vmul.f32 1.0, %v2089
        %v2091 = vrcp.pop %v1886
        %v2092 = vmul.f32 1.0, %v2091
        %v2093 = vrcp.pop %v1887
        %v2094 = vmul.f32 1.0, %v2093
        %v2095 = vrcp.pop %v1888
        %v2096 = vmul.f32 1.0, %v2095
        %v2097 = vrcp.pop %v1889
        %v2098 = vmul.f32 1.0, %v2097
        %v2099 = vrcp.pop %v1890
        %v2100 = vmul.f32 1.0, %v2099
        %v2101 = vrcp.pop %v1891
        %v2102 = vmul.f32 1.0, %v2101
        %v2103 = vrcp.pop %v1892
        %v2104 = vmul.f32 1.0, %v2103
        %v2105 = vrcp.pop %v1893
        %v2106 = vmul.f32 1.0, %v2105
        %v2107 = vrcp.pop %v1894
        %v2108 = vmul.f32 1.0, %v2107
        %v2109 = vrcp.pop %v1895
        %v2110 = vmul.f32 1.0, %v2109
        %v2111 = vrcp.pop %v1896
        %v2112 = vmul.f32 1.0, %v2111
        %v2113 = vrcp.pop %v1897
        %v2114 = vmul.f32 1.0, %v2113
        %v2115 = vrcp.pop %v1898
        %v2116 = vmul.f32 1.0, %v2115
        %v2117 = vrcp.pop %v1899
        %v2118 = vmul.f32 1.0, %v2117
        %v2119 = vrcp.pop %v1900
        %v2120 = vmul.f32 1.0, %v2119
        %v2121 = vrcp.pop %v1901
        %v2122 = vmul.f32 1.0, %v2121
        %v2123 = vrcp.pop %v1902
        %v2124 = vmul.f32 1.0, %v2123
        %v2125 = vrcp.pop %v1903
        %v2126 = vmul.f32 1.0, %v2125
        %v2127 = vrcp.pop %v1904
        %v2128 = vmul.f32 1.0, %v2127
        %v2129 = vrcp.pop %v1905
        %v2130 = vmul.f32 1.0, %v2129
        %v2131 = vrcp.pop %v1906
        %v2132 = vmul.f32 1.0, %v2131
        %v2133 = vrcp.pop %v1907
        %v2134 = vmul.f32 1.0, %v2133
        %v2135 = vrcp.pop %v1908
        %v2136 = vmul.f32 1.0, %v2135
        %v2137 = vrcp.pop %v1909
        %v2138 = vmul.f32 1.0, %v2137
        %v2139 = vrcp.pop %v1910
        %v2140 = vmul.f32 1.0, %v2139
        %v2141 = vrcp.pop %v1911
        %v2142 = vmul.f32 1.0, %v2141
        %v2143 = vrcp.pop %v1912
        %v2144 = vmul.f32 1.0, %v2143
        %v2145 = vrcp.pop %v1913
        %v2146 = vmul.f32 1.0, %v2145
        %v2147 = vrcp.pop %v1914
        %v2148 = vmul.f32 1.0, %v2147
        %v2149 = vrcp.pop %v1915
        %v2150 = vmul.f32 1.0, %v2149
        %v2151 = vrcp.pop %v1916
        %v2152 = vmul.f32 1.0, %v2151
        %v2153 = vrcp.pop %v1917
        %v2154 = vmul.f32 1.0, %v2153
        %v2155 = vrcp.pop %v1918
        %v2156 = vmul.f32 1.0, %v2155
        %v2157 = vrcp.pop %v1919
        %v2158 = vmul.f32 1.0, %v2157
        %v2159 = vrcp.pop %v1920
        %v2160 = vmul.f32 1.0, %v2159
        %v2161 = vrcp.pop %v1921
        %v2162 = vmul.f32 1.0, %v2161
        %v2163 = vrcp.pop %v1922
        %v2164 = vmul.f32 1.0, %v2163
        %v2165 = vrcp.pop %v1923
        %v2166 = vmul.f32 1.0, %v2165
        %v2167 = vrcp.pop %v1924
        %v2168 = vmul.f32 1.0, %v2167
        %v2169 = vrcp.pop %v1925
        %v2170 = vmul.f32 1.0, %v2169
        %v2171 = vrcp.pop %v1926
        %v2172 = vmul.f32 1.0, %v2171
        %v2173 = vrcp.pop %v1927
        %v2174 = vmul.f32 1.0, %v2173
        %v2175 = vrcp.pop %v1928
        %v2176 = vmul.f32 1.0, %v2175
        %v2177 = vrcp.pop %v1929
        %v2178 = vmul.f32 1.0, %v2177
        %v2179 = vrcp.pop %v1930
        %v2180 = vmul.f32 1.0, %v2179
        %v2181 = vrcp.pop %v1931
        %v2182 = vmul.f32 1.0, %v2181
        %v2183 = vrcp.pop %v1932
        %v2184 = vmul.f32 1.0, %v2183
        %v2185 = vrcp.pop %v1933
        %v2186 = vmul.f32 1.0, %v2185
        %v2187 = vrcp.pop %v1934
        %v2188 = vmul.f32 1.0, %v2187
        %v2189 = vrcp.pop %v1935
        %v2190 = vmul.f32 1.0, %v2189
        %v2191 = vrcp.pop %v1936
        %v2192 = vmul.f32 1.0, %v2191
        %v2193 = vpack.c.bf16 %v1954, %v1938
        %v2194 = vpack.c.bf16 %v1956, %v1940
        %v2195 = vpack.c.bf16 %v1958, %v1942
        %v2196 = vpack.c.bf16 %v1960, %v1944
        %v2197 = vpack.c.bf16 %v1962, %v1946
        %v2198 = vpack.c.bf16 %v1964, %v1948
        %v2199 = vpack.c.bf16 %v1966, %v1950
        %v2200 = vpack.c.bf16 %v1968, %v1952
        %v2201 = vpack.c.bf16 %v1986, %v1970
        %v2202 = vpack.c.bf16 %v1988, %v1972
        %v2203 = vpack.c.bf16 %v1990, %v1974
        %v2204 = vpack.c.bf16 %v1992, %v1976
        %v2205 = vpack.c.bf16 %v1994, %v1978
        %v2206 = vpack.c.bf16 %v1996, %v1980
        %v2207 = vpack.c.bf16 %v1998, %v1982
        %v2208 = vpack.c.bf16 %v2000, %v1984
        %v2209 = vpack.c.bf16 %v2018, %v2002
        %v2210 = vpack.c.bf16 %v2020, %v2004
        %v2211 = vpack.c.bf16 %v2022, %v2006
        %v2212 = vpack.c.bf16 %v2024, %v2008
        %v2213 = vpack.c.bf16 %v2026, %v2010
        %v2214 = vpack.c.bf16 %v2028, %v2012
        %v2215 = vpack.c.bf16 %v2030, %v2014
        %v2216 = vpack.c.bf16 %v2032, %v2016
        %v2217 = vpack.c.bf16 %v2050, %v2034
        %v2218 = vpack.c.bf16 %v2052, %v2036
        %v2219 = vpack.c.bf16 %v2054, %v2038
        %v2220 = vpack.c.bf16 %v2056, %v2040
        %v2221 = vpack.c.bf16 %v2058, %v2042
        %v2222 = vpack.c.bf16 %v2060, %v2044
        %v2223 = vpack.c.bf16 %v2062, %v2046
        %v2224 = vpack.c.bf16 %v2064, %v2048
        %v2225 = vpack.c.bf16 %v2082, %v2066
        %v2226 = vpack.c.bf16 %v2084, %v2068
        %v2227 = vpack.c.bf16 %v2086, %v2070
        %v2228 = vpack.c.bf16 %v2088, %v2072
        %v2229 = vpack.c.bf16 %v2090, %v2074
        %v2230 = vpack.c.bf16 %v2092, %v2076
        %v2231 = vpack.c.bf16 %v2094, %v2078
        %v2232 = vpack.c.bf16 %v2096, %v2080
        %v2233 = vpack.c.bf16 %v2114, %v2098
        %v2234 = vpack.c.bf16 %v2116, %v2100
        %v2235 = vpack.c.bf16 %v2118, %v2102
        %v2236 = vpack.c.bf16 %v2120, %v2104
        %v2237 = vpack.c.bf16 %v2122, %v2106
        %v2238 = vpack.c.bf16 %v2124, %v2108
        %v2239 = vpack.c.bf16 %v2126, %v2110
        %v2240 = vpack.c.bf16 %v2128, %v2112
        %v2241 = vpack.c.bf16 %v2146, %v2130
        %v2242 = vpack.c.bf16 %v2148, %v2132
        %v2243 = vpack.c.bf16 %v2150, %v2134
        %v2244 = vpack.c.bf16 %v2152, %v2136
        %v2245 = vpack.c.bf16 %v2154, %v2138
        %v2246 = vpack.c.bf16 %v2156, %v2140
        %v2247 = vpack.c.bf16 %v2158, %v2142
        %v2248 = vpack.c.bf16 %v2160, %v2144
        %v2249 = vpack.c.bf16 %v2178, %v2162
        %v2250 = vpack.c.bf16 %v2180, %v2164
        %v2251 = vpack.c.bf16 %v2182, %v2166
        %v2252 = vpack.c.bf16 %v2184, %v2168
        %v2253 = vpack.c.bf16 %v2186, %v2170
        %v2254 = vpack.c.bf16 %v2188, %v2172
        %v2255 = vpack.c.bf16 %v2190, %v2174
        %v2256 = vpack.c.bf16 %v2192, %v2176
        %v2257 = vunpack.c.l.bf16 %v2193
        %v2258 = vunpack.c.l.bf16 %v2194
        %v2259 = vunpack.c.h.bf16 %v2193
        %v2260 = vunpack.c.h.bf16 %v2194
        %v2261 = vunpack.c.l.bf16 %v2201
        %v2262 = vunpack.c.l.bf16 %v2202
        %v2263 = vunpack.c.h.bf16 %v2201
        %v2264 = vunpack.c.h.bf16 %v2202
        %v2265 = vsub.f32 1.0, %v2257
        %v2266 = vsub.f32 1.0, %v2258
        %v2267 = vsub.f32 1.0, %v2259
        %v2268 = vsub.f32 1.0, %v2260
        %v2269 = vsub.f32 1.0, %v2261
        %v2270 = vsub.f32 1.0, %v2262
        %v2271 = vsub.f32 1.0, %v2263
        %v2272 = vsub.f32 1.0, %v2264
        %v2273 = vadd.f32 %v2257, 1.0
        %v2274 = vadd.f32 %v2258, 1.0
        %v2275 = vadd.f32 %v2259, 1.0
        %v2276 = vadd.f32 %v2260, 1.0
        %v2277 = vadd.f32 %v2261, 1.0
        %v2278 = vadd.f32 %v2262, 1.0
        %v2279 = vadd.f32 %v2263, 1.0
        %v2280 = vadd.f32 %v2264, 1.0
        %v2281 = vmul.f32 %v2273, %v682
        %v2282 = vmul.f32 %v2274, %v683
        %v2283 = vmul.f32 %v2275, %v684
        %v2284 = vmul.f32 %v2276, %v685
        %v2285 = vmul.f32 %v2277, %v686
        %v2286 = vmul.f32 %v2278, %v687
        %v2287 = vmul.f32 %v2279, %v688
        %v2288 = vmul.f32 %v2280, %v689
        %v2289 = vunpack.c.l.bf16 %v2195
        %v2290 = vunpack.c.l.bf16 %v2196
        %v2291 = vunpack.c.h.bf16 %v2195
        %v2292 = vunpack.c.h.bf16 %v2196
        %v2293 = vunpack.c.l.bf16 %v2203
        %v2294 = vunpack.c.l.bf16 %v2204
        %v2295 = vunpack.c.h.bf16 %v2203
        %v2296 = vunpack.c.h.bf16 %v2204
        %v2297 = vmul.f32 %v2265, %v2289
        %v2298 = vmul.f32 %v2266, %v2290
        %v2299 = vmul.f32 %v2267, %v2291
        %v2300 = vmul.f32 %v2268, %v2292
        %v2301 = vmul.f32 %v2269, %v2293
        %v2302 = vmul.f32 %v2270, %v2294
        %v2303 = vmul.f32 %v2271, %v2295
        %v2304 = vmul.f32 %v2272, %v2296
        %v2305 = vmul.f32 %v2297, %v690
        %v2306 = vmul.f32 %v2298, %v691
        %v2307 = vmul.f32 %v2299, %v692
        %v2308 = vmul.f32 %v2300, %v693
        %v2309 = vmul.f32 %v2301, %v694
        %v2310 = vmul.f32 %v2302, %v695
        %v2311 = vmul.f32 %v2303, %v696
        %v2312 = vmul.f32 %v2304, %v697
        %v2313 = vadd.f32 %v2281, %v2305
        %v2314 = vadd.f32 %v2282, %v2306
        %v2315 = vadd.f32 %v2283, %v2307
        %v2316 = vadd.f32 %v2284, %v2308
        %v2317 = vadd.f32 %v2285, %v2309
        %v2318 = vadd.f32 %v2286, %v2310
        %v2319 = vadd.f32 %v2287, %v2311
        %v2320 = vadd.f32 %v2288, %v2312
        %v2321 = vunpack.c.l.bf16 %v2197
        %v2322 = vunpack.c.l.bf16 %v2198
        %v2323 = vunpack.c.h.bf16 %v2197
        %v2324 = vunpack.c.h.bf16 %v2198
        %v2325 = vunpack.c.l.bf16 %v2205
        %v2326 = vunpack.c.l.bf16 %v2206
        %v2327 = vunpack.c.h.bf16 %v2205
        %v2328 = vunpack.c.h.bf16 %v2206
        %v2329 = vmul.f32 %v2265, %v2321
        %v2330 = vmul.f32 %v2266, %v2322
        %v2331 = vmul.f32 %v2267, %v2323
        %v2332 = vmul.f32 %v2268, %v2324
        %v2333 = vmul.f32 %v2269, %v2325
        %v2334 = vmul.f32 %v2270, %v2326
        %v2335 = vmul.f32 %v2271, %v2327
        %v2336 = vmul.f32 %v2272, %v2328
        %v2337 = vmul.f32 %v2329, %v698
        %v2338 = vmul.f32 %v2330, %v699
        %v2339 = vmul.f32 %v2331, %v700
        %v2340 = vmul.f32 %v2332, %v701
        %v2341 = vmul.f32 %v2333, %v702
        %v2342 = vmul.f32 %v2334, %v703
        %v2343 = vmul.f32 %v2335, %v704
        %v2344 = vmul.f32 %v2336, %v705
        %v2345 = vadd.f32 %v2313, %v2337
        %v2346 = vadd.f32 %v2314, %v2338
        %v2347 = vadd.f32 %v2315, %v2339
        %v2348 = vadd.f32 %v2316, %v2340
        %v2349 = vadd.f32 %v2317, %v2341
        %v2350 = vadd.f32 %v2318, %v2342
        %v2351 = vadd.f32 %v2319, %v2343
        %v2352 = vadd.f32 %v2320, %v2344
        %v2353 = vunpack.c.l.bf16 %v2199
        %v2354 = vunpack.c.l.bf16 %v2200
        %v2355 = vunpack.c.h.bf16 %v2199
        %v2356 = vunpack.c.h.bf16 %v2200
        %v2357 = vunpack.c.l.bf16 %v2207
        %v2358 = vunpack.c.l.bf16 %v2208
        %v2359 = vunpack.c.h.bf16 %v2207
        %v2360 = vunpack.c.h.bf16 %v2208
        %v2361 = vmul.f32 %v2265, %v2353
        %v2362 = vmul.f32 %v2266, %v2354
        %v2363 = vmul.f32 %v2267, %v2355
        %v2364 = vmul.f32 %v2268, %v2356
        %v2365 = vmul.f32 %v2269, %v2357
        %v2366 = vmul.f32 %v2270, %v2358
        %v2367 = vmul.f32 %v2271, %v2359
        %v2368 = vmul.f32 %v2272, %v2360
        %v2369 = vmul.f32 %v2361, %v706
        %v2370 = vmul.f32 %v2362, %v707
        %v2371 = vmul.f32 %v2363, %v708
        %v2372 = vmul.f32 %v2364, %v709
        %v2373 = vmul.f32 %v2365, %v710
        %v2374 = vmul.f32 %v2366, %v711
        %v2375 = vmul.f32 %v2367, %v712
        %v2376 = vmul.f32 %v2368, %v713
        %v2377 = vadd.f32 %v2345, %v2369
        %v2378 = vadd.f32 %v2346, %v2370
        %v2379 = vadd.f32 %v2347, %v2371
        %v2380 = vadd.f32 %v2348, %v2372
        %v2381 = vadd.f32 %v2349, %v2373
        %v2382 = vadd.f32 %v2350, %v2374
        %v2383 = vadd.f32 %v2351, %v2375
        %v2384 = vadd.f32 %v2352, %v2376
        %v2385 = vld [vmem:[%s7] sm:$0xff]
        %v2386 = vld [vmem:[%s7 + $0x8] sm:$0xff]
        %v2387 = vld [vmem:[%s7 + $0x10] sm:$0xff]
        %v2388 = vld [vmem:[%s7 + $0x18] sm:$0xff]
        %v2390 = vlaneseq
        %v2391 = vshrl.u32 %v2390, 7
        %v2392 = vsub.s32 0, %v2391
        %v2393 = vrot.slane %v715, %v2392
        %v2394 = vlaneseq
        %v2395 = vshrl.u32 %v2394, 7
        %v2396 = vsub.s32 2, %v2395
        %v2397 = vrot.slane %v715, %v2396
        %v2400 = vlaneseq
        %v2401 = vshrl.u32 %v2400, 7
        %v2402 = vsub.s32 0, %v2401
        %v2403 = vrot.slane %v2393, %v2402
        %v2404 = vlaneseq
        %v2405 = vshrl.u32 %v2404, 7
        %v2406 = vsub.s32 0, %v2405
        %v2407 = vrot.slane %v2397, %v2406
        %2409 = vset.pattern.permute.xlu0 0
        %2410 = vperm.xlu0 %2409, %v2385
        %v2411 = vpop.permute.xlu0 %2410
        %2414 = vset.pattern.permute.xlu0 0
        %2415 = vperm.xlu0 %2414, %v2386
        %v2416 = vpop.permute.xlu0 %2415
        %2419 = vset.pattern.permute.xlu0 0
        %2420 = vperm.xlu0 %2419, %v2387
        %v2421 = vpop.permute.xlu0 %2420
        %2424 = vset.pattern.permute.xlu0 0
        %2425 = vperm.xlu0 %2424, %v2388
        %v2426 = vpop.permute.xlu0 %2425
        %v2428 = vmul.f32 %v2403, %v2411
        %v2429 = vmul.f32 %v2407, %v2411
        %v2430 = vmul.f32 %v2403, %v2416
        %v2431 = vmul.f32 %v2407, %v2416
        %v2432 = vmul.f32 %v2403, %v2421
        %v2433 = vmul.f32 %v2407, %v2421
        %v2434 = vmul.f32 %v2403, %v2426
        %v2435 = vmul.f32 %v2407, %v2426
        %v2436 = vld [vmem:[%s8] sm:$0xff]
        %v2437 = vld [vmem:[%s8 + $0x8] sm:$0xff]
        %v2438 = vld [vmem:[%s8 + $0x10] sm:$0xff]
        %v2439 = vld [vmem:[%s8 + $0x18] sm:$0xff]
        %2441 = vset.pattern.permute.xlu0 0
        %2442 = vperm.xlu0 %2441, %v2436
        %v2443 = vpop.permute.xlu0 %2442
        %2446 = vset.pattern.permute.xlu0 0
        %2447 = vperm.xlu0 %2446, %v2437
        %v2448 = vpop.permute.xlu0 %2447
        %2451 = vset.pattern.permute.xlu0 0
        %2452 = vperm.xlu0 %2451, %v2438
        %v2453 = vpop.permute.xlu0 %2452
        %2456 = vset.pattern.permute.xlu0 0
        %2457 = vperm.xlu0 %2456, %v2439
        %v2458 = vpop.permute.xlu0 %2457
        %v2460 = vadd.f32 %v2428, %v2443
        %v2461 = vadd.f32 %v2429, %v2443
        %v2462 = vadd.f32 %v2430, %v2448
        %v2463 = vadd.f32 %v2431, %v2448
        %v2464 = vadd.f32 %v2432, %v2453
        %v2465 = vadd.f32 %v2433, %v2453
        %v2466 = vadd.f32 %v2434, %v2458
        %v2467 = vadd.f32 %v2435, %v2458
        %v2468 = vxor.u32 %v2460, 2147483648
        %v2469 = vxor.u32 %v2461, 2147483648
        %v2470 = vxor.u32 %v2462, 2147483648
        %v2471 = vxor.u32 %v2463, 2147483648
        %v2472 = vxor.u32 %v2464, 2147483648
        %v2473 = vxor.u32 %v2465, 2147483648
        %v2474 = vxor.u32 %v2466, 2147483648
        %v2475 = vxor.u32 %v2467, 2147483648
        %v2476 = vmul.f32 %v2468, 1.442695
        %v2477 = vpow.pop %v2476
        %v2478 = vmul.f32 %v2469, 1.442695
        %v2479 = vpow.pop %v2478
        %v2480 = vmul.f32 %v2470, 1.442695
        %v2481 = vpow.pop %v2480
        %v2482 = vmul.f32 %v2471, 1.442695
        %v2483 = vpow.pop %v2482
        %v2484 = vmul.f32 %v2472, 1.442695
        %v2485 = vpow.pop %v2484
        %v2486 = vmul.f32 %v2473, 1.442695
        %v2487 = vpow.pop %v2486
        %v2488 = vmul.f32 %v2474, 1.442695
        %v2489 = vpow.pop %v2488
        %v2490 = vmul.f32 %v2475, 1.442695
        %v2491 = vpow.pop %v2490
        %v2492 = vadd.f32 %v2477, 1.0
        %v2493 = vadd.f32 %v2479, 1.0
        %v2494 = vadd.f32 %v2481, 1.0
        %v2495 = vadd.f32 %v2483, 1.0
        %v2496 = vadd.f32 %v2485, 1.0
        %v2497 = vadd.f32 %v2487, 1.0
        %v2498 = vadd.f32 %v2489, 1.0
        %v2499 = vadd.f32 %v2491, 1.0
        %v2500 = vrcp.pop %v2492
        %v2501 = vmul.f32 1.0, %v2500
        %v2502 = vrcp.pop %v2493
        %v2503 = vmul.f32 1.0, %v2502
        %v2504 = vrcp.pop %v2494
        %v2505 = vmul.f32 1.0, %v2504
        %v2506 = vrcp.pop %v2495
        %v2507 = vmul.f32 1.0, %v2506
        %v2508 = vrcp.pop %v2496
        %v2509 = vmul.f32 1.0, %v2508
        %v2510 = vrcp.pop %v2497
        %v2511 = vmul.f32 1.0, %v2510
        %v2512 = vrcp.pop %v2498
        %v2513 = vmul.f32 1.0, %v2512
        %v2514 = vrcp.pop %v2499
        %v2515 = vmul.f32 1.0, %v2514
        %v2516 = vmul.f32 %v2377, %v2501
        %v2517 = vmul.f32 %v2378, %v2503
        %v2518 = vmul.f32 %v2379, %v2505
        %v2519 = vmul.f32 %v2380, %v2507
        %v2520 = vmul.f32 %v2381, %v2509
        %v2521 = vmul.f32 %v2382, %v2511
        %v2522 = vmul.f32 %v2383, %v2513
        %v2523 = vmul.f32 %v2384, %v2515
        %v2524 = vadd.f32 %v2516, %v2377
        %v2525 = vadd.f32 %v2517, %v2378
        %v2526 = vadd.f32 %v2518, %v2379
        %v2527 = vadd.f32 %v2519, %v2380
        %v2528 = vadd.f32 %v2520, %v2381
        %v2529 = vadd.f32 %v2521, %v2382
        %v2530 = vadd.f32 %v2522, %v2383
        %v2531 = vadd.f32 %v2523, %v2384
        %v2532 = vunpack.c.l.bf16 %v2211
        %v2533 = vunpack.c.l.bf16 %v2212
        %v2534 = vunpack.c.h.bf16 %v2211
        %v2535 = vunpack.c.h.bf16 %v2212
        %v2536 = vunpack.c.l.bf16 %v2219
        %v2537 = vunpack.c.l.bf16 %v2220
        %v2538 = vunpack.c.h.bf16 %v2219
        %v2539 = vunpack.c.h.bf16 %v2220
        %v2540 = vsub.f32 1.0, %v2532
        %v2541 = vsub.f32 1.0, %v2533
        %v2542 = vsub.f32 1.0, %v2534
        %v2543 = vsub.f32 1.0, %v2535
        %v2544 = vsub.f32 1.0, %v2536
        %v2545 = vsub.f32 1.0, %v2537
        %v2546 = vsub.f32 1.0, %v2538
        %v2547 = vsub.f32 1.0, %v2539
        %v2548 = vadd.f32 %v2532, 1.0
        %v2549 = vadd.f32 %v2533, 1.0
        %v2550 = vadd.f32 %v2534, 1.0
        %v2551 = vadd.f32 %v2535, 1.0
        %v2552 = vadd.f32 %v2536, 1.0
        %v2553 = vadd.f32 %v2537, 1.0
        %v2554 = vadd.f32 %v2538, 1.0
        %v2555 = vadd.f32 %v2539, 1.0
        %v2556 = vmul.f32 %v2548, %v690
        %v2557 = vmul.f32 %v2549, %v691
        %v2558 = vmul.f32 %v2550, %v692
        %v2559 = vmul.f32 %v2551, %v693
        %v2560 = vmul.f32 %v2552, %v694
        %v2561 = vmul.f32 %v2553, %v695
        %v2562 = vmul.f32 %v2554, %v696
        %v2563 = vmul.f32 %v2555, %v697
        %v2564 = vunpack.c.l.bf16 %v2209
        %v2565 = vunpack.c.l.bf16 %v2210
        %v2566 = vunpack.c.h.bf16 %v2209
        %v2567 = vunpack.c.h.bf16 %v2210
        %v2568 = vunpack.c.l.bf16 %v2217
        %v2569 = vunpack.c.l.bf16 %v2218
        %v2570 = vunpack.c.h.bf16 %v2217
        %v2571 = vunpack.c.h.bf16 %v2218
        %v2572 = vmul.f32 %v2540, %v2564
        %v2573 = vmul.f32 %v2541, %v2565
        %v2574 = vmul.f32 %v2542, %v2566
        %v2575 = vmul.f32 %v2543, %v2567
        %v2576 = vmul.f32 %v2544, %v2568
        %v2577 = vmul.f32 %v2545, %v2569
        %v2578 = vmul.f32 %v2546, %v2570
        %v2579 = vmul.f32 %v2547, %v2571
        %v2580 = vmul.f32 %v2572, %v682
        %v2581 = vmul.f32 %v2573, %v683
        %v2582 = vmul.f32 %v2574, %v684
        %v2583 = vmul.f32 %v2575, %v685
        %v2584 = vmul.f32 %v2576, %v686
        %v2585 = vmul.f32 %v2577, %v687
        %v2586 = vmul.f32 %v2578, %v688
        %v2587 = vmul.f32 %v2579, %v689
        %v2588 = vadd.f32 %v2556, %v2580
        %v2589 = vadd.f32 %v2557, %v2581
        %v2590 = vadd.f32 %v2558, %v2582
        %v2591 = vadd.f32 %v2559, %v2583
        %v2592 = vadd.f32 %v2560, %v2584
        %v2593 = vadd.f32 %v2561, %v2585
        %v2594 = vadd.f32 %v2562, %v2586
        %v2595 = vadd.f32 %v2563, %v2587
        %v2596 = vunpack.c.l.bf16 %v2213
        %v2597 = vunpack.c.l.bf16 %v2214
        %v2598 = vunpack.c.h.bf16 %v2213
        %v2599 = vunpack.c.h.bf16 %v2214
        %v2600 = vunpack.c.l.bf16 %v2221
        %v2601 = vunpack.c.l.bf16 %v2222
        %v2602 = vunpack.c.h.bf16 %v2221
        %v2603 = vunpack.c.h.bf16 %v2222
        %v2604 = vmul.f32 %v2540, %v2596
        %v2605 = vmul.f32 %v2541, %v2597
        %v2606 = vmul.f32 %v2542, %v2598
        %v2607 = vmul.f32 %v2543, %v2599
        %v2608 = vmul.f32 %v2544, %v2600
        %v2609 = vmul.f32 %v2545, %v2601
        %v2610 = vmul.f32 %v2546, %v2602
        %v2611 = vmul.f32 %v2547, %v2603
        %v2612 = vmul.f32 %v2604, %v698
        %v2613 = vmul.f32 %v2605, %v699
        %v2614 = vmul.f32 %v2606, %v700
        %v2615 = vmul.f32 %v2607, %v701
        %v2616 = vmul.f32 %v2608, %v702
        %v2617 = vmul.f32 %v2609, %v703
        %v2618 = vmul.f32 %v2610, %v704
        %v2619 = vmul.f32 %v2611, %v705
        %v2620 = vadd.f32 %v2588, %v2612
        %v2621 = vadd.f32 %v2589, %v2613
        %v2622 = vadd.f32 %v2590, %v2614
        %v2623 = vadd.f32 %v2591, %v2615
        %v2624 = vadd.f32 %v2592, %v2616
        %v2625 = vadd.f32 %v2593, %v2617
        %v2626 = vadd.f32 %v2594, %v2618
        %v2627 = vadd.f32 %v2595, %v2619
        %v2628 = vunpack.c.l.bf16 %v2215
        %v2629 = vunpack.c.l.bf16 %v2216
        %v2630 = vunpack.c.h.bf16 %v2215
        %v2631 = vunpack.c.h.bf16 %v2216
        %v2632 = vunpack.c.l.bf16 %v2223
        %v2633 = vunpack.c.l.bf16 %v2224
        %v2634 = vunpack.c.h.bf16 %v2223
        %v2635 = vunpack.c.h.bf16 %v2224
        %v2636 = vmul.f32 %v2540, %v2628
        %v2637 = vmul.f32 %v2541, %v2629
        %v2638 = vmul.f32 %v2542, %v2630
        %v2639 = vmul.f32 %v2543, %v2631
        %v2640 = vmul.f32 %v2544, %v2632
        %v2641 = vmul.f32 %v2545, %v2633
        %v2642 = vmul.f32 %v2546, %v2634
        %v2643 = vmul.f32 %v2547, %v2635
        %v2644 = vmul.f32 %v2636, %v706
        %v2645 = vmul.f32 %v2637, %v707
        %v2646 = vmul.f32 %v2638, %v708
        %v2647 = vmul.f32 %v2639, %v709
        %v2648 = vmul.f32 %v2640, %v710
        %v2649 = vmul.f32 %v2641, %v711
        %v2650 = vmul.f32 %v2642, %v712
        %v2651 = vmul.f32 %v2643, %v713
        %v2652 = vadd.f32 %v2620, %v2644
        %v2653 = vadd.f32 %v2621, %v2645
        %v2654 = vadd.f32 %v2622, %v2646
        %v2655 = vadd.f32 %v2623, %v2647
        %v2656 = vadd.f32 %v2624, %v2648
        %v2657 = vadd.f32 %v2625, %v2649
        %v2658 = vadd.f32 %v2626, %v2650
        %v2659 = vadd.f32 %v2627, %v2651
        %s2660 = scalar_lea.vmem %s7, 32
        %v2661 = vld [vmem:[%s2660] sm:$0xff]
        %v2662 = vld [vmem:[%s2660 + $0x8] sm:$0xff]
        %v2663 = vld [vmem:[%s2660 + $0x10] sm:$0xff]
        %v2664 = vld [vmem:[%s2660 + $0x18] sm:$0xff]
        %2666 = vset.pattern.permute.xlu0 0
        %2667 = vperm.xlu0 %2666, %v2661
        %v2668 = vpop.permute.xlu0 %2667
        %2671 = vset.pattern.permute.xlu0 0
        %2672 = vperm.xlu0 %2671, %v2662
        %v2673 = vpop.permute.xlu0 %2672
        %2676 = vset.pattern.permute.xlu0 0
        %2677 = vperm.xlu0 %2676, %v2663
        %v2678 = vpop.permute.xlu0 %2677
        %2681 = vset.pattern.permute.xlu0 0
        %2682 = vperm.xlu0 %2681, %v2664
        %v2683 = vpop.permute.xlu0 %2682
        %v2685 = vmul.f32 %v2403, %v2668
        %v2686 = vmul.f32 %v2407, %v2668
        %v2687 = vmul.f32 %v2403, %v2673
        %v2688 = vmul.f32 %v2407, %v2673
        %v2689 = vmul.f32 %v2403, %v2678
        %v2690 = vmul.f32 %v2407, %v2678
        %v2691 = vmul.f32 %v2403, %v2683
        %v2692 = vmul.f32 %v2407, %v2683
        %s2693 = scalar_lea.vmem %s8, 32
        %v2694 = vld [vmem:[%s2693] sm:$0xff]
        %v2695 = vld [vmem:[%s2693 + $0x8] sm:$0xff]
        %v2696 = vld [vmem:[%s2693 + $0x10] sm:$0xff]
        %v2697 = vld [vmem:[%s2693 + $0x18] sm:$0xff]
        %2699 = vset.pattern.permute.xlu0 0
        %2700 = vperm.xlu0 %2699, %v2694
        %v2701 = vpop.permute.xlu0 %2700
        %2704 = vset.pattern.permute.xlu0 0
        %2705 = vperm.xlu0 %2704, %v2695
        %v2706 = vpop.permute.xlu0 %2705
        %2709 = vset.pattern.permute.xlu0 0
        %2710 = vperm.xlu0 %2709, %v2696
        %v2711 = vpop.permute.xlu0 %2710
        %2714 = vset.pattern.permute.xlu0 0
        %2715 = vperm.xlu0 %2714, %v2697
        %v2716 = vpop.permute.xlu0 %2715
        %v2718 = vadd.f32 %v2685, %v2701
        %v2719 = vadd.f32 %v2686, %v2701
        %v2720 = vadd.f32 %v2687, %v2706
        %v2721 = vadd.f32 %v2688, %v2706
        %v2722 = vadd.f32 %v2689, %v2711
        %v2723 = vadd.f32 %v2690, %v2711
        %v2724 = vadd.f32 %v2691, %v2716
        %v2725 = vadd.f32 %v2692, %v2716
        %v2726 = vxor.u32 %v2718, 2147483648
        %v2727 = vxor.u32 %v2719, 2147483648
        %v2728 = vxor.u32 %v2720, 2147483648
        %v2729 = vxor.u32 %v2721, 2147483648
        %v2730 = vxor.u32 %v2722, 2147483648
        %v2731 = vxor.u32 %v2723, 2147483648
        %v2732 = vxor.u32 %v2724, 2147483648
        %v2733 = vxor.u32 %v2725, 2147483648
        %v2734 = vmul.f32 %v2726, 1.442695
        %v2735 = vpow.pop %v2734
        %v2736 = vmul.f32 %v2727, 1.442695
        %v2737 = vpow.pop %v2736
        %v2738 = vmul.f32 %v2728, 1.442695
        %v2739 = vpow.pop %v2738
        %v2740 = vmul.f32 %v2729, 1.442695
        %v2741 = vpow.pop %v2740
        %v2742 = vmul.f32 %v2730, 1.442695
        %v2743 = vpow.pop %v2742
        %v2744 = vmul.f32 %v2731, 1.442695
        %v2745 = vpow.pop %v2744
        %v2746 = vmul.f32 %v2732, 1.442695
        %v2747 = vpow.pop %v2746
        %v2748 = vmul.f32 %v2733, 1.442695
        %v2749 = vpow.pop %v2748
        %v2750 = vadd.f32 %v2735, 1.0
        %v2751 = vadd.f32 %v2737, 1.0
        %v2752 = vadd.f32 %v2739, 1.0
        %v2753 = vadd.f32 %v2741, 1.0
        %v2754 = vadd.f32 %v2743, 1.0
        %v2755 = vadd.f32 %v2745, 1.0
        %v2756 = vadd.f32 %v2747, 1.0
        %v2757 = vadd.f32 %v2749, 1.0
        %v2758 = vrcp.pop %v2750
        %v2759 = vmul.f32 1.0, %v2758
        %v2760 = vrcp.pop %v2751
        %v2761 = vmul.f32 1.0, %v2760
        %v2762 = vrcp.pop %v2752
        %v2763 = vmul.f32 1.0, %v2762
        %v2764 = vrcp.pop %v2753
        %v2765 = vmul.f32 1.0, %v2764
        %v2766 = vrcp.pop %v2754
        %v2767 = vmul.f32 1.0, %v2766
        %v2768 = vrcp.pop %v2755
        %v2769 = vmul.f32 1.0, %v2768
        %v2770 = vrcp.pop %v2756
        %v2771 = vmul.f32 1.0, %v2770
        %v2772 = vrcp.pop %v2757
        %v2773 = vmul.f32 1.0, %v2772
        %v2774 = vmul.f32 %v2652, %v2759
        %v2775 = vmul.f32 %v2653, %v2761
        %v2776 = vmul.f32 %v2654, %v2763
        %v2777 = vmul.f32 %v2655, %v2765
        %v2778 = vmul.f32 %v2656, %v2767
        %v2779 = vmul.f32 %v2657, %v2769
        %v2780 = vmul.f32 %v2658, %v2771
        %v2781 = vmul.f32 %v2659, %v2773
        %v2782 = vadd.f32 %v2774, %v2652
        %v2783 = vadd.f32 %v2775, %v2653
        %v2784 = vadd.f32 %v2776, %v2654
        %v2785 = vadd.f32 %v2777, %v2655
        %v2786 = vadd.f32 %v2778, %v2656
        %v2787 = vadd.f32 %v2779, %v2657
        %v2788 = vadd.f32 %v2780, %v2658
        %v2789 = vadd.f32 %v2781, %v2659
        %v2790 = vunpack.c.l.bf16 %v2229
        %v2791 = vunpack.c.l.bf16 %v2230
        %v2792 = vunpack.c.h.bf16 %v2229
        %v2793 = vunpack.c.h.bf16 %v2230
        %v2794 = vunpack.c.l.bf16 %v2237
        %v2795 = vunpack.c.l.bf16 %v2238
        %v2796 = vunpack.c.h.bf16 %v2237
        %v2797 = vunpack.c.h.bf16 %v2238
        %v2798 = vsub.f32 1.0, %v2790
        %v2799 = vsub.f32 1.0, %v2791
        %v2800 = vsub.f32 1.0, %v2792
        %v2801 = vsub.f32 1.0, %v2793
        %v2802 = vsub.f32 1.0, %v2794
        %v2803 = vsub.f32 1.0, %v2795
        %v2804 = vsub.f32 1.0, %v2796
        %v2805 = vsub.f32 1.0, %v2797
        %v2806 = vadd.f32 %v2790, 1.0
        %v2807 = vadd.f32 %v2791, 1.0
        %v2808 = vadd.f32 %v2792, 1.0
        %v2809 = vadd.f32 %v2793, 1.0
        %v2810 = vadd.f32 %v2794, 1.0
        %v2811 = vadd.f32 %v2795, 1.0
        %v2812 = vadd.f32 %v2796, 1.0
        %v2813 = vadd.f32 %v2797, 1.0
        %v2814 = vmul.f32 %v2806, %v698
        %v2815 = vmul.f32 %v2807, %v699
        %v2816 = vmul.f32 %v2808, %v700
        %v2817 = vmul.f32 %v2809, %v701
        %v2818 = vmul.f32 %v2810, %v702
        %v2819 = vmul.f32 %v2811, %v703
        %v2820 = vmul.f32 %v2812, %v704
        %v2821 = vmul.f32 %v2813, %v705
        %v2822 = vunpack.c.l.bf16 %v2225
        %v2823 = vunpack.c.l.bf16 %v2226
        %v2824 = vunpack.c.h.bf16 %v2225
        %v2825 = vunpack.c.h.bf16 %v2226
        %v2826 = vunpack.c.l.bf16 %v2233
        %v2827 = vunpack.c.l.bf16 %v2234
        %v2828 = vunpack.c.h.bf16 %v2233
        %v2829 = vunpack.c.h.bf16 %v2234
        %v2830 = vmul.f32 %v2798, %v2822
        %v2831 = vmul.f32 %v2799, %v2823
        %v2832 = vmul.f32 %v2800, %v2824
        %v2833 = vmul.f32 %v2801, %v2825
        %v2834 = vmul.f32 %v2802, %v2826
        %v2835 = vmul.f32 %v2803, %v2827
        %v2836 = vmul.f32 %v2804, %v2828
        %v2837 = vmul.f32 %v2805, %v2829
        %v2838 = vmul.f32 %v2830, %v682
        %v2839 = vmul.f32 %v2831, %v683
        %v2840 = vmul.f32 %v2832, %v684
        %v2841 = vmul.f32 %v2833, %v685
        %v2842 = vmul.f32 %v2834, %v686
        %v2843 = vmul.f32 %v2835, %v687
        %v2844 = vmul.f32 %v2836, %v688
        %v2845 = vmul.f32 %v2837, %v689
        %v2846 = vadd.f32 %v2814, %v2838
        %v2847 = vadd.f32 %v2815, %v2839
        %v2848 = vadd.f32 %v2816, %v2840
        %v2849 = vadd.f32 %v2817, %v2841
        %v2850 = vadd.f32 %v2818, %v2842
        %v2851 = vadd.f32 %v2819, %v2843
        %v2852 = vadd.f32 %v2820, %v2844
        %v2853 = vadd.f32 %v2821, %v2845
        %v2854 = vunpack.c.l.bf16 %v2227
        %v2855 = vunpack.c.l.bf16 %v2228
        %v2856 = vunpack.c.h.bf16 %v2227
        %v2857 = vunpack.c.h.bf16 %v2228
        %v2858 = vunpack.c.l.bf16 %v2235
        %v2859 = vunpack.c.l.bf16 %v2236
        %v2860 = vunpack.c.h.bf16 %v2235
        %v2861 = vunpack.c.h.bf16 %v2236
        %v2862 = vmul.f32 %v2798, %v2854
        %v2863 = vmul.f32 %v2799, %v2855
        %v2864 = vmul.f32 %v2800, %v2856
        %v2865 = vmul.f32 %v2801, %v2857
        %v2866 = vmul.f32 %v2802, %v2858
        %v2867 = vmul.f32 %v2803, %v2859
        %v2868 = vmul.f32 %v2804, %v2860
        %v2869 = vmul.f32 %v2805, %v2861
        %v2870 = vmul.f32 %v2862, %v690
        %v2871 = vmul.f32 %v2863, %v691
        %v2872 = vmul.f32 %v2864, %v692
        %v2873 = vmul.f32 %v2865, %v693
        %v2874 = vmul.f32 %v2866, %v694
        %v2875 = vmul.f32 %v2867, %v695
        %v2876 = vmul.f32 %v2868, %v696
        %v2877 = vmul.f32 %v2869, %v697
        %v2878 = vadd.f32 %v2846, %v2870
        %v2879 = vadd.f32 %v2847, %v2871
        %v2880 = vadd.f32 %v2848, %v2872
        %v2881 = vadd.f32 %v2849, %v2873
        %v2882 = vadd.f32 %v2850, %v2874
        %v2883 = vadd.f32 %v2851, %v2875
        %v2884 = vadd.f32 %v2852, %v2876
        %v2885 = vadd.f32 %v2853, %v2877
        %v2886 = vunpack.c.l.bf16 %v2231
        %v2887 = vunpack.c.l.bf16 %v2232
        %v2888 = vunpack.c.h.bf16 %v2231
        %v2889 = vunpack.c.h.bf16 %v2232
        %v2890 = vunpack.c.l.bf16 %v2239
        %v2891 = vunpack.c.l.bf16 %v2240
        %v2892 = vunpack.c.h.bf16 %v2239
        %v2893 = vunpack.c.h.bf16 %v2240
        %v2894 = vmul.f32 %v2798, %v2886
        %v2895 = vmul.f32 %v2799, %v2887
        %v2896 = vmul.f32 %v2800, %v2888
        %v2897 = vmul.f32 %v2801, %v2889
        %v2898 = vmul.f32 %v2802, %v2890
        %v2899 = vmul.f32 %v2803, %v2891
        %v2900 = vmul.f32 %v2804, %v2892
        %v2901 = vmul.f32 %v2805, %v2893
        %v2902 = vmul.f32 %v2894, %v706
        %v2903 = vmul.f32 %v2895, %v707
        %v2904 = vmul.f32 %v2896, %v708
        %v2905 = vmul.f32 %v2897, %v709
        %v2906 = vmul.f32 %v2898, %v710
        %v2907 = vmul.f32 %v2899, %v711
        %v2908 = vmul.f32 %v2900, %v712
        %v2909 = vmul.f32 %v2901, %v713
        %v2910 = vadd.f32 %v2878, %v2902
        %v2911 = vadd.f32 %v2879, %v2903
        %v2912 = vadd.f32 %v2880, %v2904
        %v2913 = vadd.f32 %v2881, %v2905
        %v2914 = vadd.f32 %v2882, %v2906
        %v2915 = vadd.f32 %v2883, %v2907
        %v2916 = vadd.f32 %v2884, %v2908
        %v2917 = vadd.f32 %v2885, %v2909
        %s2918 = scalar_lea.vmem %s7, 64
        %v2919 = vld [vmem:[%s2918] sm:$0xff]
        %v2920 = vld [vmem:[%s2918 + $0x8] sm:$0xff]
        %v2921 = vld [vmem:[%s2918 + $0x10] sm:$0xff]
        %v2922 = vld [vmem:[%s2918 + $0x18] sm:$0xff]
        %2924 = vset.pattern.permute.xlu0 0
        %2925 = vperm.xlu0 %2924, %v2919
        %v2926 = vpop.permute.xlu0 %2925
        %2929 = vset.pattern.permute.xlu0 0
        %2930 = vperm.xlu0 %2929, %v2920
        %v2931 = vpop.permute.xlu0 %2930
        %2934 = vset.pattern.permute.xlu0 0
        %2935 = vperm.xlu0 %2934, %v2921
        %v2936 = vpop.permute.xlu0 %2935
        %2939 = vset.pattern.permute.xlu0 0
        %2940 = vperm.xlu0 %2939, %v2922
        %v2941 = vpop.permute.xlu0 %2940
        %v2943 = vmul.f32 %v2403, %v2926
        %v2944 = vmul.f32 %v2407, %v2926
        %v2945 = vmul.f32 %v2403, %v2931
        %v2946 = vmul.f32 %v2407, %v2931
        %v2947 = vmul.f32 %v2403, %v2936
        %v2948 = vmul.f32 %v2407, %v2936
        %v2949 = vmul.f32 %v2403, %v2941
        %v2950 = vmul.f32 %v2407, %v2941
        %s2951 = scalar_lea.vmem %s8, 64
        %v2952 = vld [vmem:[%s2951] sm:$0xff]
        %v2953 = vld [vmem:[%s2951 + $0x8] sm:$0xff]
        %v2954 = vld [vmem:[%s2951 + $0x10] sm:$0xff]
        %v2955 = vld [vmem:[%s2951 + $0x18] sm:$0xff]
        %2957 = vset.pattern.permute.xlu0 0
        %2958 = vperm.xlu0 %2957, %v2952
        %v2959 = vpop.permute.xlu0 %2958
        %2962 = vset.pattern.permute.xlu0 0
        %2963 = vperm.xlu0 %2962, %v2953
        %v2964 = vpop.permute.xlu0 %2963
        %2967 = vset.pattern.permute.xlu0 0
        %2968 = vperm.xlu0 %2967, %v2954
        %v2969 = vpop.permute.xlu0 %2968
        %2972 = vset.pattern.permute.xlu0 0
        %2973 = vperm.xlu0 %2972, %v2955
        %v2974 = vpop.permute.xlu0 %2973
        %v2976 = vadd.f32 %v2943, %v2959
        %v2977 = vadd.f32 %v2944, %v2959
        %v2978 = vadd.f32 %v2945, %v2964
        %v2979 = vadd.f32 %v2946, %v2964
        %v2980 = vadd.f32 %v2947, %v2969
        %v2981 = vadd.f32 %v2948, %v2969
        %v2982 = vadd.f32 %v2949, %v2974
        %v2983 = vadd.f32 %v2950, %v2974
        %v2984 = vxor.u32 %v2976, 2147483648
        %v2985 = vxor.u32 %v2977, 2147483648
        %v2986 = vxor.u32 %v2978, 2147483648
        %v2987 = vxor.u32 %v2979, 2147483648
        %v2988 = vxor.u32 %v2980, 2147483648
        %v2989 = vxor.u32 %v2981, 2147483648
        %v2990 = vxor.u32 %v2982, 2147483648
        %v2991 = vxor.u32 %v2983, 2147483648
        %v2992 = vmul.f32 %v2984, 1.442695
        %v2993 = vpow.pop %v2992
        %v2994 = vmul.f32 %v2985, 1.442695
        %v2995 = vpow.pop %v2994
        %v2996 = vmul.f32 %v2986, 1.442695
        %v2997 = vpow.pop %v2996
        %v2998 = vmul.f32 %v2987, 1.442695
        %v2999 = vpow.pop %v2998
        %v3000 = vmul.f32 %v2988, 1.442695
        %v3001 = vpow.pop %v3000
        %v3002 = vmul.f32 %v2989, 1.442695
        %v3003 = vpow.pop %v3002
        %v3004 = vmul.f32 %v2990, 1.442695
        %v3005 = vpow.pop %v3004
        %v3006 = vmul.f32 %v2991, 1.442695
        %v3007 = vpow.pop %v3006
        %v3008 = vadd.f32 %v2993, 1.0
        %v3009 = vadd.f32 %v2995, 1.0
        %v3010 = vadd.f32 %v2997, 1.0
        %v3011 = vadd.f32 %v2999, 1.0
        %v3012 = vadd.f32 %v3001, 1.0
        %v3013 = vadd.f32 %v3003, 1.0
        %v3014 = vadd.f32 %v3005, 1.0
        %v3015 = vadd.f32 %v3007, 1.0
        %v3016 = vrcp.pop %v3008
        %v3017 = vmul.f32 1.0, %v3016
        %v3018 = vrcp.pop %v3009
        %v3019 = vmul.f32 1.0, %v3018
        %v3020 = vrcp.pop %v3010
        %v3021 = vmul.f32 1.0, %v3020
        %v3022 = vrcp.pop %v3011
        %v3023 = vmul.f32 1.0, %v3022
        %v3024 = vrcp.pop %v3012
        %v3025 = vmul.f32 1.0, %v3024
        %v3026 = vrcp.pop %v3013
        %v3027 = vmul.f32 1.0, %v3026
        %v3028 = vrcp.pop %v3014
        %v3029 = vmul.f32 1.0, %v3028
        %v3030 = vrcp.pop %v3015
        %v3031 = vmul.f32 1.0, %v3030
        %v3032 = vmul.f32 %v2910, %v3017
        %v3033 = vmul.f32 %v2911, %v3019
        %v3034 = vmul.f32 %v2912, %v3021
        %v3035 = vmul.f32 %v2913, %v3023
        %v3036 = vmul.f32 %v2914, %v3025
        %v3037 = vmul.f32 %v2915, %v3027
        %v3038 = vmul.f32 %v2916, %v3029
        %v3039 = vmul.f32 %v2917, %v3031
        %v3040 = vadd.f32 %v3032, %v2910
        %v3041 = vadd.f32 %v3033, %v2911
        %v3042 = vadd.f32 %v3034, %v2912
        %v3043 = vadd.f32 %v3035, %v2913
        %v3044 = vadd.f32 %v3036, %v2914
        %v3045 = vadd.f32 %v3037, %v2915
        %v3046 = vadd.f32 %v3038, %v2916
        %v3047 = vadd.f32 %v3039, %v2917
        %v3048 = vunpack.c.l.bf16 %v2247
        %v3049 = vunpack.c.l.bf16 %v2248
        %v3050 = vunpack.c.h.bf16 %v2247
        %v3051 = vunpack.c.h.bf16 %v2248
        %v3052 = vunpack.c.l.bf16 %v2255
        %v3053 = vunpack.c.l.bf16 %v2256
        %v3054 = vunpack.c.h.bf16 %v2255
        %v3055 = vunpack.c.h.bf16 %v2256
        %v3056 = vsub.f32 1.0, %v3048
        %v3057 = vsub.f32 1.0, %v3049
        %v3058 = vsub.f32 1.0, %v3050
        %v3059 = vsub.f32 1.0, %v3051
        %v3060 = vsub.f32 1.0, %v3052
        %v3061 = vsub.f32 1.0, %v3053
        %v3062 = vsub.f32 1.0, %v3054
        %v3063 = vsub.f32 1.0, %v3055
        %v3064 = vadd.f32 %v3048, 1.0
        %v3065 = vadd.f32 %v3049, 1.0
        %v3066 = vadd.f32 %v3050, 1.0
        %v3067 = vadd.f32 %v3051, 1.0
        %v3068 = vadd.f32 %v3052, 1.0
        %v3069 = vadd.f32 %v3053, 1.0
        %v3070 = vadd.f32 %v3054, 1.0
        %v3071 = vadd.f32 %v3055, 1.0
        %v3072 = vmul.f32 %v3064, %v706
        %v3073 = vmul.f32 %v3065, %v707
        %v3074 = vmul.f32 %v3066, %v708
        %v3075 = vmul.f32 %v3067, %v709
        %v3076 = vmul.f32 %v3068, %v710
        %v3077 = vmul.f32 %v3069, %v711
        %v3078 = vmul.f32 %v3070, %v712
        %v3079 = vmul.f32 %v3071, %v713
        %v3080 = vunpack.c.l.bf16 %v2241
        %v3081 = vunpack.c.l.bf16 %v2242
        %v3082 = vunpack.c.h.bf16 %v2241
        %v3083 = vunpack.c.h.bf16 %v2242
        %v3084 = vunpack.c.l.bf16 %v2249
        %v3085 = vunpack.c.l.bf16 %v2250
        %v3086 = vunpack.c.h.bf16 %v2249
        %v3087 = vunpack.c.h.bf16 %v2250
        %v3088 = vmul.f32 %v3056, %v3080
        %v3089 = vmul.f32 %v3057, %v3081
        %v3090 = vmul.f32 %v3058, %v3082
        %v3091 = vmul.f32 %v3059, %v3083
        %v3092 = vmul.f32 %v3060, %v3084
        %v3093 = vmul.f32 %v3061, %v3085
        %v3094 = vmul.f32 %v3062, %v3086
        %v3095 = vmul.f32 %v3063, %v3087
        %v3096 = vmul.f32 %v3088, %v682
        %v3097 = vmul.f32 %v3089, %v683
        %v3098 = vmul.f32 %v3090, %v684
        %v3099 = vmul.f32 %v3091, %v685
        %v3100 = vmul.f32 %v3092, %v686
        %v3101 = vmul.f32 %v3093, %v687
        %v3102 = vmul.f32 %v3094, %v688
        %v3103 = vmul.f32 %v3095, %v689
        %v3104 = vadd.f32 %v3072, %v3096
        %v3105 = vadd.f32 %v3073, %v3097
        %v3106 = vadd.f32 %v3074, %v3098
        %v3107 = vadd.f32 %v3075, %v3099
        %v3108 = vadd.f32 %v3076, %v3100
        %v3109 = vadd.f32 %v3077, %v3101
        %v3110 = vadd.f32 %v3078, %v3102
        %v3111 = vadd.f32 %v3079, %v3103
        %v3112 = vunpack.c.l.bf16 %v2243
        %v3113 = vunpack.c.l.bf16 %v2244
        %v3114 = vunpack.c.h.bf16 %v2243
        %v3115 = vunpack.c.h.bf16 %v2244
        %v3116 = vunpack.c.l.bf16 %v2251
        %v3117 = vunpack.c.l.bf16 %v2252
        %v3118 = vunpack.c.h.bf16 %v2251
        %v3119 = vunpack.c.h.bf16 %v2252
        %v3120 = vmul.f32 %v3056, %v3112
        %v3121 = vmul.f32 %v3057, %v3113
        %v3122 = vmul.f32 %v3058, %v3114
        %v3123 = vmul.f32 %v3059, %v3115
        %v3124 = vmul.f32 %v3060, %v3116
        %v3125 = vmul.f32 %v3061, %v3117
        %v3126 = vmul.f32 %v3062, %v3118
        %v3127 = vmul.f32 %v3063, %v3119
        %v3128 = vmul.f32 %v3120, %v690
        %v3129 = vmul.f32 %v3121, %v691
        %v3130 = vmul.f32 %v3122, %v692
        %v3131 = vmul.f32 %v3123, %v693
        %v3132 = vmul.f32 %v3124, %v694
        %v3133 = vmul.f32 %v3125, %v695
        %v3134 = vmul.f32 %v3126, %v696
        %v3135 = vmul.f32 %v3127, %v697
        %v3136 = vadd.f32 %v3104, %v3128
        %v3137 = vadd.f32 %v3105, %v3129
        %v3138 = vadd.f32 %v3106, %v3130
        %v3139 = vadd.f32 %v3107, %v3131
        %v3140 = vadd.f32 %v3108, %v3132
        %v3141 = vadd.f32 %v3109, %v3133
        %v3142 = vadd.f32 %v3110, %v3134
        %v3143 = vadd.f32 %v3111, %v3135
        %v3144 = vunpack.c.l.bf16 %v2245
        %v3145 = vunpack.c.l.bf16 %v2246
        %v3146 = vunpack.c.h.bf16 %v2245
        %v3147 = vunpack.c.h.bf16 %v2246
        %v3148 = vunpack.c.l.bf16 %v2253
        %v3149 = vunpack.c.l.bf16 %v2254
        %v3150 = vunpack.c.h.bf16 %v2253
        %v3151 = vunpack.c.h.bf16 %v2254
        %v3152 = vmul.f32 %v3056, %v3144
        %v3153 = vmul.f32 %v3057, %v3145
        %v3154 = vmul.f32 %v3058, %v3146
        %v3155 = vmul.f32 %v3059, %v3147
        %v3156 = vmul.f32 %v3060, %v3148
        %v3157 = vmul.f32 %v3061, %v3149
        %v3158 = vmul.f32 %v3062, %v3150
        %v3159 = vmul.f32 %v3063, %v3151
        %v3160 = vmul.f32 %v3152, %v698
        %v3161 = vmul.f32 %v3153, %v699
        %v3162 = vmul.f32 %v3154, %v700
        %v3163 = vmul.f32 %v3155, %v701
        %v3164 = vmul.f32 %v3156, %v702
        %v3165 = vmul.f32 %v3157, %v703
        %v3166 = vmul.f32 %v3158, %v704
        %v3167 = vmul.f32 %v3159, %v705
        %v3168 = vadd.f32 %v3136, %v3160
        %v3169 = vadd.f32 %v3137, %v3161
        %v3170 = vadd.f32 %v3138, %v3162
        %v3171 = vadd.f32 %v3139, %v3163
        %v3172 = vadd.f32 %v3140, %v3164
        %v3173 = vadd.f32 %v3141, %v3165
        %v3174 = vadd.f32 %v3142, %v3166
        %v3175 = vadd.f32 %v3143, %v3167
        %s3176 = scalar_lea.vmem %s7, 96
        %v3177 = vld [vmem:[%s3176] sm:$0xff]
        %v3178 = vld [vmem:[%s3176 + $0x8] sm:$0xff]
        %v3179 = vld [vmem:[%s3176 + $0x10] sm:$0xff]
        %v3180 = vld [vmem:[%s3176 + $0x18] sm:$0xff]
        %3182 = vset.pattern.permute.xlu0 0
        %3183 = vperm.xlu0 %3182, %v3177
        %v3184 = vpop.permute.xlu0 %3183
        %3187 = vset.pattern.permute.xlu0 0
        %3188 = vperm.xlu0 %3187, %v3178
        %v3189 = vpop.permute.xlu0 %3188
        %3192 = vset.pattern.permute.xlu0 0
        %3193 = vperm.xlu0 %3192, %v3179
        %v3194 = vpop.permute.xlu0 %3193
        %3197 = vset.pattern.permute.xlu0 0
        %3198 = vperm.xlu0 %3197, %v3180
        %v3199 = vpop.permute.xlu0 %3198
        %v3201 = vmul.f32 %v2403, %v3184
        %v3202 = vmul.f32 %v2407, %v3184
        %v3203 = vmul.f32 %v2403, %v3189
        %v3204 = vmul.f32 %v2407, %v3189
        %v3205 = vmul.f32 %v2403, %v3194
        %v3206 = vmul.f32 %v2407, %v3194
        %v3207 = vmul.f32 %v2403, %v3199
        %v3208 = vmul.f32 %v2407, %v3199
        %s3209 = scalar_lea.vmem %s8, 96
        %v3210 = vld [vmem:[%s3209] sm:$0xff]
        %v3211 = vld [vmem:[%s3209 + $0x8] sm:$0xff]
        %v3212 = vld [vmem:[%s3209 + $0x10] sm:$0xff]
        %v3213 = vld [vmem:[%s3209 + $0x18] sm:$0xff]
        %3215 = vset.pattern.permute.xlu0 0
        %3216 = vperm.xlu0 %3215, %v3210
        %v3217 = vpop.permute.xlu0 %3216
        %3220 = vset.pattern.permute.xlu0 0
        %3221 = vperm.xlu0 %3220, %v3211
        %v3222 = vpop.permute.xlu0 %3221
        %3225 = vset.pattern.permute.xlu0 0
        %3226 = vperm.xlu0 %3225, %v3212
        %v3227 = vpop.permute.xlu0 %3226
        %3230 = vset.pattern.permute.xlu0 0
        %3231 = vperm.xlu0 %3230, %v3213
        %v3232 = vpop.permute.xlu0 %3231
        %v3234 = vadd.f32 %v3201, %v3217
        %v3235 = vadd.f32 %v3202, %v3217
        %v3236 = vadd.f32 %v3203, %v3222
        %v3237 = vadd.f32 %v3204, %v3222
        %v3238 = vadd.f32 %v3205, %v3227
        %v3239 = vadd.f32 %v3206, %v3227
        %v3240 = vadd.f32 %v3207, %v3232
        %v3241 = vadd.f32 %v3208, %v3232
        %v3242 = vxor.u32 %v3234, 2147483648
        %v3243 = vxor.u32 %v3235, 2147483648
        %v3244 = vxor.u32 %v3236, 2147483648
        %v3245 = vxor.u32 %v3237, 2147483648
        %v3246 = vxor.u32 %v3238, 2147483648
        %v3247 = vxor.u32 %v3239, 2147483648
        %v3248 = vxor.u32 %v3240, 2147483648
        %v3249 = vxor.u32 %v3241, 2147483648
        %v3250 = vmul.f32 %v3242, 1.442695
        %v3251 = vpow.pop %v3250
        %v3252 = vmul.f32 %v3243, 1.442695
        %v3253 = vpow.pop %v3252
        %v3254 = vmul.f32 %v3244, 1.442695
        %v3255 = vpow.pop %v3254
        %v3256 = vmul.f32 %v3245, 1.442695
        %v3257 = vpow.pop %v3256
        %v3258 = vmul.f32 %v3246, 1.442695
        %v3259 = vpow.pop %v3258
        %v3260 = vmul.f32 %v3247, 1.442695
        %v3261 = vpow.pop %v3260
        %v3262 = vmul.f32 %v3248, 1.442695
        %v3263 = vpow.pop %v3262
        %v3264 = vmul.f32 %v3249, 1.442695
        %v3265 = vpow.pop %v3264
        %v3266 = vadd.f32 %v3251, 1.0
        %v3267 = vadd.f32 %v3253, 1.0
        %v3268 = vadd.f32 %v3255, 1.0
        %v3269 = vadd.f32 %v3257, 1.0
        %v3270 = vadd.f32 %v3259, 1.0
        %v3271 = vadd.f32 %v3261, 1.0
        %v3272 = vadd.f32 %v3263, 1.0
        %v3273 = vadd.f32 %v3265, 1.0
        %v3274 = vrcp.pop %v3266
        %v3275 = vmul.f32 1.0, %v3274
        %v3276 = vrcp.pop %v3267
        %v3277 = vmul.f32 1.0, %v3276
        %v3278 = vrcp.pop %v3268
        %v3279 = vmul.f32 1.0, %v3278
        %v3280 = vrcp.pop %v3269
        %v3281 = vmul.f32 1.0, %v3280
        %v3282 = vrcp.pop %v3270
        %v3283 = vmul.f32 1.0, %v3282
        %v3284 = vrcp.pop %v3271
        %v3285 = vmul.f32 1.0, %v3284
        %v3286 = vrcp.pop %v3272
        %v3287 = vmul.f32 1.0, %v3286
        %v3288 = vrcp.pop %v3273
        %v3289 = vmul.f32 1.0, %v3288
        %v3290 = vmul.f32 %v3168, %v3275
        %v3291 = vmul.f32 %v3169, %v3277
        %v3292 = vmul.f32 %v3170, %v3279
        %v3293 = vmul.f32 %v3171, %v3281
        %v3294 = vmul.f32 %v3172, %v3283
        %v3295 = vmul.f32 %v3173, %v3285
        %v3296 = vmul.f32 %v3174, %v3287
        %v3297 = vmul.f32 %v3175, %v3289
        %v3298 = vadd.f32 %v3290, %v3168
        %v3299 = vadd.f32 %v3291, %v3169
        %v3300 = vadd.f32 %v3292, %v3170
        %v3301 = vadd.f32 %v3293, %v3171
        %v3302 = vadd.f32 %v3294, %v3172
        %v3303 = vadd.f32 %v3295, %v3173
        %v3304 = vadd.f32 %v3296, %v3174
        %v3305 = vadd.f32 %v3297, %v3175
        %v3306 = vpack.c.bf16 %v2526, %v2524
        %v3307 = vpack.c.bf16 %v2527, %v2525
        %v3308 = vpack.c.bf16 %v2530, %v2528
        %v3309 = vpack.c.bf16 %v2531, %v2529
        %v3310 = vpack.c.bf16 %v2784, %v2782
        %v3311 = vpack.c.bf16 %v2785, %v2783
        %v3312 = vpack.c.bf16 %v2788, %v2786
        %v3313 = vpack.c.bf16 %v2789, %v2787
        %v3314 = vpack.c.bf16 %v3042, %v3040
        %v3315 = vpack.c.bf16 %v3043, %v3041
        %v3316 = vpack.c.bf16 %v3046, %v3044
        %v3317 = vpack.c.bf16 %v3047, %v3045
        %v3318 = vpack.c.bf16 %v3300, %v3298
        %v3319 = vpack.c.bf16 %v3301, %v3299
        %v3320 = vpack.c.bf16 %v3304, %v3302
        %v3321 = vpack.c.bf16 %v3305, %v3303
        %v3322 = vld [vmem:[%s9] sm:$0xf]
        %v3323 = vld [vmem:[%s9 + $0x4] sm:$0xf]
        %v3324 = vld [vmem:[%s9 + $0x8] sm:$0xf]
        %v3325 = vld [vmem:[%s9 + $0xc] sm:$0xf]
        %v3326 = vld [vmem:[%s9 + $0x10] sm:$0xf]
        %v3327 = vld [vmem:[%s9 + $0x14] sm:$0xf]
        %v3328 = vld [vmem:[%s9 + $0x18] sm:$0xf]
        %v3329 = vld [vmem:[%s9 + $0x1c] sm:$0xf]
        %v3330 = vld [vmem:[%s9 + $0x20] sm:$0xf]
        %v3331 = vld [vmem:[%s9 + $0x24] sm:$0xf]
        %v3332 = vld [vmem:[%s9 + $0x28] sm:$0xf]
        %v3333 = vld [vmem:[%s9 + $0x2c] sm:$0xf]
        %v3334 = vld [vmem:[%s9 + $0x30] sm:$0xf]
        %v3335 = vld [vmem:[%s9 + $0x34] sm:$0xf]
        %v3336 = vld [vmem:[%s9 + $0x38] sm:$0xf]
        %v3337 = vld [vmem:[%s9 + $0x3c] sm:$0xf]
        %v3338 = vld [vmem:[%s10] sm:$0xff]
        %v3339 = vld [vmem:[%s10 + $0x8] sm:$0xff]
        %v3340 = vld [vmem:[%s10 + $0x10] sm:$0xff]
        %v3341 = vld [vmem:[%s10 + $0x18] sm:$0xff]
        %v3342 = vld [vmem:[%s10 + $0x20] sm:$0xff]
        %v3343 = vld [vmem:[%s10 + $0x28] sm:$0xff]
        %v3344 = vld [vmem:[%s10 + $0x30] sm:$0xff]
        %v3345 = vld [vmem:[%s10 + $0x38] sm:$0xff]
        %v3346 = vld [vmem:[%s10 + $0x40] sm:$0xff]
        %v3347 = vld [vmem:[%s10 + $0x48] sm:$0xff]
        %v3348 = vld [vmem:[%s10 + $0x50] sm:$0xff]
        %v3349 = vld [vmem:[%s10 + $0x58] sm:$0xff]
        %v3350 = vld [vmem:[%s10 + $0x60] sm:$0xff]
        %v3351 = vld [vmem:[%s10 + $0x68] sm:$0xff]
        %v3352 = vld [vmem:[%s10 + $0x70] sm:$0xff]
        %v3353 = vld [vmem:[%s10 + $0x78] sm:$0xff]
        %3355 = vset.pattern.permute.xlu0 0
        %3356 = vperm.xlu0 %3355, %v3338
        %v3357 = vpop.permute.xlu0 %3356
        %3360 = vset.pattern.permute.xlu0 0
        %3361 = vperm.xlu0 %3360, %v3339
        %v3362 = vpop.permute.xlu0 %3361
        %3365 = vset.pattern.permute.xlu0 0
        %3366 = vperm.xlu0 %3365, %v3340
        %v3367 = vpop.permute.xlu0 %3366
        %3370 = vset.pattern.permute.xlu0 0
        %3371 = vperm.xlu0 %3370, %v3341
        %v3372 = vpop.permute.xlu0 %3371
        %3375 = vset.pattern.permute.xlu0 0
        %3376 = vperm.xlu0 %3375, %v3342
        %v3377 = vpop.permute.xlu0 %3376
        %3380 = vset.pattern.permute.xlu0 0
        %3381 = vperm.xlu0 %3380, %v3343
        %v3382 = vpop.permute.xlu0 %3381
        %3385 = vset.pattern.permute.xlu0 0
        %3386 = vperm.xlu0 %3385, %v3344
        %v3387 = vpop.permute.xlu0 %3386
        %3390 = vset.pattern.permute.xlu0 0
        %3391 = vperm.xlu0 %3390, %v3345
        %v3392 = vpop.permute.xlu0 %3391
        %3395 = vset.pattern.permute.xlu0 0
        %3396 = vperm.xlu0 %3395, %v3346
        %v3397 = vpop.permute.xlu0 %3396
        %3399 = vset.pattern.permute.xlu0 0
        %3400 = vperm.xlu0 %3399, %v3347
        %v3401 = vpop.permute.xlu0 %3400
        %3403 = vset.pattern.permute.xlu0 0
        %3404 = vperm.xlu0 %3403, %v3348
        %v3405 = vpop.permute.xlu0 %3404
        %3407 = vset.pattern.permute.xlu0 0
        %3408 = vperm.xlu0 %3407, %v3349
        %v3409 = vpop.permute.xlu0 %3408
        %3411 = vset.pattern.permute.xlu0 0
        %3412 = vperm.xlu0 %3411, %v3350
        %v3413 = vpop.permute.xlu0 %3412
        %3415 = vset.pattern.permute.xlu0 0
        %3416 = vperm.xlu0 %3415, %v3351
        %v3417 = vpop.permute.xlu0 %3416
        %3419 = vset.pattern.permute.xlu0 0
        %3420 = vperm.xlu0 %3419, %v3352
        %v3421 = vpop.permute.xlu0 %3420
        %3423 = vset.pattern.permute.xlu0 0
        %3424 = vperm.xlu0 %3423, %v3353
        %v3425 = vpop.permute.xlu0 %3424
        %v3442 = vunpack.c.l.b16 %v3322
        %v3443 = vunpack.c.l.b16 %v3323
        %v3444 = vunpack.c.l.b16 %v3324
        %v3445 = vunpack.c.l.b16 %v3325
        %v3446 = vunpack.c.l.b16 %v3326
        %v3447 = vunpack.c.l.b16 %v3327
        %v3448 = vunpack.c.l.b16 %v3328
        %v3449 = vunpack.c.l.b16 %v3329
        %v3450 = vunpack.c.l.b16 %v3330
        %v3451 = vunpack.c.l.b16 %v3331
        %v3452 = vunpack.c.l.b16 %v3332
        %v3453 = vunpack.c.l.b16 %v3333
        %v3454 = vunpack.c.l.b16 %v3334
        %v3455 = vunpack.c.l.b16 %v3335
        %v3456 = vunpack.c.l.b16 %v3336
        %v3457 = vunpack.c.l.b16 %v3337
        %v3458 = vpack.c.b16 %v3443, %v3442
        %v3459 = vpack.c.b16 %v3445, %v3444
        %v3460 = vpack.c.b16 %v3447, %v3446
        %v3461 = vpack.c.b16 %v3449, %v3448
        %v3462 = vpack.c.b16 %v3451, %v3450
        %v3463 = vpack.c.b16 %v3453, %v3452
        %v3464 = vpack.c.b16 %v3455, %v3454
        %v3465 = vpack.c.b16 %v3457, %v3456
        %3474 = vmatprep.subr.bf16.mxu0 %v3307
        %3475 = vmatpush1.bf16.msra.mxu0 %v3306
        %3476 = vmatprep.subr.bf16.mxu0 %v3309
        %3477 = vmatpush1.bf16.msra.mxu0 %v3308
        %3478 = vmatprep.subr.bf16.mxu0 %v3311
        %3479 = vmatpush1.bf16.msra.mxu0 %v3310
        %3480 = vmatprep.subr.bf16.mxu0 %v3313
        %3481 = vmatpush1.bf16.msra.mxu0 %v3312
        %3482 = vmatprep.subr.bf16.mxu0 %v3315
        %3483 = vmatpush1.bf16.msra.mxu0 %v3314
        %3484 = vmatprep.subr.bf16.mxu0 %v3317
        %3485 = vmatpush1.bf16.msra.mxu0 %v3316
        %3486 = vmatprep.subr.bf16.mxu0 %v3319
        %3487 = vmatpush1.bf16.msra.mxu0 %v3318
        %3488 = vmatprep.subr.bf16.mxu0 %v3321
        %3489 = vmatpush1.bf16.msra.mxu0 %v3320
        %3490 = vmatprep.subr.bf16.mxu0 0
        %3491 = vmatpush1.bf16.msra.mxu0 0
        %3492 = vmatprep.subr.bf16.mxu0 0
        %3493 = vmatpush1.bf16.msra.mxu0 0
        %3494 = vmatprep.subr.bf16.mxu0 0
        %3495 = vmatpush1.bf16.msra.mxu0 0
        %3496 = vmatprep.subr.bf16.mxu0 0
        %3497 = vmatpush1.bf16.msra.mxu0 0
        %3498 = vmatprep.subr.bf16.mxu0 0
        %3499 = vmatpush1.bf16.msra.mxu0 0
        %3500 = vmatprep.subr.bf16.mxu0 0
        %3501 = vmatpush1.bf16.msra.mxu0 0
        %3502 = vmatprep.subr.bf16.mxu0 0
        %3503 = vmatpush1.bf16.msra.mxu0 0
        %3504 = vmatprep.subr.bf16.mxu0 0
        %3505 = vmatpush1.bf16.msra.mxu0 0
        %3506 = vmatprep.mubr.bf16.mxu0 0
        %3507 = vmatmul.mubr.bf16.gmra.mrb[0].mxu0 %v3458
        %v3508 = vpop.f32.mrb[0].mxu0
        %v3509 = vadd.f32 %v3357, %v3508
        %v3510 = vpop.f32.mrb[0].mxu0
        %v3511 = vadd.f32 %v3357, %v3510
        %v3512 = vpop.f32.mrb[0].mxu0
        %v3513 = vadd.f32 %v3362, %v3512
        %v3514 = vpop.f32.mrb[0].mxu0
        %v3515 = vadd.f32 %v3362, %v3514
        %3516 = vmatprep.mubr.bf16.mxu0 0
        %3517 = vmatmul.mubr.bf16.gmra.mrb[0].mxu0 %v3459
        %v3518 = vpop.f32.mrb[0].mxu0
        %v3519 = vadd.f32 %v3367, %v3518
        %v3520 = vpop.f32.mrb[0].mxu0
        %v3521 = vadd.f32 %v3367, %v3520
        %v3522 = vpop.f32.mrb[0].mxu0
        %v3523 = vadd.f32 %v3372, %v3522
        %v3524 = vpop.f32.mrb[0].mxu0
        %v3525 = vadd.f32 %v3372, %v3524
        %3526 = vmatprep.mubr.bf16.mxu0 0
        %3527 = vmatmul.mubr.bf16.gmra.mrb[0].mxu0 %v3460
        %v3528 = vpop.f32.mrb[0].mxu0
        %v3529 = vadd.f32 %v3377, %v3528
        %v3530 = vpop.f32.mrb[0].mxu0
        %v3531 = vadd.f32 %v3377, %v3530
        %v3532 = vpop.f32.mrb[0].mxu0
        %v3533 = vadd.f32 %v3382, %v3532
        %v3534 = vpop.f32.mrb[0].mxu0
        %v3535 = vadd.f32 %v3382, %v3534
        %3536 = vmatprep.mubr.bf16.mxu0 0
        %3537 = vmatmul.mubr.bf16.gmra.mrb[0].mxu0 %v3461
        %v3538 = vpop.f32.mrb[0].mxu0
        %v3539 = vadd.f32 %v3387, %v3538
        %v3540 = vpop.f32.mrb[0].mxu0
        %v3541 = vadd.f32 %v3387, %v3540
        %v3542 = vpop.f32.mrb[0].mxu0
        %v3543 = vadd.f32 %v3392, %v3542
        %v3544 = vpop.f32.mrb[0].mxu0
        %v3545 = vadd.f32 %v3392, %v3544
        %3546 = vmatprep.mubr.bf16.mxu0 0
        %3547 = vmatmul.mubr.bf16.gmra.mrb[0].mxu0 %v3462
        %v3548 = vpop.f32.mrb[0].mxu0
        %v3549 = vpop.f32.mrb[0].mxu0
        %v3550 = vpop.f32.mrb[0].mxu0
        %v3551 = vpop.f32.mrb[0].mxu0
        %3552 = vmatprep.mubr.bf16.mxu0 0
        %3553 = vmatmul.mubr.bf16.gmra.mrb[0].mxu0 %v3463
        %v3554 = vpop.f32.mrb[0].mxu0
        %v3555 = vpop.f32.mrb[0].mxu0
        %v3556 = vpop.f32.mrb[0].mxu0
        %v3557 = vpop.f32.mrb[0].mxu0
        %3558 = vmatprep.mubr.bf16.mxu0 0
        %3559 = vmatmul.mubr.bf16.gmra.mrb[0].mxu0 %v3464
        %v3560 = vpop.f32.mrb[0].mxu0
        %v3561 = vpop.f32.mrb[0].mxu0
        %v3562 = vpop.f32.mrb[0].mxu0
        %v3563 = vpop.f32.mrb[0].mxu0
        %3564 = vmatprep.mubr.bf16.mxu0 0
        %3565 = vmatmul.mubr.bf16.gmra.mrb[0].mxu0 %v3465
        %v3566 = vpop.f32.mrb[0].mxu0
        %v3567 = vpop.f32.mrb[0].mxu0
        %v3568 = vpop.f32.mrb[0].mxu0
        %v3569 = vpop.f32.mrb[0].mxu0
        %3570 = vdwg.mxu0
        %v3571 = vmax.f32 %v3509, 0.0
        %v3572 = vmax.f32 %v3511, 0.0
        %v3573 = vmax.f32 %v3513, 0.0
        %v3574 = vmax.f32 %v3515, 0.0
        %v3575 = vmax.f32 %v3519, 0.0
        %v3576 = vmax.f32 %v3521, 0.0
        %v3577 = vmax.f32 %v3523, 0.0
        %v3578 = vmax.f32 %v3525, 0.0
        %v3579 = vmax.f32 %v3529, 0.0
        %v3580 = vmax.f32 %v3531, 0.0
        %v3581 = vmax.f32 %v3533, 0.0
        %v3582 = vmax.f32 %v3535, 0.0
        %v3583 = vmax.f32 %v3539, 0.0
        %v3584 = vmax.f32 %v3541, 0.0
        %v3585 = vmax.f32 %v3543, 0.0
        %v3586 = vmax.f32 %v3545, 0.0
        %v3587 = vpack.c.bf16 %v3581, %v3579
        %v3588 = vpack.c.bf16 %v3582, %v3580
        %v3589 = vpack.c.bf16 %v3585, %v3583
        %v3590 = vpack.c.bf16 %v3586, %v3584
        %v3591 = vpack.c.bf16 %v3573, %v3571
        %v3592 = vpack.c.bf16 %v3574, %v3572
        %v3593 = vpack.c.bf16 %v3577, %v3575
        %v3594 = vpack.c.bf16 %v3578, %v3576
        %s3595 = scalar_lea.vmem %s11, 32
        %v3596 = vld [vmem:[%s3595] sm:$0xf]
        %v3597 = vld [vmem:[%s3595 + $0x4] sm:$0xf]
        %v3598 = vld [vmem:[%s3595 + $0x8] sm:$0xf]
        %v3599 = vld [vmem:[%s3595 + $0xc] sm:$0xf]
        %s3600 = scalar_lea.vmem %s12, 64
        %v3601 = vld [vmem:[%s3600] sm:$0xff]
        %v3602 = vld [vmem:[%s3600 + $0x8] sm:$0xff]
        %v3603 = vld [vmem:[%s3600 + $0x10] sm:$0xff]
        %v3604 = vld [vmem:[%s3600 + $0x18] sm:$0xff]
        %3606 = vset.pattern.permute.xlu0 0
        %3607 = vperm.xlu0 %3606, %v3601
        %v3608 = vpop.permute.xlu0 %3607
        %3611 = vset.pattern.permute.xlu0 0
        %3612 = vperm.xlu0 %3611, %v3602
        %v3613 = vpop.permute.xlu0 %3612
        %3616 = vset.pattern.permute.xlu0 0
        %3617 = vperm.xlu0 %3616, %v3603
        %v3618 = vpop.permute.xlu0 %3617
        %3621 = vset.pattern.permute.xlu0 0
        %3622 = vperm.xlu0 %3621, %v3604
        %v3623 = vpop.permute.xlu0 %3622
        %v3629 = vunpack.c.l.b16 %v3596
        %v3630 = vunpack.c.l.b16 %v3597
        %v3631 = vunpack.c.l.b16 %v3598
        %v3632 = vunpack.c.l.b16 %v3599
        %v3633 = vpack.c.b16 %v3630, %v3629
        %v3634 = vpack.c.b16 %v3632, %v3631
        %vm3635 = vcmask 523264
        %v3637 = vsel %vm3635, %v3633, 0
        %v3640 = vsel %vm3635, %v3634, 0
        %3642 = vmatprep.subr.bf16.mxu0 %v3588
        %3643 = vmatpush1.bf16.msra.mxu0 %v3587
        %3644 = vmatprep.subr.bf16.mxu0 %v3590
        %3645 = vmatpush1.bf16.msra.mxu0 %v3589
        %3646 = vmatprep.subr.bf16.mxu0 %v3592
        %3647 = vmatpush1.bf16.msra.mxu0 %v3591
        %3648 = vmatprep.subr.bf16.mxu0 %v3594
        %3649 = vmatpush1.bf16.msra.mxu0 %v3593
        %3650 = vmatprep.subr.bf16.mxu0 0
        %3651 = vmatpush1.bf16.msra.mxu0 0
        %3652 = vmatprep.subr.bf16.mxu0 0
        %3653 = vmatpush1.bf16.msra.mxu0 0
        %3654 = vmatprep.subr.bf16.mxu0 0
        %3655 = vmatpush1.bf16.msra.mxu0 0
        %3656 = vmatprep.subr.bf16.mxu0 0
        %3657 = vmatpush1.bf16.msra.mxu0 0
        %3658 = vmatprep.subr.bf16.mxu0 0
        %3659 = vmatpush1.bf16.msra.mxu0 0
        %3660 = vmatprep.subr.bf16.mxu0 0
        %3661 = vmatpush1.bf16.msra.mxu0 0
        %3662 = vmatprep.subr.bf16.mxu0 0
        %3663 = vmatpush1.bf16.msra.mxu0 0
        %3664 = vmatprep.subr.bf16.mxu0 0
        %3665 = vmatpush1.bf16.msra.mxu0 0
        %3666 = vmatprep.subr.bf16.mxu0 0
        %3667 = vmatpush1.bf16.msra.mxu0 0
        %3668 = vmatprep.subr.bf16.mxu0 0
        %3669 = vmatpush1.bf16.msra.mxu0 0
        %3670 = vmatprep.subr.bf16.mxu0 0
        %3671 = vmatpush1.bf16.msra.mxu0 0
        %3672 = vmatprep.subr.bf16.mxu0 0
        %3673 = vmatpush1.bf16.msra.mxu0 0
        %3674 = vmatprep.mubr.bf16.mxu0 0
        %3675 = vmatmul.mubr.bf16.gmra.mrb[0].mxu0 %v3637
        %v3676 = vpop.f32.mrb[0].mxu0
        %v3677 = vadd.f32 %v3608, %v3676
        %v3678 = vpop.f32.mrb[0].mxu0
        %v3679 = vadd.f32 %v3608, %v3678
        %v3680 = vpop.f32.mrb[0].mxu0
        %v3681 = vadd.f32 %v3613, %v3680
        %v3682 = vpop.f32.mrb[0].mxu0
        %v3683 = vadd.f32 %v3613, %v3682
        %3684 = vmatprep.mubr.bf16.mxu0 0
        %3685 = vmatmul.mubr.bf16.gmra.mrb[0].mxu0 %v3640
        %v3686 = vpop.f32.mrb[0].mxu0
        %v3687 = vadd.f32 %v3618, %v3686
        %v3688 = vpop.f32.mrb[0].mxu0
        %v3689 = vadd.f32 %v3618, %v3688
        %v3690 = vpop.f32.mrb[0].mxu0
        %v3691 = vadd.f32 %v3623, %v3690
        %v3692 = vpop.f32.mrb[0].mxu0
        %v3693 = vadd.f32 %v3623, %v3692
        %3694 = vdwg.mxu0
        %v3695 = vxor.u32 %v3677, 2147483648
        %v3696 = vxor.u32 %v3679, 2147483648
        %v3697 = vxor.u32 %v3681, 2147483648
        %v3698 = vxor.u32 %v3683, 2147483648
        %v3699 = vxor.u32 %v3687, 2147483648
        %v3700 = vxor.u32 %v3689, 2147483648
        %v3701 = vxor.u32 %v3691, 2147483648
        %v3702 = vxor.u32 %v3693, 2147483648
        %v3703 = vmul.f32 %v3695, 1.442695
        %v3704 = vpow.pop %v3703
        %v3705 = vmul.f32 %v3696, 1.442695
        %v3706 = vpow.pop %v3705
        %v3707 = vmul.f32 %v3697, 1.442695
        %v3708 = vpow.pop %v3707
        %v3709 = vmul.f32 %v3698, 1.442695
        %v3710 = vpow.pop %v3709
        %v3711 = vmul.f32 %v3699, 1.442695
        %v3712 = vpow.pop %v3711
        %v3713 = vmul.f32 %v3700, 1.442695
        %v3714 = vpow.pop %v3713
        %v3715 = vmul.f32 %v3701, 1.442695
        %v3716 = vpow.pop %v3715
        %v3717 = vmul.f32 %v3702, 1.442695
        %v3718 = vpow.pop %v3717
        %v3719 = vadd.f32 %v3704, 1.0
        %v3720 = vadd.f32 %v3706, 1.0
        %v3721 = vadd.f32 %v3708, 1.0
        %v3722 = vadd.f32 %v3710, 1.0
        %v3723 = vadd.f32 %v3712, 1.0
        %v3724 = vadd.f32 %v3714, 1.0
        %v3725 = vadd.f32 %v3716, 1.0
        %v3726 = vadd.f32 %v3718, 1.0
        %v3727 = vrcp.pop %v3719
        %v3728 = vmul.f32 1.0, %v3727
        %v3729 = vrcp.pop %v3720
        %v3730 = vmul.f32 1.0, %v3729
        %v3731 = vrcp.pop %v3721
        %v3732 = vmul.f32 1.0, %v3731
        %v3733 = vrcp.pop %v3722
        %v3734 = vmul.f32 1.0, %v3733
        %v3735 = vrcp.pop %v3723
        %v3736 = vmul.f32 1.0, %v3735
        %v3737 = vrcp.pop %v3724
        %v3738 = vmul.f32 1.0, %v3737
        %v3739 = vrcp.pop %v3725
        %v3740 = vmul.f32 1.0, %v3739
        %v3741 = vrcp.pop %v3726
        %v3742 = vmul.f32 1.0, %v3741
        %v3743 = vmul.f32 %v3728, %v3579
        %v3744 = vmul.f32 %v3730, %v3580
        %v3745 = vmul.f32 %v3732, %v3581
        %v3746 = vmul.f32 %v3734, %v3582
        %v3747 = vmul.f32 %v3736, %v3583
        %v3748 = vmul.f32 %v3738, %v3584
        %v3749 = vmul.f32 %v3740, %v3585
        %v3750 = vmul.f32 %v3742, %v3586
        %v3751 = vsub.f32 1.0, %v3728
        %v3752 = vsub.f32 1.0, %v3730
        %v3753 = vsub.f32 1.0, %v3732
        %v3754 = vsub.f32 1.0, %v3734
        %v3755 = vsub.f32 1.0, %v3736
        %v3756 = vsub.f32 1.0, %v3738
        %v3757 = vsub.f32 1.0, %v3740
        %v3758 = vsub.f32 1.0, %v3742
        %v3759 = vmul.f32 %v3751, %v3571
        %v3760 = vmul.f32 %v3752, %v3572
        %v3761 = vmul.f32 %v3753, %v3573
        %v3762 = vmul.f32 %v3754, %v3574
        %v3763 = vmul.f32 %v3755, %v3575
        %v3764 = vmul.f32 %v3756, %v3576
        %v3765 = vmul.f32 %v3757, %v3577
        %v3766 = vmul.f32 %v3758, %v3578
        %v3767 = vadd.f32 %v3743, %v3759
        %v3768 = vadd.f32 %v3744, %v3760
        %v3769 = vadd.f32 %v3745, %v3761
        %v3770 = vadd.f32 %v3746, %v3762
        %v3771 = vadd.f32 %v3747, %v3763
        %v3772 = vadd.f32 %v3748, %v3764
        %v3773 = vadd.f32 %v3749, %v3765
        %v3774 = vadd.f32 %v3750, %v3766
        %s3775 = scalar_lea.vmem %s13, 32
        %v3776 = vld [vmem:[%s3775] sm:$0xf]
        %v3777 = vld [vmem:[%s3775 + $0x4] sm:$0xf]
        %v3778 = vld [vmem:[%s3775 + $0x8] sm:$0xf]
        %v3779 = vld [vmem:[%s3775 + $0xc] sm:$0xf]
        %v3780 = vpack.c.bf16 %v3769, %v3767
        %v3781 = vpack.c.bf16 %v3770, %v3768
        %v3782 = vpack.c.bf16 %v3773, %v3771
        %v3783 = vpack.c.bf16 %v3774, %v3772
        %s3784 = scalar_lea.vmem %s14, 64
        %v3785 = vld [vmem:[%s3784] sm:$0xff]
        %v3786 = vld [vmem:[%s3784 + $0x8] sm:$0xff]
        %v3787 = vld [vmem:[%s3784 + $0x10] sm:$0xff]
        %v3788 = vld [vmem:[%s3784 + $0x18] sm:$0xff]
        %3790 = vset.pattern.permute.xlu0 0
        %3791 = vperm.xlu0 %3790, %v3785
        %v3792 = vpop.permute.xlu0 %3791
        %3795 = vset.pattern.permute.xlu0 0
        %3796 = vperm.xlu0 %3795, %v3786
        %v3797 = vpop.permute.xlu0 %3796
        %3800 = vset.pattern.permute.xlu0 0
        %3801 = vperm.xlu0 %3800, %v3787
        %v3802 = vpop.permute.xlu0 %3801
        %3805 = vset.pattern.permute.xlu0 0
        %3806 = vperm.xlu0 %3805, %v3788
        %v3807 = vpop.permute.xlu0 %3806
        %v3813 = vunpack.c.l.b16 %v3776
        %v3814 = vunpack.c.l.b16 %v3777
        %v3815 = vunpack.c.l.b16 %v3778
        %v3816 = vunpack.c.l.b16 %v3779
        %v3817 = vpack.c.b16 %v3814, %v3813
        %v3818 = vpack.c.b16 %v3816, %v3815
        %v3820 = vsel %vm948, %v3817, 0
        %v3823 = vsel %vm948, %v3818, 0
        %3825 = vmatprep.subr.bf16.mxu0 %v3781
        %3826 = vmatpush1.bf16.msra.mxu0 %v3780
        %3827 = vmatprep.subr.bf16.mxu0 %v3783
        %3828 = vmatpush1.bf16.msra.mxu0 %v3782
        %3829 = vmatprep.subr.bf16.mxu0 0
        %3830 = vmatpush1.bf16.msra.mxu0 0
        %3831 = vmatprep.subr.bf16.mxu0 0
        %3832 = vmatpush1.bf16.msra.mxu0 0
        %3833 = vmatprep.subr.bf16.mxu0 0
        %3834 = vmatpush1.bf16.msra.mxu0 0
        %3835 = vmatprep.subr.bf16.mxu0 0
        %3836 = vmatpush1.bf16.msra.mxu0 0
        %3837 = vmatprep.subr.bf16.mxu0 0
        %3838 = vmatpush1.bf16.msra.mxu0 0
        %3839 = vmatprep.subr.bf16.mxu0 0
        %3840 = vmatpush1.bf16.msra.mxu0 0
        %3841 = vmatprep.subr.bf16.mxu0 0
        %3842 = vmatpush1.bf16.msra.mxu0 0
        %3843 = vmatprep.subr.bf16.mxu0 0
        %3844 = vmatpush1.bf16.msra.mxu0 0
        %3845 = vmatprep.subr.bf16.mxu0 0
        %3846 = vmatpush1.bf16.msra.mxu0 0
        %3847 = vmatprep.subr.bf16.mxu0 0
        %3848 = vmatpush1.bf16.msra.mxu0 0
        %3849 = vmatprep.subr.bf16.mxu0 0
        %3850 = vmatpush1.bf16.msra.mxu0 0
        %3851 = vmatprep.subr.bf16.mxu0 0
        %3852 = vmatpush1.bf16.msra.mxu0 0
        %3853 = vmatprep.subr.bf16.mxu0 0
        %3854 = vmatpush1.bf16.msra.mxu0 0
        %3855 = vmatprep.subr.bf16.mxu0 0
        %3856 = vmatpush1.bf16.msra.mxu0 0
        %3857 = vmatprep.mubr.bf16.mxu0 0
        %3858 = vmatmul.mubr.bf16.gmra.mrb[0].mxu0 %v3820
        %v3859 = vpop.f32.mrb[0].mxu0
        %v3860 = vadd.f32 %v3792, %v3859
        %v3861 = vpop.f32.mrb[0].mxu0
        %v3862 = vadd.f32 %v3792, %v3861
        %v3863 = vpop.f32.mrb[0].mxu0
        %v3864 = vadd.f32 %v3797, %v3863
        %v3865 = vpop.f32.mrb[0].mxu0
        %v3866 = vadd.f32 %v3797, %v3865
        %3867 = vmatprep.mubr.bf16.mxu0 0
        %3868 = vmatmul.mubr.bf16.gmra.mrb[0].mxu0 %v3823
        %v3869 = vpop.f32.mrb[0].mxu0
        %v3870 = vadd.f32 %v3802, %v3869
        %v3871 = vpop.f32.mrb[0].mxu0
        %v3872 = vadd.f32 %v3802, %v3871
        %v3873 = vpop.f32.mrb[0].mxu0
        %v3874 = vadd.f32 %v3807, %v3873
        %v3875 = vpop.f32.mrb[0].mxu0
        %v3876 = vadd.f32 %v3807, %v3875
        %3877 = vdwg.mxu0
        %v3878 = vmax.f32 %v3860, 0.0
        %v3879 = vmax.f32 %v3862, 0.0
        %v3880 = vmax.f32 %v3864, 0.0
        %v3881 = vmax.f32 %v3866, 0.0
        %v3882 = vmax.f32 %v3870, 0.0
        %v3883 = vmax.f32 %v3872, 0.0
        %v3884 = vmax.f32 %v3874, 0.0
        %v3885 = vmax.f32 %v3876, 0.0
        %v3886 = vpack.c.bf16 %v3880, %v3878
        %v3887 = vpack.c.bf16 %v3881, %v3879
        %v3888 = vpack.c.bf16 %v3884, %v3882
        %v3889 = vpack.c.bf16 %v3885, %v3883
        %v3894 = vunpack.c.l.b16 %v3886
        %v3895 = vunpack.c.l.b16 %v3887
        %v3896 = vunpack.c.h.b16 %v3886
        %v3897 = vunpack.c.h.b16 %v3887
        %v3898 = vunpack.c.l.b16 %v3888
        %v3899 = vunpack.c.l.b16 %v3889
        %v3900 = vunpack.c.h.b16 %v3888
        %v3901 = vunpack.c.h.b16 %v3889
        %v3902 = vpack.c.b16 %v3895, %v3894
        %v3903 = vpack.c.b16 %v3897, %v3896
        %v3904 = vpack.c.b16 %v3899, %v3898
        %v3905 = vpack.c.b16 %v3901, %v3900
        %3910 = vst [vmem:[%s614] sm:$0xff] %v3902
        %3911 = vst [vmem:[%s614 + $0x8] sm:$0xff] %v3903
        %3912 = vst [vmem:[%s614 + $0x10] sm:$0xff] %v3904
        %3913 = vst [vmem:[%s614 + $0x18] sm:$0xff] %v3905
        %s3914 = sand.u32 %s401, 1
        %s3915 = scalar_lea.sflag [#allocation3], %s3914
        %s3916 = sand.u32 %s401, 1
        %s3917 = smul.addr %s3916, 32
        %s3918 = scalar_lea.vmem [#allocation2], %s3917
        // Predicated region
        $region81: #{tpu_custom_call.1} parent=79 // pred_check
          %p3919 = pneg %p411
        $region82: #{tpu_custom_call.1} parent=79 // pred_check_branch
          %3921 = sbr.rel (%p3919) target = $region84
        $region83: #{tpu_custom_call.1} parent=79 // pred_region
          %s3922 = smul.u32 2, %s34
          %s3924 = ssub.s32 512, 512
          %3925 = vsyncadd %s3915, %s3924
          %s3926 = smul.addr %s33, 8
          %s3927 = sadd.s32 %s3922, %s3926
          %s3928 = smul.addr %s3927, 64
          %s3929 = scalar_lea.hbm %s15, %s3928
          %s3930 = sshll.u32 %s3918, 4
          %s3931 = int_to_ptr.vmem [resolvable:$true] %s3930
          %3936 = dma.vmem_to_hbm [thread:$0]  %s3931, 512, %s3929, %s3915, 128, 128, 8
        $region84: #{tpu_custom_call.1} parent=79 // pred_fallthru
          _
      $region80: #{tpu_custom_call.1} parent=5 // pred_fallthru
        _
      %p3937 = scmp.le.s32.totalorder 2, %s24
      // Predicated region
      $region85: #{tpu_custom_call.1} parent=5 // pred_check
        %p3938 = pneg %p3937
      $region86: #{tpu_custom_call.1} parent=5 // pred_check_branch
        %3940 = sbr.rel (%p3938) target = $region88
      $region87: #{tpu_custom_call.1} parent=5 // pred_region
        %s3941 = ssub.s32 %s24, 2
        // Predicated region
        $region89: #{tpu_custom_call.1} parent=87 // pred_check
          %p3942 = pneg %p417
        $region90: #{tpu_custom_call.1} parent=87 // pred_check_branch
          %3944 = sbr.rel (%p3942) target = $region92
        $region91: #{tpu_custom_call.1} parent=87 // pred_region
          %s3945 = sand.u32 %s402, 1
          %s3946 = scalar_lea.sflag [#allocation3], %s3945
          %s3947 = sand.u32 %s402, 1
          %s3948 = smul.addr %s3947, 32
          %s3949 = scalar_lea.vmem [#allocation2], %s3948
          %3950 = dma.done %s3946, 512
        $region92: #{tpu_custom_call.1} parent=87 // pred_fallthru
          _
      $region88: #{tpu_custom_call.1} parent=5 // pred_fallthru
        _
    $region6: #{tpu_custom_call.1} parent=1 // loop_footer
      %s28 = sadd.s32 1, %s24
    $region7: #{tpu_custom_call.1} parent=1 // loop_footer_branch
      %23 = sbr.rel target = $region3
    $region8: #{tpu_custom_call.1} parent=1 // loop_exit
      _
    %3951 = vsyncpa [#allocation3], 1
    %s3952 = scalar_lea.sflag [#allocation3], 1
    %3953 = vsyncpa %s3952, 1

</llo_original>
